<compile_context>
chip_gen: v7x
topology: tpu7x:2x2x1
jax: 0.10.0
libtpu: 0.0.40
codegen_flags: <defaults>
</compile_context>

<pallas_src>
import jax
import jax.numpy as jnp
from jax.experimental import pallas as pl
from jax.experimental.pallas import tpu as pltpu


# ------------------------------ Pallas kernel -------------------------------


def _fpn_kernel(
    c5n_ref, c5p_ref, c4p_ref, c3p_ref,
    w51_ref, w41_ref, w31_ref,
    w52_ref, w42_ref, w32_ref, w6_ref, w7_ref,
    b_ref,
    p3_ref, p4_ref, p5_ref, p6_ref, p7_ref,
):
    """Whole FPN forward for one batch element.

    c5n: (L5, C5) natural order.            c5p: (4, L5//4, C5) 4-phase view.
    c4p: (2, L5, C4) 2-phase view of C4.    c3p: (4, L5, C3) 4-phase view of C3.
    Outputs are phase-major: p3 (4, L5, F), p4 (2, L5, F), p5 (L5, F),
    p6 (2, L5//4, F), p7 (L5//4, F).
    """
    f32 = jnp.float32
    bf16 = jnp.bfloat16

    def mm(x, w):
        # MXU GEMM: bf16 inputs, f32 accumulation.
        return jnp.dot(x.astype(bf16), w, preferred_element_type=f32)

    def shift_down(x):
        # y[0] = 0, y[i] = x[i-1]   (the conv left zero-pad).
        y = pltpu.roll(x, shift=1, axis=0)
        row = jax.lax.broadcasted_iota(jnp.int32, x.shape, 0)
        return jnp.where(row == 0, 0.0, y)

    def shift_up(x):
        # y[n-1] = 0, y[i] = x[i+1] (the conv right zero-pad).
        n = x.shape[0]
        y = pltpu.roll(x, shift=n - 1, axis=0)
        row = jax.lax.broadcasted_iota(jnp.int32, x.shape, 0)
        return jnp.where(row == n - 1, 0.0, y)

    biases = b_ref[...].astype(f32)
    b51, b52, b41, b42, b31, b32, b6, b7 = [biases[k:k + 1, :] for k in range(8)]

    # ---- P5: lateral 1x1 + 3-tap "same" conv (natural row order, L5 rows) ----
    p5_lat = mm(c5n_ref[...], w51_ref[...]) + b51
    p5_ref[...] = (mm(shift_down(p5_lat), w52_ref[0])
                   + mm(p5_lat, w52_ref[1])
                   + mm(shift_up(p5_lat), w52_ref[2]) + b52).astype(p5_ref.dtype)

    # ---- P6 / P7 first: ends c5/p6 live ranges before the P4/P3 chain ----
    # stride-2 conv, pad=1: out[j] = w0*x[2j-1] + w1*x[2j] + w2*x[2j+1].
    # With c5 split into 4 phases (c5p[t][m] = c5[4m+t]) both P6 output phases
    # are plain GEMMs on phase slices; the only shift is the left-pad tap.
    c5p0, c5p1, c5p2, c5p3 = [c5p_ref[t] for t in range(4)]
    p6_0 = (mm(shift_down(c5p3), w6_ref[0]) + mm(c5p0, w6_ref[1])
            + mm(c5p1, w6_ref[2]) + b6)                       # p6[2m]
    p6_1 = (mm(c5p1, w6_ref[0]) + mm(c5p2, w6_ref[1])
            + mm(c5p3, w6_ref[2]) + b6)                       # p6[2m+1]
    p6_ref[0] = p6_0.astype(p6_ref.dtype)
    p6_ref[1] = p6_1.astype(p6_ref.dtype)

    r0 = jnp.maximum(p6_0, 0.0)                               # fused P7_1 ReLU
    r1 = jnp.maximum(p6_1, 0.0)
    p7_ref[...] = (mm(shift_down(r1), w7_ref[0]) + mm(r0, w7_ref[1])
                   + mm(r1, w7_ref[2]) + b7).astype(p7_ref.dtype)

    # ---- P4: lateral 1x1 + fused nearest-2x upsample-add (polyphase-2) ----
    # p4_lat[2j+s] = conv1x1(c4)[2j+s] + p5_lat[j]  -> both phases add p5_lat.
    p4lat0 = mm(c4p_ref[0], w41_ref[...]) + b41 + p5_lat
    p4lat1 = mm(c4p_ref[1], w41_ref[...]) + b41 + p5_lat
    # 3-tap "same" conv on the interleaved signal, written per phase:
    p4_ref[0] = (mm(shift_down(p4lat1), w42_ref[0]) + mm(p4lat0, w42_ref[1])
                 + mm(p4lat1, w42_ref[2]) + b42).astype(p4_ref.dtype)
    p4_ref[1] = (mm(p4lat0, w42_ref[0]) + mm(p4lat1, w42_ref[1])
                 + mm(shift_up(p4lat0), w42_ref[2]) + b42).astype(p4_ref.dtype)

    # ---- P3: lateral 1x1 + fused nearest-2x upsample-add (polyphase-4) ----
    # p3_lat[4j+t] = conv1x1(c3)[4j+t] + p4_lat[2j + t//2].
    p3lat0 = mm(c3p_ref[0], w31_ref[...]) + b31 + p4lat0
    p3lat1 = mm(c3p_ref[1], w31_ref[...]) + b31 + p4lat0
    p3lat2 = mm(c3p_ref[2], w31_ref[...]) + b31 + p4lat1
    p3lat3 = mm(c3p_ref[3], w31_ref[...]) + b31 + p4lat1
    p3_ref[0] = (mm(shift_down(p3lat3), w32_ref[0]) + mm(p3lat0, w32_ref[1])
                 + mm(p3lat1, w32_ref[2]) + b32).astype(p3_ref.dtype)
    p3_ref[1] = (mm(p3lat0, w32_ref[0]) + mm(p3lat1, w32_ref[1])
                 + mm(p3lat2, w32_ref[2]) + b32).astype(p3_ref.dtype)
    p3_ref[2] = (mm(p3lat1, w32_ref[0]) + mm(p3lat2, w32_ref[1])
                 + mm(p3lat3, w32_ref[2]) + b32).astype(p3_ref.dtype)
    p3_ref[3] = (mm(p3lat2, w32_ref[0]) + mm(p3lat3, w32_ref[1])
                 + mm(shift_up(p3lat0), w32_ref[2]) + b32).astype(p3_ref.dtype)


# --------------------------------- wrapper -----------------------------------


def pyramid_features(params, C3, C4, C5):
    """C3/C4/C5 are NCL (like PyTorch Conv1d inputs); outputs are NCL."""
    B, C3c, L3 = C3.shape
    _, C4c, L4 = C4.shape
    _, C5c, L5 = C5.shape
    assert L4 == 2 * L5 and L3 == 2 * L4, "FPN needs lengths to double C5->C4->C3"
    assert L5 % 4 == 0, "polyphase kernel requires L5 % 4 == 0"
    N = L5                      # coarse (P5) length
    M = L5 // 4                 # P7 length; P6 length is 2*M
    F = params["P5_1_w"].shape[1]
    dt = C5.dtype
    bf16 = jnp.bfloat16

    # Phase-major views: one XLA transpose per input (same cost class as the
    # plain NCL->NLC transpose); the reshape halves are free views.
    c5n = jnp.transpose(C5, (0, 2, 1))                                   # (B, N, C5)
    c5p = jnp.transpose(C5.reshape(B, C5c, M, 4), (0, 3, 2, 1))          # (B, 4, M, C5)
    c4p = jnp.transpose(C4.reshape(B, C4c, N, 2), (0, 3, 2, 1))          # (B, 2, N, C4)
    c3p = jnp.transpose(C3.reshape(B, C3c, N, 4), (0, 3, 2, 1))          # (B, 4, N, C3)

    # Weights: cast once to bf16 (MXU inputs).  Biases stay f32, merged to (8, F).
    wcast = lambda k: params[k].astype(bf16)
    w51, w41, w31 = wcast("P5_1_w"), wcast("P4_1_w"), wcast("P3_1_w")
    w52, w42, w32 = wcast("P5_2_w"), wcast("P4_2_w"), wcast("P3_2_w")
    w6, w7 = wcast("P6_w"), wcast("P7_2_w")
    b_all = jnp.concatenate(
        [params[k] for k in ("P5_1_b", "P5_2_b", "P4_1_b", "P4_2_b",
                             "P3_1_b", "P3_2_b", "P6_b", "P7_2_b")],
        axis=0).astype(jnp.float32)                                      # (8, F)

    def dspec(shape):
        zeros = (0,) * len(shape)

        def imap(b):
            return (b,) + zeros

        return pl.BlockSpec((None,) + tuple(shape), imap)

    def wspec(shape):
        zeros = (0,) * len(shape)

        def imap(b):
            return zeros

        return pl.BlockSpec(tuple(shape), imap)

    in_specs = [
        dspec((N, C5c)), dspec((4, M, C5c)), dspec((2, N, C4c)), dspec((4, N, C3c)),
        wspec(w51.shape), wspec(w41.shape), wspec(w31.shape),
        wspec(w52.shape), wspec(w42.shape), wspec(w32.shape),
        wspec(w6.shape), wspec(w7.shape), wspec(b_all.shape),
    ]
    out_specs = [
        dspec((4, N, F)), dspec((2, N, F)), dspec((N, F)),
        dspec((2, M, F)), dspec((M, F)),
    ]
    out_shape = [
        jax.ShapeDtypeStruct((B, 4, N, F), dt),   # P3 phases
        jax.ShapeDtypeStruct((B, 2, N, F), dt),   # P4 phases
        jax.ShapeDtypeStruct((B, N, F), dt),      # P5
        jax.ShapeDtypeStruct((B, 2, M, F), dt),   # P6 phases
        jax.ShapeDtypeStruct((B, M, F), dt),      # P7
    ]

    p3p, p4p, p5n, p6p, p7n = pl.pallas_call(
        _fpn_kernel,
        grid=(B,),
        in_specs=in_specs,
        out_specs=out_specs,
        out_shape=out_shape,
        compiler_params=pltpu.CompilerParams(
            dimension_semantics=("parallel",),     # v7x: one batch element per TC
            vmem_limit_bytes=48 * 1024 * 1024,     # within v7x's 64 MiB physical
        ),
    )(c5n, c5p, c4p, c3p, w51, w41, w31, w52, w42, w32, w6, w7, b_all)

    # Phase-major -> NCL (reshape halves are free; one transpose per output).
    P3 = jnp.transpose(p3p, (0, 3, 2, 1)).reshape(B, F, L3)
    P4 = jnp.transpose(p4p, (0, 3, 2, 1)).reshape(B, F, L4)
    P5 = jnp.transpose(p5n, (0, 2, 1))
    P6 = jnp.transpose(p6p, (0, 3, 2, 1)).reshape(B, F, 2 * M)
    P7 = jnp.transpose(p7n, (0, 2, 1))
    return [P3, P4, P5, P6, P7]


# ------------------------------ params & reference ---------------------------


def init_pyramid_params(key, C3_size, C4_size, C5_size, feature_size=256):
    def w1(k, cin):
        return jax.random.normal(k, (cin, feature_size), jnp.float32) * 0.05

    def w3(k, cin):
        # tap 0 multiplies x[l-1], tap 1 -> x[l], tap 2 -> x[l+1] (PyTorch order).
        return jax.random.normal(k, (3, cin, feature_size), jnp.float32) * 0.05

    def bias(k):
        return jax.random.normal(k, (1, feature_size), jnp.float32) * 0.01

    ks = jax.random.split(key, 16)
    return {
        "P5_1_w": w1(ks[0], C5_size), "P5_1_b": bias(ks[1]),
        "P5_2_w": w3(ks[2], feature_size), "P5_2_b": bias(ks[3]),
        "P4_1_w": w1(ks[4], C4_size), "P4_1_b": bias(ks[5]),
        "P4_2_w": w3(ks[6], feature_size), "P4_2_b": bias(ks[7]),
        "P3_1_w": w1(ks[8], C3_size), "P3_1_b": bias(ks[9]),
        "P3_2_w": w3(ks[10], feature_size), "P3_2_b": bias(ks[11]),
        "P6_w": w3(ks[12], C5_size), "P6_b": bias(ks[13]),
        "P7_2_w": w3(ks[14], feature_size), "P7_2_b": bias(ks[15]),
    }


def _ref_forward(params, C3, C4, C5):
    """Pure-JAX reference (same math as the PyTorch module), f32 HIGHEST precision."""
    hi = jax.lax.Precision.HIGHEST
    to_nlc = lambda t: jnp.transpose(t, (0, 2, 1))
    to_ncl = lambda t: jnp.transpose(t, (0, 2, 1))

    def conv1x1(x, w, b):
        return jnp.einsum("blc,cf->blf", x, w, precision=hi) + b

    def conv3(x, w3, b, stride=1):
        L = x.shape[1]
        xp = jnp.pad(x, ((0, 0), (1, 1), (0, 0)))
        y = b + sum(
            jnp.einsum("blc,cf->blf", xp[:, k:k + L, :], w3[k], precision=hi)
            for k in range(3))
        return y[:, ::stride, :] if stride > 1 else y

    c3, c4, c5 = to_nlc(C3), to_nlc(C4), to_nlc(C5)
    p5 = conv1x1(c5, params["P5_1_w"], params["P5_1_b"])
    p5_up = jnp.repeat(p5, 2, axis=1)
    p5_out = conv3(p5, params["P5_2_w"], params["P5_2_b"])
    p4 = conv1x1(c4, params["P4_1_w"], params["P4_1_b"]) + p5_up
    p4_up = jnp.repeat(p4, 2, axis=1)
    p4_out = conv3(p4, params["P4_2_w"], params["P4_2_b"])
    p3 = conv1x1(c3, params["P3_1_w"], params["P3_1_b"]) + p4_up
    p3_out = conv3(p3, params["P3_2_w"], params["P3_2_b"])
    p6_out = conv3(c5, params["P6_w"], params["P6_b"], stride=2)
    p7_out = conv3(jax.nn.relu(p6_out), params["P7_2_w"], params["P7_2_b"], stride=2)
    return [to_ncl(p3_out), to_ncl(p4_out), to_ncl(p5_out),
            to_ncl(p6_out), to_ncl(p7_out)]


# ----------------------------------- main ------------------------------------


if __name__ == "__main__":
    B = 2
    C3_size, C4_size, C5_size = 32, 64, 128
    feature_size = 128
    L5, L4, L3 = 8, 16, 32

    key = jax.random.PRNGKey(0)
    k_in, k_par = jax.random.split(key)
    k3, k4, k5 = jax.random.split(k_in, 3)
    C3 = jax.random.normal(k3, (B, C3_size, L3), jnp.float32)
    C4 = jax.random.normal(k4, (B, C4_size, L4), jnp.float32)
    C5 = jax.random.normal(k5, (B, C5_size, L5), jnp.float32)

    params = init_pyramid_params(k_par, C3_size, C4_size, C5_size, feature_size)

    outs = jax.jit(pyramid_features)(params, C3, C4, C5)
    outs = [jax.block_until_ready(o) for o in outs]

    expected = [(B, feature_size, L3), (B, feature_size, L4),
                (B, feature_size, L5), (B, feature_size, L5 // 2),
                (B, feature_size, L5 // 4)]
    assert [tuple(o.shape) for o in outs] == expected, \
        [tuple(o.shape) for o in outs]
    assert all(o.dtype == jnp.float32 for o in outs)

    refs = _ref_forward(params, C3, C4, C5)
    # Tolerance accounts for bf16 MXU inputs (f32 accumulation) vs. the f32
    # HIGHEST-precision reference; observed error is well below this bound.
    for name, o, r in zip(["P3", "P4", "P5", "P6", "P7"], outs, refs):
        err = float(jnp.max(jnp.abs(o - r)))
        assert err < 2e-2, (name, err)

    print("KERNEL_OK")
</pallas_src>

<mosaic_0001>
module attributes {stable_mosaic.version = 11 : i64} {
  func.func @_fpn_kernel(%arg0: i32, %arg1: memref<1x8x128xf32, #tpu.memory_space<vmem>>, %arg2: memref<1x4x2x128xf32, #tpu.memory_space<vmem>>, %arg3: memref<1x2x8x64xf32, #tpu.memory_space<vmem>>, %arg4: memref<1x4x8x32xf32, #tpu.memory_space<vmem>>, %arg5: memref<128x128xbf16, #tpu.memory_space<vmem>>, %arg6: memref<64x128xbf16, #tpu.memory_space<vmem>>, %arg7: memref<32x128xbf16, #tpu.memory_space<vmem>>, %arg8: memref<3x128x128xbf16, #tpu.memory_space<vmem>>, %arg9: memref<3x128x128xbf16, #tpu.memory_space<vmem>>, %arg10: memref<3x128x128xbf16, #tpu.memory_space<vmem>>, %arg11: memref<3x128x128xbf16, #tpu.memory_space<vmem>>, %arg12: memref<3x128x128xbf16, #tpu.memory_space<vmem>>, %arg13: memref<8x128xf32, #tpu.memory_space<vmem>>, %arg14: memref<1x4x8x128xf32, #tpu.memory_space<vmem>>, %arg15: memref<1x2x8x128xf32, #tpu.memory_space<vmem>>, %arg16: memref<1x8x128xf32, #tpu.memory_space<vmem>>, %arg17: memref<1x2x2x128xf32, #tpu.memory_space<vmem>>, %arg18: memref<1x2x128xf32, #tpu.memory_space<vmem>>) attributes {dimension_semantics = [#tpu.dimension_semantics<parallel>], iteration_bounds = array<i64: 2>, scalar_prefetch = 0 : i64, scratch_operands = 0 : i64, tpu.core_type = #tpu.core_type<tc>, window_params = [{transform_indices = @transform_0, window_bounds = array<i64: 1, 8, 128>}, {transform_indices = @transform_1, window_bounds = array<i64: 1, 4, 2, 128>}, {transform_indices = @transform_2, window_bounds = array<i64: 1, 2, 8, 64>}, {transform_indices = @transform_3, window_bounds = array<i64: 1, 4, 8, 32>}, {pipeline_mode = #tpu.pipeline_mode<synchronous>, transform_indices = @transform_4, window_bounds = array<i64: 128, 128>}, {pipeline_mode = #tpu.pipeline_mode<synchronous>, transform_indices = @transform_5, window_bounds = array<i64: 64, 128>}, {pipeline_mode = #tpu.pipeline_mode<synchronous>, transform_indices = @transform_6, window_bounds = array<i64: 32, 128>}, {pipeline_mode = #tpu.pipeline_mode<synchronous>, transform_indices = @transform_7, window_bounds = array<i64: 3, 128, 128>}, {pipeline_mode = #tpu.pipeline_mode<synchronous>, transform_indices = @transform_8, window_bounds = array<i64: 3, 128, 128>}, {pipeline_mode = #tpu.pipeline_mode<synchronous>, transform_indices = @transform_9, window_bounds = array<i64: 3, 128, 128>}, {pipeline_mode = #tpu.pipeline_mode<synchronous>, transform_indices = @transform_10, window_bounds = array<i64: 3, 128, 128>}, {pipeline_mode = #tpu.pipeline_mode<synchronous>, transform_indices = @transform_11, window_bounds = array<i64: 3, 128, 128>}, {pipeline_mode = #tpu.pipeline_mode<synchronous>, transform_indices = @transform_12, window_bounds = array<i64: 8, 128>}, {transform_indices = @transform_13, window_bounds = array<i64: 1, 4, 8, 128>}, {transform_indices = @transform_14, window_bounds = array<i64: 1, 2, 8, 128>}, {transform_indices = @transform_15, window_bounds = array<i64: 1, 8, 128>}, {transform_indices = @transform_16, window_bounds = array<i64: 1, 2, 2, 128>}, {transform_indices = @transform_17, window_bounds = array<i64: 1, 2, 128>}]} {
    %c0 = arith.constant 0 : index
    %c0_0 = arith.constant 0 : index
    %0 = vector.load %arg13[%c0, %c0_0] : memref<8x128xf32, #tpu.memory_space<vmem>>, vector<8x128xf32>
    %1 = vector.extract_strided_slice %0 {offsets = [0, 0], sizes = [1, 128], strides = [1, 1]} : vector<8x128xf32> to vector<1x128xf32>
    %2 = vector.extract_strided_slice %0 {offsets = [1, 0], sizes = [1, 128], strides = [1, 1]} : vector<8x128xf32> to vector<1x128xf32>
    %3 = vector.extract_strided_slice %0 {offsets = [2, 0], sizes = [1, 128], strides = [1, 1]} : vector<8x128xf32> to vector<1x128xf32>
    %4 = vector.extract_strided_slice %0 {offsets = [3, 0], sizes = [1, 128], strides = [1, 1]} : vector<8x128xf32> to vector<1x128xf32>
    %5 = vector.extract_strided_slice %0 {offsets = [4, 0], sizes = [1, 128], strides = [1, 1]} : vector<8x128xf32> to vector<1x128xf32>
    %6 = vector.extract_strided_slice %0 {offsets = [5, 0], sizes = [1, 128], strides = [1, 1]} : vector<8x128xf32> to vector<1x128xf32>
    %7 = vector.extract_strided_slice %0 {offsets = [6, 0], sizes = [1, 128], strides = [1, 1]} : vector<8x128xf32> to vector<1x128xf32>
    %8 = vector.extract_strided_slice %0 {offsets = [7, 0], sizes = [1, 128], strides = [1, 1]} : vector<8x128xf32> to vector<1x128xf32>
    %c0_1 = arith.constant 0 : index
    %c0_2 = arith.constant 0 : index
    %c0_3 = arith.constant 0 : index
    %9 = vector.load %arg1[%c0_1, %c0_2, %c0_3] : memref<1x8x128xf32, #tpu.memory_space<vmem>>, vector<1x8x128xf32>
    %10 = vector.shape_cast %9 : vector<1x8x128xf32> to vector<8x128xf32>
    %c0_4 = arith.constant 0 : index
    %c0_5 = arith.constant 0 : index
    %11 = vector.load %arg5[%c0_4, %c0_5] : memref<128x128xbf16, #tpu.memory_space<vmem>>, vector<128x128xbf16>
    %12 = arith.truncf %10 : vector<8x128xf32> to vector<8x128xbf16>
    %cst = arith.constant dense<0.000000e+00> : vector<8x128xf32>
    %13 = tpu.matmul %12, %11, %cst {dimension_numbers = #tpu.dot_dimension_numbers<[1], [0], [0], [1], [0, 0, 1, 1], [], []>} : vector<8x128xbf16>, vector<128x128xbf16>, vector<8x128xf32> -> vector<8x128xf32>
    %14 = vector.broadcast %1 : vector<1x128xf32> to vector<8x128xf32>
    %15 = arith.addf %13, %14 : vector<8x128xf32>
    %c1_i32 = arith.constant 1 : i32
    %16 = tpu.dynamic_rotate %15 by %c1_i32 dim 0 : vector<8x128xf32>, i32 -> vector<8x128xf32>
    %17 = tpu.iota {dimensions = array<i32: 0>} : vector<8x128xi32>
    %c0_i32 = arith.constant 0 : i32
    %18 = vector.broadcast %c0_i32 : i32 to vector<8x128xi32>
    %19 = arith.cmpi eq, %17, %18 : vector<8x128xi32>
    %cst_6 = arith.constant 0.000000e+00 : f32
    %20 = vector.broadcast %cst_6 : f32 to vector<8x128xf32>
    %21 = arith.select %19, %20, %16 : vector<8x128xi1>, vector<8x128xf32>
    %c0_7 = arith.constant 0 : index
    %c0_8 = arith.constant 0 : index
    %c0_9 = arith.constant 0 : index
    %22 = vector.load %arg8[%c0_7, %c0_8, %c0_9] : memref<3x128x128xbf16, #tpu.memory_space<vmem>>, vector<1x128x128xbf16>
    %23 = vector.shape_cast %22 : vector<1x128x128xbf16> to vector<128x128xbf16>
    %24 = arith.truncf %21 : vector<8x128xf32> to vector<8x128xbf16>
    %cst_10 = arith.constant dense<0.000000e+00> : vector<8x128xf32>
    %25 = tpu.matmul %24, %23, %cst_10 {dimension_numbers = #tpu.dot_dimension_numbers<[1], [0], [0], [1], [0, 0, 1, 1], [], []>} : vector<8x128xbf16>, vector<128x128xbf16>, vector<8x128xf32> -> vector<8x128xf32>
    %c1 = arith.constant 1 : index
    %c0_11 = arith.constant 0 : index
    %c0_12 = arith.constant 0 : index
    %26 = vector.load %arg8[%c1, %c0_11, %c0_12] : memref<3x128x128xbf16, #tpu.memory_space<vmem>>, vector<1x128x128xbf16>
    %27 = vector.shape_cast %26 : vector<1x128x128xbf16> to vector<128x128xbf16>
    %28 = arith.truncf %15 : vector<8x128xf32> to vector<8x128xbf16>
    %cst_13 = arith.constant dense<0.000000e+00> : vector<8x128xf32>
    %29 = tpu.matmul %28, %27, %cst_13 {dimension_numbers = #tpu.dot_dimension_numbers<[1], [0], [0], [1], [0, 0, 1, 1], [], []>} : vector<8x128xbf16>, vector<128x128xbf16>, vector<8x128xf32> -> vector<8x128xf32>
    %30 = arith.addf %25, %29 : vector<8x128xf32>
    %c7_i32 = arith.constant 7 : i32
    %31 = tpu.dynamic_rotate %15 by %c7_i32 dim 0 : vector<8x128xf32>, i32 -> vector<8x128xf32>
    %32 = tpu.iota {dimensions = array<i32: 0>} : vector<8x128xi32>
    %c7_i32_14 = arith.constant 7 : i32
    %33 = vector.broadcast %c7_i32_14 : i32 to vector<8x128xi32>
    %34 = arith.cmpi eq, %32, %33 : vector<8x128xi32>
    %cst_15 = arith.constant 0.000000e+00 : f32
    %35 = vector.broadcast %cst_15 : f32 to vector<8x128xf32>
    %36 = arith.select %34, %35, %31 : vector<8x128xi1>, vector<8x128xf32>
    %c2 = arith.constant 2 : index
    %c0_16 = arith.constant 0 : index
    %c0_17 = arith.constant 0 : index
    %37 = vector.load %arg8[%c2, %c0_16, %c0_17] : memref<3x128x128xbf16, #tpu.memory_space<vmem>>, vector<1x128x128xbf16>
    %38 = vector.shape_cast %37 : vector<1x128x128xbf16> to vector<128x128xbf16>
    %39 = arith.truncf %36 : vector<8x128xf32> to vector<8x128xbf16>
    %cst_18 = arith.constant dense<0.000000e+00> : vector<8x128xf32>
    %40 = tpu.matmul %39, %38, %cst_18 {dimension_numbers = #tpu.dot_dimension_numbers<[1], [0], [0], [1], [0, 0, 1, 1], [], []>} : vector<8x128xbf16>, vector<128x128xbf16>, vector<8x128xf32> -> vector<8x128xf32>
    %41 = arith.addf %30, %40 : vector<8x128xf32>
    %42 = vector.broadcast %2 : vector<1x128xf32> to vector<8x128xf32>
    %43 = arith.addf %41, %42 : vector<8x128xf32>
    %c0_19 = arith.constant 0 : index
    %c0_20 = arith.constant 0 : index
    %c0_21 = arith.constant 0 : index
    %44 = vector.load %arg16[%c0_19, %c0_20, %c0_21] : memref<1x8x128xf32, #tpu.memory_space<vmem>>, vector<1x8x128xf32>
    %45 = vector.shape_cast %44 : vector<1x8x128xf32> to vector<8x128xf32>
    %46 = vector.shape_cast %43 : vector<8x128xf32> to vector<1x8x128xf32>
    tpu.vector_store %arg16[%c0_19, %c0_20, %c0_21], %46 {strides = array<i32>} : memref<1x8x128xf32, #tpu.memory_space<vmem>>, vector<1x8x128xf32>,
    %c0_22 = arith.constant 0 : index
    %c0_23 = arith.constant 0 : index
    %c0_24 = arith.constant 0 : index
    %c0_25 = arith.constant 0 : index
    %47 = vector.load %arg2[%c0_22, %c0_23, %c0_24, %c0_25] : memref<1x4x2x128xf32, #tpu.memory_space<vmem>>, vector<1x1x2x128xf32>
    %48 = vector.shape_cast %47 : vector<1x1x2x128xf32> to vector<2x128xf32>
    %c0_26 = arith.constant 0 : index
    %c1_27 = arith.constant 1 : index
    %c0_28 = arith.constant 0 : index
    %c0_29 = arith.constant 0 : index
    %49 = vector.load %arg2[%c0_26, %c1_27, %c0_28, %c0_29] : memref<1x4x2x128xf32, #tpu.memory_space<vmem>>, vector<1x1x2x128xf32>
    %50 = vector.shape_cast %49 : vector<1x1x2x128xf32> to vector<2x128xf32>
    %c0_30 = arith.constant 0 : index
    %c2_31 = arith.constant 2 : index
    %c0_32 = arith.constant 0 : index
    %c0_33 = arith.constant 0 : index
    %51 = vector.load %arg2[%c0_30, %c2_31, %c0_32, %c0_33] : memref<1x4x2x128xf32, #tpu.memory_space<vmem>>, vector<1x1x2x128xf32>
    %52 = vector.shape_cast %51 : vector<1x1x2x128xf32> to vector<2x128xf32>
    %c0_34 = arith.constant 0 : index
    %c3 = arith.constant 3 : index
    %c0_35 = arith.constant 0 : index
    %c0_36 = arith.constant 0 : index
    %53 = vector.load %arg2[%c0_34, %c3, %c0_35, %c0_36] : memref<1x4x2x128xf32, #tpu.memory_space<vmem>>, vector<1x1x2x128xf32>
    %54 = vector.shape_cast %53 : vector<1x1x2x128xf32> to vector<2x128xf32>
    %c1_i32_37 = arith.constant 1 : i32
    %55 = tpu.dynamic_rotate %54 by %c1_i32_37 dim 0 : vector<2x128xf32>, i32 -> vector<2x128xf32>
    %56 = tpu.iota {dimensions = array<i32: 0>} : vector<2x128xi32>
    %c0_i32_38 = arith.constant 0 : i32
    %57 = vector.broadcast %c0_i32_38 : i32 to vector<2x128xi32>
    %58 = arith.cmpi eq, %56, %57 : vector<2x128xi32>
    %cst_39 = arith.constant 0.000000e+00 : f32
    %59 = vector.broadcast %cst_39 : f32 to vector<2x128xf32>
    %60 = arith.select %58, %59, %55 : vector<2x128xi1>, vector<2x128xf32>
    %c0_40 = arith.constant 0 : index
    %c0_41 = arith.constant 0 : index
    %c0_42 = arith.constant 0 : index
    %61 = vector.load %arg11[%c0_40, %c0_41, %c0_42] : memref<3x128x128xbf16, #tpu.memory_space<vmem>>, vector<1x128x128xbf16>
    %62 = vector.shape_cast %61 : vector<1x128x128xbf16> to vector<128x128xbf16>
    %63 = arith.truncf %60 : vector<2x128xf32> to vector<2x128xbf16>
    %cst_43 = arith.constant dense<0.000000e+00> : vector<2x128xf32>
    %64 = tpu.matmul %63, %62, %cst_43 {dimension_numbers = #tpu.dot_dimension_numbers<[1], [0], [0], [1], [0, 0, 1, 1], [], []>} : vector<2x128xbf16>, vector<128x128xbf16>, vector<2x128xf32> -> vector<2x128xf32>
    %c1_44 = arith.constant 1 : index
    %c0_45 = arith.constant 0 : index
    %c0_46 = arith.constant 0 : index
    %65 = vector.load %arg11[%c1_44, %c0_45, %c0_46] : memref<3x128x128xbf16, #tpu.memory_space<vmem>>, vector<1x128x128xbf16>
    %66 = vector.shape_cast %65 : vector<1x128x128xbf16> to vector<128x128xbf16>
    %67 = arith.truncf %48 : vector<2x128xf32> to vector<2x128xbf16>
    %cst_47 = arith.constant dense<0.000000e+00> : vector<2x128xf32>
    %68 = tpu.matmul %67, %66, %cst_47 {dimension_numbers = #tpu.dot_dimension_numbers<[1], [0], [0], [1], [0, 0, 1, 1], [], []>} : vector<2x128xbf16>, vector<128x128xbf16>, vector<2x128xf32> -> vector<2x128xf32>
    %69 = arith.addf %64, %68 : vector<2x128xf32>
    %c2_48 = arith.constant 2 : index
    %c0_49 = arith.constant 0 : index
    %c0_50 = arith.constant 0 : index
    %70 = vector.load %arg11[%c2_48, %c0_49, %c0_50] : memref<3x128x128xbf16, #tpu.memory_space<vmem>>, vector<1x128x128xbf16>
    %71 = vector.shape_cast %70 : vector<1x128x128xbf16> to vector<128x128xbf16>
    %72 = arith.truncf %50 : vector<2x128xf32> to vector<2x128xbf16>
    %cst_51 = arith.constant dense<0.000000e+00> : vector<2x128xf32>
    %73 = tpu.matmul %72, %71, %cst_51 {dimension_numbers = #tpu.dot_dimension_numbers<[1], [0], [0], [1], [0, 0, 1, 1], [], []>} : vector<2x128xbf16>, vector<128x128xbf16>, vector<2x128xf32> -> vector<2x128xf32>
    %74 = arith.addf %69, %73 : vector<2x128xf32>
    %75 = vector.broadcast %7 : vector<1x128xf32> to vector<2x128xf32>
    %76 = arith.addf %74, %75 : vector<2x128xf32>
    %c0_52 = arith.constant 0 : index
    %c0_53 = arith.constant 0 : index
    %c0_54 = arith.constant 0 : index
    %77 = vector.load %arg11[%c0_52, %c0_53, %c0_54] : memref<3x128x128xbf16, #tpu.memory_space<vmem>>, vector<1x128x128xbf16>
    %78 = vector.shape_cast %77 : vector<1x128x128xbf16> to vector<128x128xbf16>
    %79 = arith.truncf %50 : vector<2x128xf32> to vector<2x128xbf16>
    %cst_55 = arith.constant dense<0.000000e+00> : vector<2x128xf32>
    %80 = tpu.matmul %79, %78, %cst_55 {dimension_numbers = #tpu.dot_dimension_numbers<[1], [0], [0], [1], [0, 0, 1, 1], [], []>} : vector<2x128xbf16>, vector<128x128xbf16>, vector<2x128xf32> -> vector<2x128xf32>
    %c1_56 = arith.constant 1 : index
    %c0_57 = arith.constant 0 : index
    %c0_58 = arith.constant 0 : index
    %81 = vector.load %arg11[%c1_56, %c0_57, %c0_58] : memref<3x128x128xbf16, #tpu.memory_space<vmem>>, vector<1x128x128xbf16>
    %82 = vector.shape_cast %81 : vector<1x128x128xbf16> to vector<128x128xbf16>
    %83 = arith.truncf %52 : vector<2x128xf32> to vector<2x128xbf16>
    %cst_59 = arith.constant dense<0.000000e+00> : vector<2x128xf32>
    %84 = tpu.matmul %83, %82, %cst_59 {dimension_numbers = #tpu.dot_dimension_numbers<[1], [0], [0], [1], [0, 0, 1, 1], [], []>} : vector<2x128xbf16>, vector<128x128xbf16>, vector<2x128xf32> -> vector<2x128xf32>
    %85 = arith.addf %80, %84 : vector<2x128xf32>
    %c2_60 = arith.constant 2 : index
    %c0_61 = arith.constant 0 : index
    %c0_62 = arith.constant 0 : index
    %86 = vector.load %arg11[%c2_60, %c0_61, %c0_62] : memref<3x128x128xbf16, #tpu.memory_space<vmem>>, vector<1x128x128xbf16>
    %87 = vector.shape_cast %86 : vector<1x128x128xbf16> to vector<128x128xbf16>
    %88 = arith.truncf %54 : vector<2x128xf32> to vector<2x128xbf16>
    %cst_63 = arith.constant dense<0.000000e+00> : vector<2x128xf32>
    %89 = tpu.matmul %88, %87, %cst_63 {dimension_numbers = #tpu.dot_dimension_numbers<[1], [0], [0], [1], [0, 0, 1, 1], [], []>} : vector<2x128xbf16>, vector<128x128xbf16>, vector<2x128xf32> -> vector<2x128xf32>
    %90 = arith.addf %85, %89 : vector<2x128xf32>
    %91 = vector.broadcast %7 : vector<1x128xf32> to vector<2x128xf32>
    %92 = arith.addf %90, %91 : vector<2x128xf32>
    %c0_64 = arith.constant 0 : index
    %c0_65 = arith.constant 0 : index
    %c0_66 = arith.constant 0 : index
    %c0_67 = arith.constant 0 : index
    %93 = vector.load %arg17[%c0_64, %c0_65, %c0_66, %c0_67] : memref<1x2x2x128xf32, #tpu.memory_space<vmem>>, vector<1x1x2x128xf32>
    %94 = vector.shape_cast %93 : vector<1x1x2x128xf32> to vector<2x128xf32>
    %95 = vector.shape_cast %76 : vector<2x128xf32> to vector<1x1x2x128xf32>
    tpu.vector_store %arg17[%c0_64, %c0_65, %c0_66, %c0_67], %95 {strides = array<i32>} : memref<1x2x2x128xf32, #tpu.memory_space<vmem>>, vector<1x1x2x128xf32>,
    %c0_68 = arith.constant 0 : index
    %c1_69 = arith.constant 1 : index
    %c0_70 = arith.constant 0 : index
    %c0_71 = arith.constant 0 : index
    %96 = vector.load %arg17[%c0_68, %c1_69, %c0_70, %c0_71] : memref<1x2x2x128xf32, #tpu.memory_space<vmem>>, vector<1x1x2x128xf32>
    %97 = vector.shape_cast %96 : vector<1x1x2x128xf32> to vector<2x128xf32>
    %98 = vector.shape_cast %92 : vector<2x128xf32> to vector<1x1x2x128xf32>
    tpu.vector_store %arg17[%c0_68, %c1_69, %c0_70, %c0_71], %98 {strides = array<i32>} : memref<1x2x2x128xf32, #tpu.memory_space<vmem>>, vector<1x1x2x128xf32>,
    %cst_72 = arith.constant 0.000000e+00 : f32
    %99 = vector.broadcast %cst_72 : f32 to vector<2x128xf32>
    %100 = arith.maximumf %76, %99 : vector<2x128xf32>
    %cst_73 = arith.constant 0.000000e+00 : f32
    %101 = vector.broadcast %cst_73 : f32 to vector<2x128xf32>
    %102 = arith.maximumf %92, %101 : vector<2x128xf32>
    %c1_i32_74 = arith.constant 1 : i32
    %103 = tpu.dynamic_rotate %102 by %c1_i32_74 dim 0 : vector<2x128xf32>, i32 -> vector<2x128xf32>
    %104 = tpu.iota {dimensions = array<i32: 0>} : vector<2x128xi32>
    %c0_i32_75 = arith.constant 0 : i32
    %105 = vector.broadcast %c0_i32_75 : i32 to vector<2x128xi32>
    %106 = arith.cmpi eq, %104, %105 : vector<2x128xi32>
    %cst_76 = arith.constant 0.000000e+00 : f32
    %107 = vector.broadcast %cst_76 : f32 to vector<2x128xf32>
    %108 = arith.select %106, %107, %103 : vector<2x128xi1>, vector<2x128xf32>
    %c0_77 = arith.constant 0 : index
    %c0_78 = arith.constant 0 : index
    %c0_79 = arith.constant 0 : index
    %109 = vector.load %arg12[%c0_77, %c0_78, %c0_79] : memref<3x128x128xbf16, #tpu.memory_space<vmem>>, vector<1x128x128xbf16>
    %110 = vector.shape_cast %109 : vector<1x128x128xbf16> to vector<128x128xbf16>
    %111 = arith.truncf %108 : vector<2x128xf32> to vector<2x128xbf16>
    %cst_80 = arith.constant dense<0.000000e+00> : vector<2x128xf32>
    %112 = tpu.matmul %111, %110, %cst_80 {dimension_numbers = #tpu.dot_dimension_numbers<[1], [0], [0], [1], [0, 0, 1, 1], [], []>} : vector<2x128xbf16>, vector<128x128xbf16>, vector<2x128xf32> -> vector<2x128xf32>
    %c1_81 = arith.constant 1 : index
    %c0_82 = arith.constant 0 : index
    %c0_83 = arith.constant 0 : index
    %113 = vector.load %arg12[%c1_81, %c0_82, %c0_83] : memref<3x128x128xbf16, #tpu.memory_space<vmem>>, vector<1x128x128xbf16>
    %114 = vector.shape_cast %113 : vector<1x128x128xbf16> to vector<128x128xbf16>
    %115 = arith.truncf %100 : vector<2x128xf32> to vector<2x128xbf16>
    %cst_84 = arith.constant dense<0.000000e+00> : vector<2x128xf32>
    %116 = tpu.matmul %115, %114, %cst_84 {dimension_numbers = #tpu.dot_dimension_numbers<[1], [0], [0], [1], [0, 0, 1, 1], [], []>} : vector<2x128xbf16>, vector<128x128xbf16>, vector<2x128xf32> -> vector<2x128xf32>
    %117 = arith.addf %112, %116 : vector<2x128xf32>
    %c2_85 = arith.constant 2 : index
    %c0_86 = arith.constant 0 : index
    %c0_87 = arith.constant 0 : index
    %118 = vector.load %arg12[%c2_85, %c0_86, %c0_87] : memref<3x128x128xbf16, #tpu.memory_space<vmem>>, vector<1x128x128xbf16>
    %119 = vector.shape_cast %118 : vector<1x128x128xbf16> to vector<128x128xbf16>
    %120 = arith.truncf %102 : vector<2x128xf32> to vector<2x128xbf16>
    %cst_88 = arith.constant dense<0.000000e+00> : vector<2x128xf32>
    %121 = tpu.matmul %120, %119, %cst_88 {dimension_numbers = #tpu.dot_dimension_numbers<[1], [0], [0], [1], [0, 0, 1, 1], [], []>} : vector<2x128xbf16>, vector<128x128xbf16>, vector<2x128xf32> -> vector<2x128xf32>
    %122 = arith.addf %117, %121 : vector<2x128xf32>
    %123 = vector.broadcast %8 : vector<1x128xf32> to vector<2x128xf32>
    %124 = arith.addf %122, %123 : vector<2x128xf32>
    %c0_89 = arith.constant 0 : index
    %c0_90 = arith.constant 0 : index
    %c0_91 = arith.constant 0 : index
    %125 = vector.load %arg18[%c0_89, %c0_90, %c0_91] : memref<1x2x128xf32, #tpu.memory_space<vmem>>, vector<1x2x128xf32>
    %126 = vector.shape_cast %125 : vector<1x2x128xf32> to vector<2x128xf32>
    %127 = vector.shape_cast %124 : vector<2x128xf32> to vector<1x2x128xf32>
    tpu.vector_store %arg18[%c0_89, %c0_90, %c0_91], %127 {strides = array<i32>} : memref<1x2x128xf32, #tpu.memory_space<vmem>>, vector<1x2x128xf32>,
    %c0_92 = arith.constant 0 : index
    %c0_93 = arith.constant 0 : index
    %c0_94 = arith.constant 0 : index
    %c0_95 = arith.constant 0 : index
    %128 = vector.load %arg3[%c0_92, %c0_93, %c0_94, %c0_95] : memref<1x2x8x64xf32, #tpu.memory_space<vmem>>, vector<1x1x8x64xf32>
    %129 = vector.shape_cast %128 : vector<1x1x8x64xf32> to vector<8x64xf32>
    %c0_96 = arith.constant 0 : index
    %c0_97 = arith.constant 0 : index
    %130 = vector.load %arg6[%c0_96, %c0_97] : memref<64x128xbf16, #tpu.memory_space<vmem>>, vector<64x128xbf16>
    %131 = arith.truncf %129 : vector<8x64xf32> to vector<8x64xbf16>
    %cst_98 = arith.constant dense<0.000000e+00> : vector<8x128xf32>
    %132 = tpu.matmul %131, %130, %cst_98 {dimension_numbers = #tpu.dot_dimension_numbers<[1], [0], [0], [1], [0, 0, 1, 1], [], []>} : vector<8x64xbf16>, vector<64x128xbf16>, vector<8x128xf32> -> vector<8x128xf32>
    %133 = vector.broadcast %3 : vector<1x128xf32> to vector<8x128xf32>
    %134 = arith.addf %132, %133 : vector<8x128xf32>
    %135 = arith.addf %134, %15 : vector<8x128xf32>
    %c0_99 = arith.constant 0 : index
    %c1_100 = arith.constant 1 : index
    %c0_101 = arith.constant 0 : index
    %c0_102 = arith.constant 0 : index
    %136 = vector.load %arg3[%c0_99, %c1_100, %c0_101, %c0_102] : memref<1x2x8x64xf32, #tpu.memory_space<vmem>>, vector<1x1x8x64xf32>
    %137 = vector.shape_cast %136 : vector<1x1x8x64xf32> to vector<8x64xf32>
    %c0_103 = arith.constant 0 : index
    %c0_104 = arith.constant 0 : index
    %138 = vector.load %arg6[%c0_103, %c0_104] : memref<64x128xbf16, #tpu.memory_space<vmem>>, vector<64x128xbf16>
    %139 = arith.truncf %137 : vector<8x64xf32> to vector<8x64xbf16>
    %cst_105 = arith.constant dense<0.000000e+00> : vector<8x128xf32>
    %140 = tpu.matmul %139, %138, %cst_105 {dimension_numbers = #tpu.dot_dimension_numbers<[1], [0], [0], [1], [0, 0, 1, 1], [], []>} : vector<8x64xbf16>, vector<64x128xbf16>, vector<8x128xf32> -> vector<8x128xf32>
    %141 = vector.broadcast %3 : vector<1x128xf32> to vector<8x128xf32>
    %142 = arith.addf %140, %141 : vector<8x128xf32>
    %143 = arith.addf %142, %15 : vector<8x128xf32>
    %c1_i32_106 = arith.constant 1 : i32
    %144 = tpu.dynamic_rotate %143 by %c1_i32_106 dim 0 : vector<8x128xf32>, i32 -> vector<8x128xf32>
    %145 = tpu.iota {dimensions = array<i32: 0>} : vector<8x128xi32>
    %c0_i32_107 = arith.constant 0 : i32
    %146 = vector.broadcast %c0_i32_107 : i32 to vector<8x128xi32>
    %147 = arith.cmpi eq, %145, %146 : vector<8x128xi32>
    %cst_108 = arith.constant 0.000000e+00 : f32
    %148 = vector.broadcast %cst_108 : f32 to vector<8x128xf32>
    %149 = arith.select %147, %148, %144 : vector<8x128xi1>, vector<8x128xf32>
    %c0_109 = arith.constant 0 : index
    %c0_110 = arith.constant 0 : index
    %c0_111 = arith.constant 0 : index
    %150 = vector.load %arg9[%c0_109, %c0_110, %c0_111] : memref<3x128x128xbf16, #tpu.memory_space<vmem>>, vector<1x128x128xbf16>
    %151 = vector.shape_cast %150 : vector<1x128x128xbf16> to vector<128x128xbf16>
    %152 = arith.truncf %149 : vector<8x128xf32> to vector<8x128xbf16>
    %cst_112 = arith.constant dense<0.000000e+00> : vector<8x128xf32>
    %153 = tpu.matmul %152, %151, %cst_112 {dimension_numbers = #tpu.dot_dimension_numbers<[1], [0], [0], [1], [0, 0, 1, 1], [], []>} : vector<8x128xbf16>, vector<128x128xbf16>, vector<8x128xf32> -> vector<8x128xf32>
    %c1_113 = arith.constant 1 : index
    %c0_114 = arith.constant 0 : index
    %c0_115 = arith.constant 0 : index
    %154 = vector.load %arg9[%c1_113, %c0_114, %c0_115] : memref<3x128x128xbf16, #tpu.memory_space<vmem>>, vector<1x128x128xbf16>
    %155 = vector.shape_cast %154 : vector<1x128x128xbf16> to vector<128x128xbf16>
    %156 = arith.truncf %135 : vector<8x128xf32> to vector<8x128xbf16>
    %cst_116 = arith.constant dense<0.000000e+00> : vector<8x128xf32>
    %157 = tpu.matmul %156, %155, %cst_116 {dimension_numbers = #tpu.dot_dimension_numbers<[1], [0], [0], [1], [0, 0, 1, 1], [], []>} : vector<8x128xbf16>, vector<128x128xbf16>, vector<8x128xf32> -> vector<8x128xf32>
    %158 = arith.addf %153, %157 : vector<8x128xf32>
    %c2_117 = arith.constant 2 : index
    %c0_118 = arith.constant 0 : index
    %c0_119 = arith.constant 0 : index
    %159 = vector.load %arg9[%c2_117, %c0_118, %c0_119] : memref<3x128x128xbf16, #tpu.memory_space<vmem>>, vector<1x128x128xbf16>
    %160 = vector.shape_cast %159 : vector<1x128x128xbf16> to vector<128x128xbf16>
    %161 = arith.truncf %143 : vector<8x128xf32> to vector<8x128xbf16>
    %cst_120 = arith.constant dense<0.000000e+00> : vector<8x128xf32>
    %162 = tpu.matmul %161, %160, %cst_120 {dimension_numbers = #tpu.dot_dimension_numbers<[1], [0], [0], [1], [0, 0, 1, 1], [], []>} : vector<8x128xbf16>, vector<128x128xbf16>, vector<8x128xf32> -> vector<8x128xf32>
    %163 = arith.addf %158, %162 : vector<8x128xf32>
    %164 = vector.broadcast %4 : vector<1x128xf32> to vector<8x128xf32>
    %165 = arith.addf %163, %164 : vector<8x128xf32>
    %c0_121 = arith.constant 0 : index
    %c0_122 = arith.constant 0 : index
    %c0_123 = arith.constant 0 : index
    %c0_124 = arith.constant 0 : index
    %166 = vector.load %arg15[%c0_121, %c0_122, %c0_123, %c0_124] : memref<1x2x8x128xf32, #tpu.memory_space<vmem>>, vector<1x1x8x128xf32>
    %167 = vector.shape_cast %166 : vector<1x1x8x128xf32> to vector<8x128xf32>
    %168 = vector.shape_cast %165 : vector<8x128xf32> to vector<1x1x8x128xf32>
    tpu.vector_store %arg15[%c0_121, %c0_122, %c0_123, %c0_124], %168 {strides = array<i32>} : memref<1x2x8x128xf32, #tpu.memory_space<vmem>>, vector<1x1x8x128xf32>,
    %c0_125 = arith.constant 0 : index
    %c0_126 = arith.constant 0 : index
    %c0_127 = arith.constant 0 : index
    %169 = vector.load %arg9[%c0_125, %c0_126, %c0_127] : memref<3x128x128xbf16, #tpu.memory_space<vmem>>, vector<1x128x128xbf16>
    %170 = vector.shape_cast %169 : vector<1x128x128xbf16> to vector<128x128xbf16>
    %171 = arith.truncf %135 : vector<8x128xf32> to vector<8x128xbf16>
    %cst_128 = arith.constant dense<0.000000e+00> : vector<8x128xf32>
    %172 = tpu.matmul %171, %170, %cst_128 {dimension_numbers = #tpu.dot_dimension_numbers<[1], [0], [0], [1], [0, 0, 1, 1], [], []>} : vector<8x128xbf16>, vector<128x128xbf16>, vector<8x128xf32> -> vector<8x128xf32>
    %c1_129 = arith.constant 1 : index
    %c0_130 = arith.constant 0 : index
    %c0_131 = arith.constant 0 : index
    %173 = vector.load %arg9[%c1_129, %c0_130, %c0_131] : memref<3x128x128xbf16, #tpu.memory_space<vmem>>, vector<1x128x128xbf16>
    %174 = vector.shape_cast %173 : vector<1x128x128xbf16> to vector<128x128xbf16>
    %175 = arith.truncf %143 : vector<8x128xf32> to vector<8x128xbf16>
    %cst_132 = arith.constant dense<0.000000e+00> : vector<8x128xf32>
    %176 = tpu.matmul %175, %174, %cst_132 {dimension_numbers = #tpu.dot_dimension_numbers<[1], [0], [0], [1], [0, 0, 1, 1], [], []>} : vector<8x128xbf16>, vector<128x128xbf16>, vector<8x128xf32> -> vector<8x128xf32>
    %177 = arith.addf %172, %176 : vector<8x128xf32>
    %c7_i32_133 = arith.constant 7 : i32
    %178 = tpu.dynamic_rotate %135 by %c7_i32_133 dim 0 : vector<8x128xf32>, i32 -> vector<8x128xf32>
    %179 = tpu.iota {dimensions = array<i32: 0>} : vector<8x128xi32>
    %c7_i32_134 = arith.constant 7 : i32
    %180 = vector.broadcast %c7_i32_134 : i32 to vector<8x128xi32>
    %181 = arith.cmpi eq, %179, %180 : vector<8x128xi32>
    %cst_135 = arith.constant 0.000000e+00 : f32
    %182 = vector.broadcast %cst_135 : f32 to vector<8x128xf32>
    %183 = arith.select %181, %182, %178 : vector<8x128xi1>, vector<8x128xf32>
    %c2_136 = arith.constant 2 : index
    %c0_137 = arith.constant 0 : index
    %c0_138 = arith.constant 0 : index
    %184 = vector.load %arg9[%c2_136, %c0_137, %c0_138] : memref<3x128x128xbf16, #tpu.memory_space<vmem>>, vector<1x128x128xbf16>
    %185 = vector.shape_cast %184 : vector<1x128x128xbf16> to vector<128x128xbf16>
    %186 = arith.truncf %183 : vector<8x128xf32> to vector<8x128xbf16>
    %cst_139 = arith.constant dense<0.000000e+00> : vector<8x128xf32>
    %187 = tpu.matmul %186, %185, %cst_139 {dimension_numbers = #tpu.dot_dimension_numbers<[1], [0], [0], [1], [0, 0, 1, 1], [], []>} : vector<8x128xbf16>, vector<128x128xbf16>, vector<8x128xf32> -> vector<8x128xf32>
    %188 = arith.addf %177, %187 : vector<8x128xf32>
    %189 = vector.broadcast %4 : vector<1x128xf32> to vector<8x128xf32>
    %190 = arith.addf %188, %189 : vector<8x128xf32>
    %c0_140 = arith.constant 0 : index
    %c1_141 = arith.constant 1 : index
    %c0_142 = arith.constant 0 : index
    %c0_143 = arith.constant 0 : index
    %191 = vector.load %arg15[%c0_140, %c1_141, %c0_142, %c0_143] : memref<1x2x8x128xf32, #tpu.memory_space<vmem>>, vector<1x1x8x128xf32>
    %192 = vector.shape_cast %191 : vector<1x1x8x128xf32> to vector<8x128xf32>
    %193 = vector.shape_cast %190 : vector<8x128xf32> to vector<1x1x8x128xf32>
    tpu.vector_store %arg15[%c0_140, %c1_141, %c0_142, %c0_143], %193 {strides = array<i32>} : memref<1x2x8x128xf32, #tpu.memory_space<vmem>>, vector<1x1x8x128xf32>,
    %c0_144 = arith.constant 0 : index
    %c0_145 = arith.constant 0 : index
    %c0_146 = arith.constant 0 : index
    %c0_147 = arith.constant 0 : index
    %194 = vector.load %arg4[%c0_144, %c0_145, %c0_146, %c0_147] : memref<1x4x8x32xf32, #tpu.memory_space<vmem>>, vector<1x1x8x32xf32>
    %195 = vector.shape_cast %194 : vector<1x1x8x32xf32> to vector<8x32xf32>
    %c0_148 = arith.constant 0 : index
    %c0_149 = arith.constant 0 : index
    %196 = vector.load %arg7[%c0_148, %c0_149] : memref<32x128xbf16, #tpu.memory_space<vmem>>, vector<32x128xbf16>
    %197 = arith.truncf %195 : vector<8x32xf32> to vector<8x32xbf16>
    %cst_150 = arith.constant dense<0.000000e+00> : vector<8x128xf32>
    %198 = tpu.matmul %197, %196, %cst_150 {dimension_numbers = #tpu.dot_dimension_numbers<[1], [0], [0], [1], [0, 0, 1, 1], [], []>} : vector<8x32xbf16>, vector<32x128xbf16>, vector<8x128xf32> -> vector<8x128xf32>
    %199 = vector.broadcast %5 : vector<1x128xf32> to vector<8x128xf32>
    %200 = arith.addf %198, %199 : vector<8x128xf32>
    %201 = arith.addf %200, %135 : vector<8x128xf32>
    %c0_151 = arith.constant 0 : index
    %c1_152 = arith.constant 1 : index
    %c0_153 = arith.constant 0 : index
    %c0_154 = arith.constant 0 : index
    %202 = vector.load %arg4[%c0_151, %c1_152, %c0_153, %c0_154] : memref<1x4x8x32xf32, #tpu.memory_space<vmem>>, vector<1x1x8x32xf32>
    %203 = vector.shape_cast %202 : vector<1x1x8x32xf32> to vector<8x32xf32>
    %c0_155 = arith.constant 0 : index
    %c0_156 = arith.constant 0 : index
    %204 = vector.load %arg7[%c0_155, %c0_156] : memref<32x128xbf16, #tpu.memory_space<vmem>>, vector<32x128xbf16>
    %205 = arith.truncf %203 : vector<8x32xf32> to vector<8x32xbf16>
    %cst_157 = arith.constant dense<0.000000e+00> : vector<8x128xf32>
    %206 = tpu.matmul %205, %204, %cst_157 {dimension_numbers = #tpu.dot_dimension_numbers<[1], [0], [0], [1], [0, 0, 1, 1], [], []>} : vector<8x32xbf16>, vector<32x128xbf16>, vector<8x128xf32> -> vector<8x128xf32>
    %207 = vector.broadcast %5 : vector<1x128xf32> to vector<8x128xf32>
    %208 = arith.addf %206, %207 : vector<8x128xf32>
    %209 = arith.addf %208, %135 : vector<8x128xf32>
    %c0_158 = arith.constant 0 : index
    %c2_159 = arith.constant 2 : index
    %c0_160 = arith.constant 0 : index
    %c0_161 = arith.constant 0 : index
    %210 = vector.load %arg4[%c0_158, %c2_159, %c0_160, %c0_161] : memref<1x4x8x32xf32, #tpu.memory_space<vmem>>, vector<1x1x8x32xf32>
    %211 = vector.shape_cast %210 : vector<1x1x8x32xf32> to vector<8x32xf32>
    %c0_162 = arith.constant 0 : index
    %c0_163 = arith.constant 0 : index
    %212 = vector.load %arg7[%c0_162, %c0_163] : memref<32x128xbf16, #tpu.memory_space<vmem>>, vector<32x128xbf16>
    %213 = arith.truncf %211 : vector<8x32xf32> to vector<8x32xbf16>
    %cst_164 = arith.constant dense<0.000000e+00> : vector<8x128xf32>
    %214 = tpu.matmul %213, %212, %cst_164 {dimension_numbers = #tpu.dot_dimension_numbers<[1], [0], [0], [1], [0, 0, 1, 1], [], []>} : vector<8x32xbf16>, vector<32x128xbf16>, vector<8x128xf32> -> vector<8x128xf32>
    %215 = vector.broadcast %5 : vector<1x128xf32> to vector<8x128xf32>
    %216 = arith.addf %214, %215 : vector<8x128xf32>
    %217 = arith.addf %216, %143 : vector<8x128xf32>
    %c0_165 = arith.constant 0 : index
    %c3_166 = arith.constant 3 : index
    %c0_167 = arith.constant 0 : index
    %c0_168 = arith.constant 0 : index
    %218 = vector.load %arg4[%c0_165, %c3_166, %c0_167, %c0_168] : memref<1x4x8x32xf32, #tpu.memory_space<vmem>>, vector<1x1x8x32xf32>
    %219 = vector.shape_cast %218 : vector<1x1x8x32xf32> to vector<8x32xf32>
    %c0_169 = arith.constant 0 : index
    %c0_170 = arith.constant 0 : index
    %220 = vector.load %arg7[%c0_169, %c0_170] : memref<32x128xbf16, #tpu.memory_space<vmem>>, vector<32x128xbf16>
    %221 = arith.truncf %219 : vector<8x32xf32> to vector<8x32xbf16>
    %cst_171 = arith.constant dense<0.000000e+00> : vector<8x128xf32>
    %222 = tpu.matmul %221, %220, %cst_171 {dimension_numbers = #tpu.dot_dimension_numbers<[1], [0], [0], [1], [0, 0, 1, 1], [], []>} : vector<8x32xbf16>, vector<32x128xbf16>, vector<8x128xf32> -> vector<8x128xf32>
    %223 = vector.broadcast %5 : vector<1x128xf32> to vector<8x128xf32>
    %224 = arith.addf %222, %223 : vector<8x128xf32>
    %225 = arith.addf %224, %143 : vector<8x128xf32>
    %c1_i32_172 = arith.constant 1 : i32
    %226 = tpu.dynamic_rotate %225 by %c1_i32_172 dim 0 : vector<8x128xf32>, i32 -> vector<8x128xf32>
    %227 = tpu.iota {dimensions = array<i32: 0>} : vector<8x128xi32>
    %c0_i32_173 = arith.constant 0 : i32
    %228 = vector.broadcast %c0_i32_173 : i32 to vector<8x128xi32>
    %229 = arith.cmpi eq, %227, %228 : vector<8x128xi32>
    %cst_174 = arith.constant 0.000000e+00 : f32
    %230 = vector.broadcast %cst_174 : f32 to vector<8x128xf32>
    %231 = arith.select %229, %230, %226 : vector<8x128xi1>, vector<8x128xf32>
    %c0_175 = arith.constant 0 : index
    %c0_176 = arith.constant 0 : index
    %c0_177 = arith.constant 0 : index
    %232 = vector.load %arg10[%c0_175, %c0_176, %c0_177] : memref<3x128x128xbf16, #tpu.memory_space<vmem>>, vector<1x128x128xbf16>
    %233 = vector.shape_cast %232 : vector<1x128x128xbf16> to vector<128x128xbf16>
    %234 = arith.truncf %231 : vector<8x128xf32> to vector<8x128xbf16>
    %cst_178 = arith.constant dense<0.000000e+00> : vector<8x128xf32>
    %235 = tpu.matmul %234, %233, %cst_178 {dimension_numbers = #tpu.dot_dimension_numbers<[1], [0], [0], [1], [0, 0, 1, 1], [], []>} : vector<8x128xbf16>, vector<128x128xbf16>, vector<8x128xf32> -> vector<8x128xf32>
    %c1_179 = arith.constant 1 : index
    %c0_180 = arith.constant 0 : index
    %c0_181 = arith.constant 0 : index
    %236 = vector.load %arg10[%c1_179, %c0_180, %c0_181] : memref<3x128x128xbf16, #tpu.memory_space<vmem>>, vector<1x128x128xbf16>
    %237 = vector.shape_cast %236 : vector<1x128x128xbf16> to vector<128x128xbf16>
    %238 = arith.truncf %201 : vector<8x128xf32> to vector<8x128xbf16>
    %cst_182 = arith.constant dense<0.000000e+00> : vector<8x128xf32>
    %239 = tpu.matmul %238, %237, %cst_182 {dimension_numbers = #tpu.dot_dimension_numbers<[1], [0], [0], [1], [0, 0, 1, 1], [], []>} : vector<8x128xbf16>, vector<128x128xbf16>, vector<8x128xf32> -> vector<8x128xf32>
    %240 = arith.addf %235, %239 : vector<8x128xf32>
    %c2_183 = arith.constant 2 : index
    %c0_184 = arith.constant 0 : index
    %c0_185 = arith.constant 0 : index
    %241 = vector.load %arg10[%c2_183, %c0_184, %c0_185] : memref<3x128x128xbf16, #tpu.memory_space<vmem>>, vector<1x128x128xbf16>
    %242 = vector.shape_cast %241 : vector<1x128x128xbf16> to vector<128x128xbf16>
    %243 = arith.truncf %209 : vector<8x128xf32> to vector<8x128xbf16>
    %cst_186 = arith.constant dense<0.000000e+00> : vector<8x128xf32>
    %244 = tpu.matmul %243, %242, %cst_186 {dimension_numbers = #tpu.dot_dimension_numbers<[1], [0], [0], [1], [0, 0, 1, 1], [], []>} : vector<8x128xbf16>, vector<128x128xbf16>, vector<8x128xf32> -> vector<8x128xf32>
    %245 = arith.addf %240, %244 : vector<8x128xf32>
    %246 = vector.broadcast %6 : vector<1x128xf32> to vector<8x128xf32>
    %247 = arith.addf %245, %246 : vector<8x128xf32>
    %c0_187 = arith.constant 0 : index
    %c0_188 = arith.constant 0 : index
    %c0_189 = arith.constant 0 : index
    %c0_190 = arith.constant 0 : index
    %248 = vector.load %arg14[%c0_187, %c0_188, %c0_189, %c0_190] : memref<1x4x8x128xf32, #tpu.memory_space<vmem>>, vector<1x1x8x128xf32>
    %249 = vector.shape_cast %248 : vector<1x1x8x128xf32> to vector<8x128xf32>
    %250 = vector.shape_cast %247 : vector<8x128xf32> to vector<1x1x8x128xf32>
    tpu.vector_store %arg14[%c0_187, %c0_188, %c0_189, %c0_190], %250 {strides = array<i32>} : memref<1x4x8x128xf32, #tpu.memory_space<vmem>>, vector<1x1x8x128xf32>,
    %c0_191 = arith.constant 0 : index
    %c0_192 = arith.constant 0 : index
    %c0_193 = arith.constant 0 : index
    %251 = vector.load %arg10[%c0_191, %c0_192, %c0_193] : memref<3x128x128xbf16, #tpu.memory_space<vmem>>, vector<1x128x128xbf16>
    %252 = vector.shape_cast %251 : vector<1x128x128xbf16> to vector<128x128xbf16>
    %253 = arith.truncf %201 : vector<8x128xf32> to vector<8x128xbf16>
    %cst_194 = arith.constant dense<0.000000e+00> : vector<8x128xf32>
    %254 = tpu.matmul %253, %252, %cst_194 {dimension_numbers = #tpu.dot_dimension_numbers<[1], [0], [0], [1], [0, 0, 1, 1], [], []>} : vector<8x128xbf16>, vector<128x128xbf16>, vector<8x128xf32> -> vector<8x128xf32>
    %c1_195 = arith.constant 1 : index
    %c0_196 = arith.constant 0 : index
    %c0_197 = arith.constant 0 : index
    %255 = vector.load %arg10[%c1_195, %c0_196, %c0_197] : memref<3x128x128xbf16, #tpu.memory_space<vmem>>, vector<1x128x128xbf16>
    %256 = vector.shape_cast %255 : vector<1x128x128xbf16> to vector<128x128xbf16>
    %257 = arith.truncf %209 : vector<8x128xf32> to vector<8x128xbf16>
    %cst_198 = arith.constant dense<0.000000e+00> : vector<8x128xf32>
    %258 = tpu.matmul %257, %256, %cst_198 {dimension_numbers = #tpu.dot_dimension_numbers<[1], [0], [0], [1], [0, 0, 1, 1], [], []>} : vector<8x128xbf16>, vector<128x128xbf16>, vector<8x128xf32> -> vector<8x128xf32>
    %259 = arith.addf %254, %258 : vector<8x128xf32>
    %c2_199 = arith.constant 2 : index
    %c0_200 = arith.constant 0 : index
    %c0_201 = arith.constant 0 : index
    %260 = vector.load %arg10[%c2_199, %c0_200, %c0_201] : memref<3x128x128xbf16, #tpu.memory_space<vmem>>, vector<1x128x128xbf16>
    %261 = vector.shape_cast %260 : vector<1x128x128xbf16> to vector<128x128xbf16>
    %262 = arith.truncf %217 : vector<8x128xf32> to vector<8x128xbf16>
    %cst_202 = arith.constant dense<0.000000e+00> : vector<8x128xf32>
    %263 = tpu.matmul %262, %261, %cst_202 {dimension_numbers = #tpu.dot_dimension_numbers<[1], [0], [0], [1], [0, 0, 1, 1], [], []>} : vector<8x128xbf16>, vector<128x128xbf16>, vector<8x128xf32> -> vector<8x128xf32>
    %264 = arith.addf %259, %263 : vector<8x128xf32>
    %265 = vector.broadcast %6 : vector<1x128xf32> to vector<8x128xf32>
    %266 = arith.addf %264, %265 : vector<8x128xf32>
    %c0_203 = arith.constant 0 : index
    %c1_204 = arith.constant 1 : index
    %c0_205 = arith.constant 0 : index
    %c0_206 = arith.constant 0 : index
    %267 = vector.load %arg14[%c0_203, %c1_204, %c0_205, %c0_206] : memref<1x4x8x128xf32, #tpu.memory_space<vmem>>, vector<1x1x8x128xf32>
    %268 = vector.shape_cast %267 : vector<1x1x8x128xf32> to vector<8x128xf32>
    %269 = vector.shape_cast %266 : vector<8x128xf32> to vector<1x1x8x128xf32>
    tpu.vector_store %arg14[%c0_203, %c1_204, %c0_205, %c0_206], %269 {strides = array<i32>} : memref<1x4x8x128xf32, #tpu.memory_space<vmem>>, vector<1x1x8x128xf32>,
    %c0_207 = arith.constant 0 : index
    %c0_208 = arith.constant 0 : index
    %c0_209 = arith.constant 0 : index
    %270 = vector.load %arg10[%c0_207, %c0_208, %c0_209] : memref<3x128x128xbf16, #tpu.memory_space<vmem>>, vector<1x128x128xbf16>
    %271 = vector.shape_cast %270 : vector<1x128x128xbf16> to vector<128x128xbf16>
    %272 = arith.truncf %209 : vector<8x128xf32> to vector<8x128xbf16>
    %cst_210 = arith.constant dense<0.000000e+00> : vector<8x128xf32>
    %273 = tpu.matmul %272, %271, %cst_210 {dimension_numbers = #tpu.dot_dimension_numbers<[1], [0], [0], [1], [0, 0, 1, 1], [], []>} : vector<8x128xbf16>, vector<128x128xbf16>, vector<8x128xf32> -> vector<8x128xf32>
    %c1_211 = arith.constant 1 : index
    %c0_212 = arith.constant 0 : index
    %c0_213 = arith.constant 0 : index
    %274 = vector.load %arg10[%c1_211, %c0_212, %c0_213] : memref<3x128x128xbf16, #tpu.memory_space<vmem>>, vector<1x128x128xbf16>
    %275 = vector.shape_cast %274 : vector<1x128x128xbf16> to vector<128x128xbf16>
    %276 = arith.truncf %217 : vector<8x128xf32> to vector<8x128xbf16>
    %cst_214 = arith.constant dense<0.000000e+00> : vector<8x128xf32>
    %277 = tpu.matmul %276, %275, %cst_214 {dimension_numbers = #tpu.dot_dimension_numbers<[1], [0], [0], [1], [0, 0, 1, 1], [], []>} : vector<8x128xbf16>, vector<128x128xbf16>, vector<8x128xf32> -> vector<8x128xf32>
    %278 = arith.addf %273, %277 : vector<8x128xf32>
    %c2_215 = arith.constant 2 : index
    %c0_216 = arith.constant 0 : index
    %c0_217 = arith.constant 0 : index
    %279 = vector.load %arg10[%c2_215, %c0_216, %c0_217] : memref<3x128x128xbf16, #tpu.memory_space<vmem>>, vector<1x128x128xbf16>
    %280 = vector.shape_cast %279 : vector<1x128x128xbf16> to vector<128x128xbf16>
    %281 = arith.truncf %225 : vector<8x128xf32> to vector<8x128xbf16>
    %cst_218 = arith.constant dense<0.000000e+00> : vector<8x128xf32>
    %282 = tpu.matmul %281, %280, %cst_218 {dimension_numbers = #tpu.dot_dimension_numbers<[1], [0], [0], [1], [0, 0, 1, 1], [], []>} : vector<8x128xbf16>, vector<128x128xbf16>, vector<8x128xf32> -> vector<8x128xf32>
    %283 = arith.addf %278, %282 : vector<8x128xf32>
    %284 = vector.broadcast %6 : vector<1x128xf32> to vector<8x128xf32>
    %285 = arith.addf %283, %284 : vector<8x128xf32>
    %c0_219 = arith.constant 0 : index
    %c2_220 = arith.constant 2 : index
    %c0_221 = arith.constant 0 : index
    %c0_222 = arith.constant 0 : index
    %286 = vector.load %arg14[%c0_219, %c2_220, %c0_221, %c0_222] : memref<1x4x8x128xf32, #tpu.memory_space<vmem>>, vector<1x1x8x128xf32>
    %287 = vector.shape_cast %286 : vector<1x1x8x128xf32> to vector<8x128xf32>
    %288 = vector.shape_cast %285 : vector<8x128xf32> to vector<1x1x8x128xf32>
    tpu.vector_store %arg14[%c0_219, %c2_220, %c0_221, %c0_222], %288 {strides = array<i32>} : memref<1x4x8x128xf32, #tpu.memory_space<vmem>>, vector<1x1x8x128xf32>,
    %c0_223 = arith.constant 0 : index
    %c0_224 = arith.constant 0 : index
    %c0_225 = arith.constant 0 : index
    %289 = vector.load %arg10[%c0_223, %c0_224, %c0_225] : memref<3x128x128xbf16, #tpu.memory_space<vmem>>, vector<1x128x128xbf16>
    %290 = vector.shape_cast %289 : vector<1x128x128xbf16> to vector<128x128xbf16>
    %291 = arith.truncf %217 : vector<8x128xf32> to vector<8x128xbf16>
    %cst_226 = arith.constant dense<0.000000e+00> : vector<8x128xf32>
    %292 = tpu.matmul %291, %290, %cst_226 {dimension_numbers = #tpu.dot_dimension_numbers<[1], [0], [0], [1], [0, 0, 1, 1], [], []>} : vector<8x128xbf16>, vector<128x128xbf16>, vector<8x128xf32> -> vector<8x128xf32>
    %c1_227 = arith.constant 1 : index
    %c0_228 = arith.constant 0 : index
    %c0_229 = arith.constant 0 : index
    %293 = vector.load %arg10[%c1_227, %c0_228, %c0_229] : memref<3x128x128xbf16, #tpu.memory_space<vmem>>, vector<1x128x128xbf16>
    %294 = vector.shape_cast %293 : vector<1x128x128xbf16> to vector<128x128xbf16>
    %295 = arith.truncf %225 : vector<8x128xf32> to vector<8x128xbf16>
    %cst_230 = arith.constant dense<0.000000e+00> : vector<8x128xf32>
    %296 = tpu.matmul %295, %294, %cst_230 {dimension_numbers = #tpu.dot_dimension_numbers<[1], [0], [0], [1], [0, 0, 1, 1], [], []>} : vector<8x128xbf16>, vector<128x128xbf16>, vector<8x128xf32> -> vector<8x128xf32>
    %297 = arith.addf %292, %296 : vector<8x128xf32>
    %c7_i32_231 = arith.constant 7 : i32
    %298 = tpu.dynamic_rotate %201 by %c7_i32_231 dim 0 : vector<8x128xf32>, i32 -> vector<8x128xf32>
    %299 = tpu.iota {dimensions = array<i32: 0>} : vector<8x128xi32>
    %c7_i32_232 = arith.constant 7 : i32
    %300 = vector.broadcast %c7_i32_232 : i32 to vector<8x128xi32>
    %301 = arith.cmpi eq, %299, %300 : vector<8x128xi32>
    %cst_233 = arith.constant 0.000000e+00 : f32
    %302 = vector.broadcast %cst_233 : f32 to vector<8x128xf32>
    %303 = arith.select %301, %302, %298 : vector<8x128xi1>, vector<8x128xf32>
    %c2_234 = arith.constant 2 : index
    %c0_235 = arith.constant 0 : index
    %c0_236 = arith.constant 0 : index
    %304 = vector.load %arg10[%c2_234, %c0_235, %c0_236] : memref<3x128x128xbf16, #tpu.memory_space<vmem>>, vector<1x128x128xbf16>
    %305 = vector.shape_cast %304 : vector<1x128x128xbf16> to vector<128x128xbf16>
    %306 = arith.truncf %303 : vector<8x128xf32> to vector<8x128xbf16>
    %cst_237 = arith.constant dense<0.000000e+00> : vector<8x128xf32>
    %307 = tpu.matmul %306, %305, %cst_237 {dimension_numbers = #tpu.dot_dimension_numbers<[1], [0], [0], [1], [0, 0, 1, 1], [], []>} : vector<8x128xbf16>, vector<128x128xbf16>, vector<8x128xf32> -> vector<8x128xf32>
    %308 = arith.addf %297, %307 : vector<8x128xf32>
    %309 = vector.broadcast %6 : vector<1x128xf32> to vector<8x128xf32>
    %310 = arith.addf %308, %309 : vector<8x128xf32>
    %c0_238 = arith.constant 0 : index
    %c3_239 = arith.constant 3 : index
    %c0_240 = arith.constant 0 : index
    %c0_241 = arith.constant 0 : index
    %311 = vector.load %arg14[%c0_238, %c3_239, %c0_240, %c0_241] : memref<1x4x8x128xf32, #tpu.memory_space<vmem>>, vector<1x1x8x128xf32>
    %312 = vector.shape_cast %311 : vector<1x1x8x128xf32> to vector<8x128xf32>
    %313 = vector.shape_cast %310 : vector<8x128xf32> to vector<1x1x8x128xf32>
    tpu.vector_store %arg14[%c0_238, %c3_239, %c0_240, %c0_241], %313 {strides = array<i32>} : memref<1x4x8x128xf32, #tpu.memory_space<vmem>>, vector<1x1x8x128xf32>,
    return
  }
  func.func @transform_0(%arg0: i32) -> (i32, i32, i32) {
    %c0_i32 = arith.constant 0 : i32
    %c0_i32_0 = arith.constant 0 : i32
    %c0_i32_1 = arith.constant 0 : i32
    return %arg0, %c0_i32, %c0_i32_0 : i32, i32, i32
  }
  func.func @transform_1(%arg0: i32) -> (i32, i32, i32, i32) {
    %c0_i32 = arith.constant 0 : i32
    %c0_i32_0 = arith.constant 0 : i32
    %c0_i32_1 = arith.constant 0 : i32
    %c0_i32_2 = arith.constant 0 : i32
    return %arg0, %c0_i32, %c0_i32_0, %c0_i32_1 : i32, i32, i32, i32
  }
  func.func @transform_2(%arg0: i32) -> (i32, i32, i32, i32) {
    %c0_i32 = arith.constant 0 : i32
    %c0_i32_0 = arith.constant 0 : i32
    %c0_i32_1 = arith.constant 0 : i32
    %c0_i32_2 = arith.constant 0 : i32
    return %arg0, %c0_i32, %c0_i32_0, %c0_i32_1 : i32, i32, i32, i32
  }
  func.func @transform_3(%arg0: i32) -> (i32, i32, i32, i32) {
    %c0_i32 = arith.constant 0 : i32
    %c0_i32_0 = arith.constant 0 : i32
    %c0_i32_1 = arith.constant 0 : i32
    %c0_i32_2 = arith.constant 0 : i32
    return %arg0, %c0_i32, %c0_i32_0, %c0_i32_1 : i32, i32, i32, i32
  }
  func.func @transform_4(%arg0: i32) -> (i32, i32) {
    %c0_i32 = arith.constant 0 : i32
    %c0_i32_0 = arith.constant 0 : i32
    %c0_i32_1 = arith.constant 0 : i32
    return %c0_i32, %c0_i32_0 : i32, i32
  }
  func.func @transform_5(%arg0: i32) -> (i32, i32) {
    %c0_i32 = arith.constant 0 : i32
    %c0_i32_0 = arith.constant 0 : i32
    %c0_i32_1 = arith.constant 0 : i32
    return %c0_i32, %c0_i32_0 : i32, i32
  }
  func.func @transform_6(%arg0: i32) -> (i32, i32) {
    %c0_i32 = arith.constant 0 : i32
    %c0_i32_0 = arith.constant 0 : i32
    %c0_i32_1 = arith.constant 0 : i32
    return %c0_i32, %c0_i32_0 : i32, i32
  }
  func.func @transform_7(%arg0: i32) -> (i32, i32, i32) {
    %c0_i32 = arith.constant 0 : i32
    %c0_i32_0 = arith.constant 0 : i32
    %c0_i32_1 = arith.constant 0 : i32
    %c0_i32_2 = arith.constant 0 : i32
    return %c0_i32, %c0_i32_0, %c0_i32_1 : i32, i32, i32
  }
  func.func @transform_8(%arg0: i32) -> (i32, i32, i32) {
    %c0_i32 = arith.constant 0 : i32
    %c0_i32_0 = arith.constant 0 : i32
    %c0_i32_1 = arith.constant 0 : i32
    %c0_i32_2 = arith.constant 0 : i32
    return %c0_i32, %c0_i32_0, %c0_i32_1 : i32, i32, i32
  }
  func.func @transform_9(%arg0: i32) -> (i32, i32, i32) {
    %c0_i32 = arith.constant 0 : i32
    %c0_i32_0 = arith.constant 0 : i32
    %c0_i32_1 = arith.constant 0 : i32
    %c0_i32_2 = arith.constant 0 : i32
    return %c0_i32, %c0_i32_0, %c0_i32_1 : i32, i32, i32
  }
  func.func @transform_10(%arg0: i32) -> (i32, i32, i32) {
    %c0_i32 = arith.constant 0 : i32
    %c0_i32_0 = arith.constant 0 : i32
    %c0_i32_1 = arith.constant 0 : i32
    %c0_i32_2 = arith.constant 0 : i32
    return %c0_i32, %c0_i32_0, %c0_i32_1 : i32, i32, i32
  }
  func.func @transform_11(%arg0: i32) -> (i32, i32, i32) {
    %c0_i32 = arith.constant 0 : i32
    %c0_i32_0 = arith.constant 0 : i32
    %c0_i32_1 = arith.constant 0 : i32
    %c0_i32_2 = arith.constant 0 : i32
    return %c0_i32, %c0_i32_0, %c0_i32_1 : i32, i32, i32
  }
  func.func @transform_12(%arg0: i32) -> (i32, i32) {
    %c0_i32 = arith.constant 0 : i32
    %c0_i32_0 = arith.constant 0 : i32
    %c0_i32_1 = arith.constant 0 : i32
    return %c0_i32, %c0_i32_0 : i32, i32
  }
  func.func @transform_13(%arg0: i32) -> (i32, i32, i32, i32) {
    %c0_i32 = arith.constant 0 : i32
    %c0_i32_0 = arith.constant 0 : i32
    %c0_i32_1 = arith.constant 0 : i32
    %c0_i32_2 = arith.constant 0 : i32
    return %arg0, %c0_i32, %c0_i32_0, %c0_i32_1 : i32, i32, i32, i32
  }
  func.func @transform_14(%arg0: i32) -> (i32, i32, i32, i32) {
    %c0_i32 = arith.constant 0 : i32
    %c0_i32_0 = arith.constant 0 : i32
    %c0_i32_1 = arith.constant 0 : i32
    %c0_i32_2 = arith.constant 0 : i32
    return %arg0, %c0_i32, %c0_i32_0, %c0_i32_1 : i32, i32, i32, i32
  }
  func.func @transform_15(%arg0: i32) -> (i32, i32, i32) {
    %c0_i32 = arith.constant 0 : i32
    %c0_i32_0 = arith.constant 0 : i32
    %c0_i32_1 = arith.constant 0 : i32
    return %arg0, %c0_i32, %c0_i32_0 : i32, i32, i32
  }
  func.func @transform_16(%arg0: i32) -> (i32, i32, i32, i32) {
    %c0_i32 = arith.constant 0 : i32
    %c0_i32_0 = arith.constant 0 : i32
    %c0_i32_1 = arith.constant 0 : i32
    %c0_i32_2 = arith.constant 0 : i32
    return %arg0, %c0_i32, %c0_i32_0, %c0_i32_1 : i32, i32, i32, i32
  }
  func.func @transform_17(%arg0: i32) -> (i32, i32, i32) {
    %c0_i32 = arith.constant 0 : i32
    %c0_i32_0 = arith.constant 0 : i32
    %c0_i32_1 = arith.constant 0 : i32
    return %arg0, %c0_i32, %c0_i32_0 : i32, i32, i32
  }
}

</mosaic_0001>

<llo_original>
// kernel: pyramid_features.1
$region0: #{pyramid_features.1}
  #allocation0 [shape = 'u32[]', space=smem, size = 0x4, offset = 0x4, fixed_abs, tag = 'smem constant byte address 0x4 - core index']
  #allocation1 [shape = 'u32[144,128]{1,0:T(1,128)}', space=vmem, size = 0x12000, scoped, tag = 'internal scratch']
  %s0 = inlined_call_operand.vmem [shape: f32[2,8,128], index: 0, kind: input, shape index: {}]
  %s1 = inlined_call_operand.vmem [shape: f32[2,4,2,128], index: 1, kind: input, shape index: {}]
  %s2 = inlined_call_operand.vmem [shape: f32[2,2,8,64], index: 2, kind: input, shape index: {}]
  %s3 = inlined_call_operand.vmem [shape: f32[2,4,8,32], index: 3, kind: input, shape index: {}]
  %s4 = inlined_call_operand.vmem [shape: bf16[128,128], index: 4, kind: input, shape index: {}]
  %s5 = inlined_call_operand.vmem [shape: bf16[64,128], index: 5, kind: input, shape index: {}]
  %s6 = inlined_call_operand.vmem [shape: bf16[32,128], index: 6, kind: input, shape index: {}]
  %s7 = inlined_call_operand.vmem [shape: bf16[3,128,128], index: 7, kind: input, shape index: {}]
  %s8 = inlined_call_operand.vmem [shape: bf16[3,128,128], index: 8, kind: input, shape index: {}]
  %s9 = inlined_call_operand.vmem [shape: bf16[3,128,128], index: 9, kind: input, shape index: {}]
  %s10 = inlined_call_operand.vmem [shape: bf16[3,128,128], index: 10, kind: input, shape index: {}]
  %s11 = inlined_call_operand.vmem [shape: bf16[3,128,128], index: 11, kind: input, shape index: {}]
  %s12 = inlined_call_operand.vmem [shape: f32[8,128], index: 12, kind: input, shape index: {}]
  %s13 = inlined_call_operand.vmem [shape: f32[2,4,8,128], index: 13, kind: output, shape index: {0}]
  %s14 = inlined_call_operand.vmem [shape: f32[2,2,8,128], index: 14, kind: output, shape index: {1}]
  %s15 = inlined_call_operand.hbm [shape: f32[2,8,128], index: 15, kind: output, shape index: {2}]
  %s16 = inlined_call_operand.vmem [shape: f32[2,2,2,128], index: 16, kind: output, shape index: {3}]
  %s17 = inlined_call_operand.hbm [shape: f32[2,2,128], index: 17, kind: output, shape index: {4}]
  %18 = xla_tuple %s13, %s14, %s15, %s16, %s17
  %s19 = sld [smem:[#allocation0]]
  $region117: #{pyramid_features.1} parent=0
    _
  %s21 = ssub.s32 1, %s19
  %s22 = scalar_select 0, %s21, %s19
  $region1: #{pyramid_features.1} parent=0
    #allocation2 [shape = 'u8[8192]{0}', space=vmem, size = 0x2000, scoped, tag = 'output window, operand 2']
    #allocation3 [shape = 's32[2]{0}', space=sflag, size = 0x8, scoped, tag = 'scoped memory for pyramid_features.1']
    #allocation4 [shape = 'u8[2048]{0}', space=vmem, size = 0x800, scoped, tag = 'output window, operand 4']
    #allocation5 [shape = 's32[2]{0}', space=sflag, size = 0x8, scoped, tag = 'scoped memory for pyramid_features.1']
    %23 = vsyncpa [#allocation3], 0
    %s24 = scalar_lea.sflag [#allocation3], 1
    %25 = vsyncpa %s24, 0
    %26 = vsyncpa [#allocation5], 0
    %s27 = scalar_lea.sflag [#allocation5], 1
    %28 = vsyncpa %s27, 0
    loop: start=0, step=1, limit=4
    $region2: #{pyramid_features.1} parent=1 // loop_pre_header
      _
    $region3: #{pyramid_features.1} parent=1 // loop_header
      %s30 = sphi 0, %s34
      %p31 = scmp.ge.s32.totalorder %s30, 4
      %s40 = sphi 0, %s42
      %s43 = sphi 0, %s40
      %s44 = sphi 0, %s43
      %s60 = sphi 0, %s44
      %s66 = sphi 0, %s68
      %s69 = sphi 0, %s66
      %s70 = sphi 0, %s69
      %s86 = sphi 0, %s70
      %s92 = sphi 0, %s94
      %s95 = sphi 0, %s92
      %s96 = sphi 0, %s95
      %s112 = sphi 0, %s96
      %s118 = sphi 0, %s120
      %s121 = sphi 0, %s118
      %s122 = sphi 0, %s121
      %s138 = sphi 0, %s122
      %s142 = sphi 0, %s142
      %s144 = sphi 0, %s142
      %s145 = sphi 0, %s144
      %s159 = sphi 0, %s145
      %s163 = sphi 0, %s163
      %s165 = sphi 0, %s163
      %s166 = sphi 0, %s165
      %s180 = sphi 0, %s166
      %s184 = sphi 0, %s184
      %s186 = sphi 0, %s184
      %s187 = sphi 0, %s186
      %s201 = sphi 0, %s187
      %s205 = sphi 0, %s205
      %s207 = sphi 0, %s205
      %s208 = sphi 0, %s207
      %s222 = sphi 0, %s208
      %s226 = sphi 0, %s226
      %s228 = sphi 0, %s226
      %s229 = sphi 0, %s228
      %s243 = sphi 0, %s229
      %s247 = sphi 0, %s247
      %s249 = sphi 0, %s247
      %s250 = sphi 0, %s249
      %s264 = sphi 0, %s250
      %s268 = sphi 0, %s268
      %s270 = sphi 0, %s268
      %s271 = sphi 0, %s270
      %s285 = sphi 0, %s271
      %s289 = sphi 0, %s289
      %s291 = sphi 0, %s289
      %s292 = sphi 0, %s291
      %s306 = sphi 0, %s292
      %s310 = sphi 0, %s310
      %s312 = sphi 0, %s310
      %s313 = sphi 0, %s312
      %s327 = sphi 0, %s313
      %s333 = sphi 0, %s335
      %s336 = sphi 0, %s333
      %s337 = sphi 0, %s336
      %s353 = sphi 0, %s337
      %s359 = sphi 0, %s361
      %s362 = sphi 0, %s359
      %s363 = sphi 0, %s362
      %s379 = sphi 0, %s363
      %s385 = sphi 0, %s387
      %s388 = sphi 0, %s385
      %s389 = sphi 0, %s388
      %s405 = sphi 0, %s389
      %s411 = sphi 0, %s413
      %s414 = sphi 0, %s411
      %s415 = sphi 0, %s414
      %s431 = sphi 0, %s415
      %s437 = sphi 0, %s439
      %s440 = sphi 0, %s437
      %s441 = sphi 0, %s440
      %s457 = sphi 0, %s441
    $region4: #{pyramid_features.1} parent=1 // loop_header_branch
      %33 = sbr.rel (%p31) target = $region8
    $region5: #{pyramid_features.1} parent=1 // loop_body
      %s35 = ssub.s32 %s30, 1
      %s36 = ssub.s32 %s30, 2
      %s37 = sadd.s32 %s30, 1
      %s38 = ssub.s32 %s30, %s37
      %p39 = scmp.eq.s32.totalorder %s38, 0
      %s41 = sadd.s32 %s40, 1
      %s42 = scalar_select %p39, %s40, %s41
      %p45 = pneg %p39
      %p46 = scmp.eq.s32.totalorder %s30, 1
      %p47 = por %p45, %p46
      %p48 = scmp.ne.s32.totalorder %s40, %s43
      %p49 = scmp.eq.s32.totalorder %s30, 0
      %p50 = por %p48, %p49
      %p51 = scmp.ne.s32.totalorder %s40, %s43
      %p52 = scmp.eq.s32.totalorder %s35, 1
      %p53 = por %p51, %p52
      %p54 = scmp.ne.s32.totalorder %s43, %s44
      %p55 = scmp.eq.s32.totalorder %s35, 0
      %p56 = por %p54, %p55
      %p57 = scmp.ne.s32.totalorder %s43, %s44
      %p58 = scmp.eq.s32.totalorder %s36, 1
      %p59 = por %p57, %p58
      %p61 = scmp.ne.s32.totalorder %s44, %s60
      %p62 = scmp.eq.s32.totalorder %s36, 0
      %p63 = por %p61, %p62
      %s64 = ssub.s32 %s30, %s37
      %p65 = scmp.eq.s32.totalorder %s64, 0
      %s67 = sadd.s32 %s66, 1
      %s68 = scalar_select %p65, %s66, %s67
      %p71 = pneg %p65
      %p72 = scmp.eq.s32.totalorder %s30, 1
      %p73 = por %p71, %p72
      %p74 = scmp.ne.s32.totalorder %s66, %s69
      %p75 = scmp.eq.s32.totalorder %s30, 0
      %p76 = por %p74, %p75
      %p77 = scmp.ne.s32.totalorder %s66, %s69
      %p78 = scmp.eq.s32.totalorder %s35, 1
      %p79 = por %p77, %p78
      %p80 = scmp.ne.s32.totalorder %s69, %s70
      %p81 = scmp.eq.s32.totalorder %s35, 0
      %p82 = por %p80, %p81
      %p83 = scmp.ne.s32.totalorder %s69, %s70
      %p84 = scmp.eq.s32.totalorder %s36, 1
      %p85 = por %p83, %p84
      %p87 = scmp.ne.s32.totalorder %s70, %s86
      %p88 = scmp.eq.s32.totalorder %s36, 0
      %p89 = por %p87, %p88
      %s90 = ssub.s32 %s30, %s37
      %p91 = scmp.eq.s32.totalorder %s90, 0
      %s93 = sadd.s32 %s92, 1
      %s94 = scalar_select %p91, %s92, %s93
      %p97 = pneg %p91
      %p98 = scmp.eq.s32.totalorder %s30, 1
      %p99 = por %p97, %p98
      %p100 = scmp.ne.s32.totalorder %s92, %s95
      %p101 = scmp.eq.s32.totalorder %s30, 0
      %p102 = por %p100, %p101
      %p103 = scmp.ne.s32.totalorder %s92, %s95
      %p104 = scmp.eq.s32.totalorder %s35, 1
      %p105 = por %p103, %p104
      %p106 = scmp.ne.s32.totalorder %s95, %s96
      %p107 = scmp.eq.s32.totalorder %s35, 0
      %p108 = por %p106, %p107
      %p109 = scmp.ne.s32.totalorder %s95, %s96
      %p110 = scmp.eq.s32.totalorder %s36, 1
      %p111 = por %p109, %p110
      %p113 = scmp.ne.s32.totalorder %s96, %s112
      %p114 = scmp.eq.s32.totalorder %s36, 0
      %p115 = por %p113, %p114
      %s116 = ssub.s32 %s30, %s37
      %p117 = scmp.eq.s32.totalorder %s116, 0
      %s119 = sadd.s32 %s118, 1
      %s120 = scalar_select %p117, %s118, %s119
      %p123 = pneg %p117
      %p124 = scmp.eq.s32.totalorder %s30, 1
      %p125 = por %p123, %p124
      %p126 = scmp.ne.s32.totalorder %s118, %s121
      %p127 = scmp.eq.s32.totalorder %s30, 0
      %p128 = por %p126, %p127
      %p129 = scmp.ne.s32.totalorder %s118, %s121
      %p130 = scmp.eq.s32.totalorder %s35, 1
      %p131 = por %p129, %p130
      %p132 = scmp.ne.s32.totalorder %s121, %s122
      %p133 = scmp.eq.s32.totalorder %s35, 0
      %p134 = por %p132, %p133
      %p135 = scmp.ne.s32.totalorder %s121, %s122
      %p136 = scmp.eq.s32.totalorder %s36, 1
      %p137 = por %p135, %p136
      %p139 = scmp.ne.s32.totalorder %s122, %s138
      %p140 = scmp.eq.s32.totalorder %s36, 0
      %p141 = por %p139, %p140
      %s143 = sadd.s32 %s142, 1
      %p146 = scmp.eq.s32.totalorder %s30, 1
      %p147 = scmp.ne.s32.totalorder %s142, %s144
      %p148 = scmp.eq.s32.totalorder %s30, 0
      %p149 = por %p147, %p148
      %p150 = scmp.ne.s32.totalorder %s142, %s144
      %p151 = scmp.eq.s32.totalorder %s35, 1
      %p152 = por %p150, %p151
      %p153 = scmp.ne.s32.totalorder %s144, %s145
      %p154 = scmp.eq.s32.totalorder %s35, 0
      %p155 = por %p153, %p154
      %p156 = scmp.ne.s32.totalorder %s144, %s145
      %p157 = scmp.eq.s32.totalorder %s36, 1
      %p158 = por %p156, %p157
      %p160 = scmp.ne.s32.totalorder %s145, %s159
      %p161 = scmp.eq.s32.totalorder %s36, 0
      %p162 = por %p160, %p161
      %s164 = sadd.s32 %s163, 1
      %p167 = scmp.eq.s32.totalorder %s30, 1
      %p168 = scmp.ne.s32.totalorder %s163, %s165
      %p169 = scmp.eq.s32.totalorder %s30, 0
      %p170 = por %p168, %p169
      %p171 = scmp.ne.s32.totalorder %s163, %s165
      %p172 = scmp.eq.s32.totalorder %s35, 1
      %p173 = por %p171, %p172
      %p174 = scmp.ne.s32.totalorder %s165, %s166
      %p175 = scmp.eq.s32.totalorder %s35, 0
      %p176 = por %p174, %p175
      %p177 = scmp.ne.s32.totalorder %s165, %s166
      %p178 = scmp.eq.s32.totalorder %s36, 1
      %p179 = por %p177, %p178
      %p181 = scmp.ne.s32.totalorder %s166, %s180
      %p182 = scmp.eq.s32.totalorder %s36, 0
      %p183 = por %p181, %p182
      %s185 = sadd.s32 %s184, 1
      %p188 = scmp.eq.s32.totalorder %s30, 1
      %p189 = scmp.ne.s32.totalorder %s184, %s186
      %p190 = scmp.eq.s32.totalorder %s30, 0
      %p191 = por %p189, %p190
      %p192 = scmp.ne.s32.totalorder %s184, %s186
      %p193 = scmp.eq.s32.totalorder %s35, 1
      %p194 = por %p192, %p193
      %p195 = scmp.ne.s32.totalorder %s186, %s187
      %p196 = scmp.eq.s32.totalorder %s35, 0
      %p197 = por %p195, %p196
      %p198 = scmp.ne.s32.totalorder %s186, %s187
      %p199 = scmp.eq.s32.totalorder %s36, 1
      %p200 = por %p198, %p199
      %p202 = scmp.ne.s32.totalorder %s187, %s201
      %p203 = scmp.eq.s32.totalorder %s36, 0
      %p204 = por %p202, %p203
      %s206 = sadd.s32 %s205, 1
      %p209 = scmp.eq.s32.totalorder %s30, 1
      %p210 = scmp.ne.s32.totalorder %s205, %s207
      %p211 = scmp.eq.s32.totalorder %s30, 0
      %p212 = por %p210, %p211
      %p213 = scmp.ne.s32.totalorder %s205, %s207
      %p214 = scmp.eq.s32.totalorder %s35, 1
      %p215 = por %p213, %p214
      %p216 = scmp.ne.s32.totalorder %s207, %s208
      %p217 = scmp.eq.s32.totalorder %s35, 0
      %p218 = por %p216, %p217
      %p219 = scmp.ne.s32.totalorder %s207, %s208
      %p220 = scmp.eq.s32.totalorder %s36, 1
      %p221 = por %p219, %p220
      %p223 = scmp.ne.s32.totalorder %s208, %s222
      %p224 = scmp.eq.s32.totalorder %s36, 0
      %p225 = por %p223, %p224
      %s227 = sadd.s32 %s226, 1
      %p230 = scmp.eq.s32.totalorder %s30, 1
      %p231 = scmp.ne.s32.totalorder %s226, %s228
      %p232 = scmp.eq.s32.totalorder %s30, 0
      %p233 = por %p231, %p232
      %p234 = scmp.ne.s32.totalorder %s226, %s228
      %p235 = scmp.eq.s32.totalorder %s35, 1
      %p236 = por %p234, %p235
      %p237 = scmp.ne.s32.totalorder %s228, %s229
      %p238 = scmp.eq.s32.totalorder %s35, 0
      %p239 = por %p237, %p238
      %p240 = scmp.ne.s32.totalorder %s228, %s229
      %p241 = scmp.eq.s32.totalorder %s36, 1
      %p242 = por %p240, %p241
      %p244 = scmp.ne.s32.totalorder %s229, %s243
      %p245 = scmp.eq.s32.totalorder %s36, 0
      %p246 = por %p244, %p245
      %s248 = sadd.s32 %s247, 1
      %p251 = scmp.eq.s32.totalorder %s30, 1
      %p252 = scmp.ne.s32.totalorder %s247, %s249
      %p253 = scmp.eq.s32.totalorder %s30, 0
      %p254 = por %p252, %p253
      %p255 = scmp.ne.s32.totalorder %s247, %s249
      %p256 = scmp.eq.s32.totalorder %s35, 1
      %p257 = por %p255, %p256
      %p258 = scmp.ne.s32.totalorder %s249, %s250
      %p259 = scmp.eq.s32.totalorder %s35, 0
      %p260 = por %p258, %p259
      %p261 = scmp.ne.s32.totalorder %s249, %s250
      %p262 = scmp.eq.s32.totalorder %s36, 1
      %p263 = por %p261, %p262
      %p265 = scmp.ne.s32.totalorder %s250, %s264
      %p266 = scmp.eq.s32.totalorder %s36, 0
      %p267 = por %p265, %p266
      %s269 = sadd.s32 %s268, 1
      %p272 = scmp.eq.s32.totalorder %s30, 1
      %p273 = scmp.ne.s32.totalorder %s268, %s270
      %p274 = scmp.eq.s32.totalorder %s30, 0
      %p275 = por %p273, %p274
      %p276 = scmp.ne.s32.totalorder %s268, %s270
      %p277 = scmp.eq.s32.totalorder %s35, 1
      %p278 = por %p276, %p277
      %p279 = scmp.ne.s32.totalorder %s270, %s271
      %p280 = scmp.eq.s32.totalorder %s35, 0
      %p281 = por %p279, %p280
      %p282 = scmp.ne.s32.totalorder %s270, %s271
      %p283 = scmp.eq.s32.totalorder %s36, 1
      %p284 = por %p282, %p283
      %p286 = scmp.ne.s32.totalorder %s271, %s285
      %p287 = scmp.eq.s32.totalorder %s36, 0
      %p288 = por %p286, %p287
      %s290 = sadd.s32 %s289, 1
      %p293 = scmp.eq.s32.totalorder %s30, 1
      %p294 = scmp.ne.s32.totalorder %s289, %s291
      %p295 = scmp.eq.s32.totalorder %s30, 0
      %p296 = por %p294, %p295
      %p297 = scmp.ne.s32.totalorder %s289, %s291
      %p298 = scmp.eq.s32.totalorder %s35, 1
      %p299 = por %p297, %p298
      %p300 = scmp.ne.s32.totalorder %s291, %s292
      %p301 = scmp.eq.s32.totalorder %s35, 0
      %p302 = por %p300, %p301
      %p303 = scmp.ne.s32.totalorder %s291, %s292
      %p304 = scmp.eq.s32.totalorder %s36, 1
      %p305 = por %p303, %p304
      %p307 = scmp.ne.s32.totalorder %s292, %s306
      %p308 = scmp.eq.s32.totalorder %s36, 0
      %p309 = por %p307, %p308
      %s311 = sadd.s32 %s310, 1
      %p314 = scmp.eq.s32.totalorder %s30, 1
      %p315 = scmp.ne.s32.totalorder %s310, %s312
      %p316 = scmp.eq.s32.totalorder %s30, 0
      %p317 = por %p315, %p316
      %p318 = scmp.ne.s32.totalorder %s310, %s312
      %p319 = scmp.eq.s32.totalorder %s35, 1
      %p320 = por %p318, %p319
      %p321 = scmp.ne.s32.totalorder %s312, %s313
      %p322 = scmp.eq.s32.totalorder %s35, 0
      %p323 = por %p321, %p322
      %p324 = scmp.ne.s32.totalorder %s312, %s313
      %p325 = scmp.eq.s32.totalorder %s36, 1
      %p326 = por %p324, %p325
      %p328 = scmp.ne.s32.totalorder %s313, %s327
      %p329 = scmp.eq.s32.totalorder %s36, 0
      %p330 = por %p328, %p329
      %s331 = ssub.s32 %s30, %s37
      %p332 = scmp.eq.s32.totalorder %s331, 0
      %s334 = sadd.s32 %s333, 1
      %s335 = scalar_select %p332, %s333, %s334
      %p338 = pneg %p332
      %p339 = scmp.eq.s32.totalorder %s30, 1
      %p340 = por %p338, %p339
      %p341 = scmp.ne.s32.totalorder %s333, %s336
      %p342 = scmp.eq.s32.totalorder %s30, 0
      %p343 = por %p341, %p342
      %p344 = scmp.ne.s32.totalorder %s333, %s336
      %p345 = scmp.eq.s32.totalorder %s35, 1
      %p346 = por %p344, %p345
      %p347 = scmp.ne.s32.totalorder %s336, %s337
      %p348 = scmp.eq.s32.totalorder %s35, 0
      %p349 = por %p347, %p348
      %p350 = scmp.ne.s32.totalorder %s336, %s337
      %p351 = scmp.eq.s32.totalorder %s36, 1
      %p352 = por %p350, %p351
      %p354 = scmp.ne.s32.totalorder %s337, %s353
      %p355 = scmp.eq.s32.totalorder %s36, 0
      %p356 = por %p354, %p355
      %s357 = ssub.s32 %s30, %s37
      %p358 = scmp.eq.s32.totalorder %s357, 0
      %s360 = sadd.s32 %s359, 1
      %s361 = scalar_select %p358, %s359, %s360
      %p364 = pneg %p358
      %p365 = scmp.eq.s32.totalorder %s30, 1
      %p366 = por %p364, %p365
      %p367 = scmp.ne.s32.totalorder %s359, %s362
      %p368 = scmp.eq.s32.totalorder %s30, 0
      %p369 = por %p367, %p368
      %p370 = scmp.ne.s32.totalorder %s359, %s362
      %p371 = scmp.eq.s32.totalorder %s35, 1
      %p372 = por %p370, %p371
      %p373 = scmp.ne.s32.totalorder %s362, %s363
      %p374 = scmp.eq.s32.totalorder %s35, 0
      %p375 = por %p373, %p374
      %p376 = scmp.ne.s32.totalorder %s362, %s363
      %p377 = scmp.eq.s32.totalorder %s36, 1
      %p378 = por %p376, %p377
      %p380 = scmp.ne.s32.totalorder %s363, %s379
      %p381 = scmp.eq.s32.totalorder %s36, 0
      %p382 = por %p380, %p381
      %s383 = ssub.s32 %s30, %s37
      %p384 = scmp.eq.s32.totalorder %s383, 0
      %s386 = sadd.s32 %s385, 1
      %s387 = scalar_select %p384, %s385, %s386
      %p390 = pneg %p384
      %p391 = scmp.eq.s32.totalorder %s30, 1
      %p392 = por %p390, %p391
      %p393 = scmp.ne.s32.totalorder %s385, %s388
      %p394 = scmp.eq.s32.totalorder %s30, 0
      %p395 = por %p393, %p394
      %p396 = scmp.ne.s32.totalorder %s385, %s388
      %p397 = scmp.eq.s32.totalorder %s35, 1
      %p398 = por %p396, %p397
      %p399 = scmp.ne.s32.totalorder %s388, %s389
      %p400 = scmp.eq.s32.totalorder %s35, 0
      %p401 = por %p399, %p400
      %p402 = scmp.ne.s32.totalorder %s388, %s389
      %p403 = scmp.eq.s32.totalorder %s36, 1
      %p404 = por %p402, %p403
      %p406 = scmp.ne.s32.totalorder %s389, %s405
      %p407 = scmp.eq.s32.totalorder %s36, 0
      %p408 = por %p406, %p407
      %s409 = ssub.s32 %s30, %s37
      %p410 = scmp.eq.s32.totalorder %s409, 0
      %s412 = sadd.s32 %s411, 1
      %s413 = scalar_select %p410, %s411, %s412
      %p416 = pneg %p410
      %p417 = scmp.eq.s32.totalorder %s30, 1
      %p418 = por %p416, %p417
      %p419 = scmp.ne.s32.totalorder %s411, %s414
      %p420 = scmp.eq.s32.totalorder %s30, 0
      %p421 = por %p419, %p420
      %p422 = scmp.ne.s32.totalorder %s411, %s414
      %p423 = scmp.eq.s32.totalorder %s35, 1
      %p424 = por %p422, %p423
      %p425 = scmp.ne.s32.totalorder %s414, %s415
      %p426 = scmp.eq.s32.totalorder %s35, 0
      %p427 = por %p425, %p426
      %p428 = scmp.ne.s32.totalorder %s414, %s415
      %p429 = scmp.eq.s32.totalorder %s36, 1
      %p430 = por %p428, %p429
      %p432 = scmp.ne.s32.totalorder %s415, %s431
      %p433 = scmp.eq.s32.totalorder %s36, 0
      %p434 = por %p432, %p433
      %s435 = ssub.s32 %s30, %s37
      %p436 = scmp.eq.s32.totalorder %s435, 0
      %s438 = sadd.s32 %s437, 1
      %s439 = scalar_select %p436, %s437, %s438
      %p442 = pneg %p436
      %p443 = scmp.eq.s32.totalorder %s30, 1
      %p444 = por %p442, %p443
      %p445 = scmp.ne.s32.totalorder %s437, %s440
      %p446 = scmp.eq.s32.totalorder %s30, 0
      %p447 = por %p445, %p446
      %p448 = scmp.ne.s32.totalorder %s437, %s440
      %p449 = scmp.eq.s32.totalorder %s35, 1
      %p450 = por %p448, %p449
      %p451 = scmp.ne.s32.totalorder %s440, %s441
      %p452 = scmp.eq.s32.totalorder %s35, 0
      %p453 = por %p451, %p452
      %p454 = scmp.ne.s32.totalorder %s440, %s441
      %p455 = scmp.eq.s32.totalorder %s36, 1
      %p456 = por %p454, %p455
      %p458 = scmp.ne.s32.totalorder %s441, %s457
      %p459 = scmp.eq.s32.totalorder %s36, 0
      %p460 = por %p458, %p459
      %p461 = scmp.le.s32.totalorder 1, %s30
      %p462 = scmp.lt.s32.totalorder %s30, 3
      %p463 = pnand %p461, %p462
      %p464 = pneg %p463
      // Predicated region
      $region9: #{pyramid_features.1} parent=5 // pred_check
        _
      $region10: #{pyramid_features.1} parent=5 // pred_check_branch
        %466 = sbr.rel (%p463) target = $region12
      $region11: #{pyramid_features.1} parent=5 // pred_region
        %s467 = ssub.s32 %s30, 1
        // Predicated region
        $region13: #{pyramid_features.1} parent=11 // pred_check
          %p468 = pneg %p155
        $region14: #{pyramid_features.1} parent=11 // pred_check_branch
          %470 = sbr.rel (%p468) target = $region16
        $region15: #{pyramid_features.1} parent=11 // pred_region
          _
        $region16: #{pyramid_features.1} parent=11 // pred_fallthru
          _
        // Predicated region
        $region17: #{pyramid_features.1} parent=11 // pred_check
          %p471 = pneg %p176
        $region18: #{pyramid_features.1} parent=11 // pred_check_branch
          %473 = sbr.rel (%p471) target = $region20
        $region19: #{pyramid_features.1} parent=11 // pred_region
          _
        $region20: #{pyramid_features.1} parent=11 // pred_fallthru
          _
        // Predicated region
        $region21: #{pyramid_features.1} parent=11 // pred_check
          %p474 = pneg %p197
        $region22: #{pyramid_features.1} parent=11 // pred_check_branch
          %476 = sbr.rel (%p474) target = $region24
        $region23: #{pyramid_features.1} parent=11 // pred_region
          _
        $region24: #{pyramid_features.1} parent=11 // pred_fallthru
          _
        // Predicated region
        $region25: #{pyramid_features.1} parent=11 // pred_check
          %p477 = pneg %p218
        $region26: #{pyramid_features.1} parent=11 // pred_check_branch
          %479 = sbr.rel (%p477) target = $region28
        $region27: #{pyramid_features.1} parent=11 // pred_region
          _
        $region28: #{pyramid_features.1} parent=11 // pred_fallthru
          _
        // Predicated region
        $region29: #{pyramid_features.1} parent=11 // pred_check
          %p480 = pneg %p239
        $region30: #{pyramid_features.1} parent=11 // pred_check_branch
          %482 = sbr.rel (%p480) target = $region32
        $region31: #{pyramid_features.1} parent=11 // pred_region
          _
        $region32: #{pyramid_features.1} parent=11 // pred_fallthru
          _
        // Predicated region
        $region33: #{pyramid_features.1} parent=11 // pred_check
          %p483 = pneg %p260
        $region34: #{pyramid_features.1} parent=11 // pred_check_branch
          %485 = sbr.rel (%p483) target = $region36
        $region35: #{pyramid_features.1} parent=11 // pred_region
          _
        $region36: #{pyramid_features.1} parent=11 // pred_fallthru
          _
        // Predicated region
        $region37: #{pyramid_features.1} parent=11 // pred_check
          %p486 = pneg %p281
        $region38: #{pyramid_features.1} parent=11 // pred_check_branch
          %488 = sbr.rel (%p486) target = $region40
        $region39: #{pyramid_features.1} parent=11 // pred_region
          _
        $region40: #{pyramid_features.1} parent=11 // pred_fallthru
          _
        // Predicated region
        $region41: #{pyramid_features.1} parent=11 // pred_check
          %p489 = pneg %p302
        $region42: #{pyramid_features.1} parent=11 // pred_check_branch
          %491 = sbr.rel (%p489) target = $region44
        $region43: #{pyramid_features.1} parent=11 // pred_region
          _
        $region44: #{pyramid_features.1} parent=11 // pred_fallthru
          _
        // Predicated region
        $region45: #{pyramid_features.1} parent=11 // pred_check
          %p492 = pneg %p323
        $region46: #{pyramid_features.1} parent=11 // pred_check_branch
          %494 = sbr.rel (%p492) target = $region48
        $region47: #{pyramid_features.1} parent=11 // pred_region
          _
        $region48: #{pyramid_features.1} parent=11 // pred_fallthru
          _
      $region12: #{pyramid_features.1} parent=5 // pred_fallthru
        _
      %p495 = scmp.lt.s32.totalorder %s30, 2
      // Predicated region
      $region49: #{pyramid_features.1} parent=5 // pred_check
        %p496 = pneg %p495
      $region50: #{pyramid_features.1} parent=5 // pred_check_branch
        %498 = sbr.rel (%p496) target = $region52
      $region51: #{pyramid_features.1} parent=5 // pred_region
        // Predicated region
        $region53: #{pyramid_features.1} parent=51 // pred_check
          %p499 = pneg %p50
        $region54: #{pyramid_features.1} parent=51 // pred_check_branch
          %501 = sbr.rel (%p499) target = $region56
        $region55: #{pyramid_features.1} parent=51 // pred_region
          %p502 = scmp.lt.s32.totalorder %s30, 1
          %s503 = scalar_select %p502, %s30, 1
          %s504 = smul.addr %s503, 8
          %s505 = scalar_lea.vmem %s0, %s504
        $region56: #{pyramid_features.1} parent=51 // pred_fallthru
          _
        // Predicated region
        $region57: #{pyramid_features.1} parent=51 // pred_check
          %p506 = pneg %p76
        $region58: #{pyramid_features.1} parent=51 // pred_check_branch
          %508 = sbr.rel (%p506) target = $region60
        $region59: #{pyramid_features.1} parent=51 // pred_region
          %p509 = scmp.lt.s32.totalorder %s30, 1
          %s510 = scalar_select %p509, %s30, 1
          %s511 = smul.addr %s510, 4
          %s512 = smul.addr %s511, 2
          %s513 = scalar_lea.vmem %s1, %s512
        $region60: #{pyramid_features.1} parent=51 // pred_fallthru
          _
        // Predicated region
        $region61: #{pyramid_features.1} parent=51 // pred_check
          %p514 = pneg %p102
        $region62: #{pyramid_features.1} parent=51 // pred_check_branch
          %516 = sbr.rel (%p514) target = $region64
        $region63: #{pyramid_features.1} parent=51 // pred_region
          %p517 = scmp.lt.s32.totalorder %s30, 1
          %s518 = scalar_select %p517, %s30, 1
          %s519 = smul.addr %s518, 2
          %s520 = smul.addr %s519, 8
          %s521 = scalar_lea.vmem %s2, %s520
        $region64: #{pyramid_features.1} parent=51 // pred_fallthru
          _
        // Predicated region
        $region65: #{pyramid_features.1} parent=51 // pred_check
          %p522 = pneg %p128
        $region66: #{pyramid_features.1} parent=51 // pred_check_branch
          %524 = sbr.rel (%p522) target = $region68
        $region67: #{pyramid_features.1} parent=51 // pred_region
          %p525 = scmp.lt.s32.totalorder %s30, 1
          %s526 = scalar_select %p525, %s30, 1
          %s527 = smul.addr %s526, 4
          %s528 = smul.addr %s527, 8
          %s529 = scalar_lea.vmem %s3, %s528
        $region68: #{pyramid_features.1} parent=51 // pred_fallthru
          _
      $region52: #{pyramid_features.1} parent=5 // pred_fallthru
        _
      %p530 = scmp.le.s32.totalorder 1, %s30
      %p531 = scmp.lt.s32.totalorder %s30, 3
      %p532 = pnand %p530, %p531
      %p533 = pneg %p532
      // Predicated region
      $region69: #{pyramid_features.1} parent=5 // pred_check
        _
      $region70: #{pyramid_features.1} parent=5 // pred_check_branch
        %535 = sbr.rel (%p532) target = $region72
      $region71: #{pyramid_features.1} parent=5 // pred_region
        %s536 = ssub.s32 %s30, 1
        %p537 = scmp.lt.s32.totalorder %s35, 1
        %s538 = scalar_select %p537, %s35, 1
        %s539 = smul.addr %s538, 8
        %s540 = scalar_lea.vmem %s0, %s539
        %p541 = pneg %p56
        %p542 = pneg %p53
        %p543 = scmp.lt.s32.totalorder %s35, 1
        %s544 = scalar_select %p543, %s35, 1
        %s545 = smul.addr %s544, 4
        %s546 = smul.addr %s545, 2
        %s547 = scalar_lea.vmem %s1, %s546
        %p548 = pneg %p82
        %p549 = pneg %p79
        %p550 = scmp.lt.s32.totalorder %s35, 1
        %s551 = scalar_select %p550, %s35, 1
        %s552 = smul.addr %s551, 2
        %s553 = smul.addr %s552, 8
        %s554 = scalar_lea.vmem %s2, %s553
        %p555 = pneg %p108
        %p556 = pneg %p105
        %p557 = scmp.lt.s32.totalorder %s35, 1
        %s558 = scalar_select %p557, %s35, 1
        %s559 = smul.addr %s558, 4
        %s560 = smul.addr %s559, 8
        %s561 = scalar_lea.vmem %s3, %s560
        %p562 = pneg %p134
        %p563 = pneg %p131
        %p564 = pneg %p155
        %p565 = pneg %p152
        %p566 = pneg %p176
        %p567 = pneg %p173
        %p568 = pneg %p197
        %p569 = pneg %p194
        %p570 = pneg %p218
        %p571 = pneg %p215
        %p572 = pneg %p239
        %p573 = pneg %p236
        %p574 = pneg %p260
        %p575 = pneg %p257
        %p576 = pneg %p281
        %p577 = pneg %p278
        %p578 = pneg %p302
        %p579 = pneg %p299
        %p580 = pneg %p323
        %p581 = pneg %p320
        %p582 = pneg %p349
        %p583 = pneg %p346
        %p584 = scmp.lt.s32.totalorder %s35, 1
        %s585 = scalar_select %p584, %s35, 1
        %s586 = smul.addr %s585, 4
        %s587 = smul.addr %s586, 8
        %s588 = scalar_lea.vmem %s13, %s587
        %p589 = pneg %p375
        %p590 = pneg %p372
        %p591 = scmp.lt.s32.totalorder %s35, 1
        %s592 = scalar_select %p591, %s35, 1
        %s593 = smul.addr %s592, 2
        %s594 = smul.addr %s593, 8
        %s595 = scalar_lea.vmem %s14, %s594
        %p596 = pneg %p401
        %p597 = pneg %p398
        %s598 = sand.u32 %s388, 1
        %s599 = scalar_lea.sflag [#allocation3], %s598
        %s600 = sand.u32 %s388, 1
        %s601 = smul.addr %s600, 8
        %s602 = scalar_lea.vmem [#allocation2], %s601
        %p603 = pneg %p427
        %p604 = pneg %p424
        %p605 = scmp.lt.s32.totalorder %s35, 1
        %s606 = scalar_select %p605, %s35, 1
        %s607 = smul.addr %s606, 2
        %s608 = smul.addr %s607, 2
        %s609 = scalar_lea.vmem %s16, %s608
        %p610 = pneg %p453
        %p611 = pneg %p450
        %s612 = sand.u32 %s440, 1
        %s613 = scalar_lea.sflag [#allocation5], %s612
        %s614 = sand.u32 %s440, 1
        %s615 = smul.addr %s614, 2
        %s616 = scalar_lea.vmem [#allocation4], %s615
        %p617 = scmp.lt.s32.totalorder %s35, 1
        %s618 = scalar_select %p617, %s35, 1
        %s619 = smul.addr %s618, 8
        %s620 = scalar_lea.vmem %s0, %s619
        %p621 = scmp.lt.s32.totalorder %s35, 1
        %s622 = scalar_select %p621, %s35, 1
        %s623 = smul.addr %s622, 4
        %s624 = smul.addr %s623, 2
        %s625 = scalar_lea.vmem %s1, %s624
        %p626 = scmp.lt.s32.totalorder %s35, 1
        %s627 = scalar_select %p626, %s35, 1
        %s628 = smul.addr %s627, 2
        %s629 = smul.addr %s628, 8
        %s630 = scalar_lea.vmem %s2, %s629
        %p631 = scmp.lt.s32.totalorder %s35, 1
        %s632 = scalar_select %p631, %s35, 1
        %s633 = smul.addr %s632, 4
        %s634 = smul.addr %s633, 8
        %s635 = scalar_lea.vmem %s3, %s634
        %p636 = scmp.lt.s32.totalorder %s35, 1
        %s637 = scalar_select %p636, %s35, 1
        %s638 = smul.addr %s637, 4
        %s639 = smul.addr %s638, 8
        %s640 = scalar_lea.vmem %s13, %s639
        %p641 = scmp.lt.s32.totalorder %s35, 1
        %s642 = scalar_select %p641, %s35, 1
        %s643 = smul.addr %s642, 2
        %s644 = smul.addr %s643, 8
        %s645 = scalar_lea.vmem %s14, %s644
        %p646 = scmp.lt.s32.totalorder %s35, 1
        %s647 = scalar_select %p646, %s35, 1
        %s648 = smul.addr %s647, 2
        %s649 = smul.addr %s648, 2
        %s650 = scalar_lea.vmem %s16, %s649
        %v652 = vld [vmem:[%s12] sm:$0xff]
        %v653 = vld [vmem:[%s620] sm:$0xff]
        %v654 = vld [vmem:[%s4] sm:$0xf]
        %v655 = vld [vmem:[%s4 + $0x4] sm:$0xf]
        %v656 = vld [vmem:[%s4 + $0x8] sm:$0xf]
        %v657 = vld [vmem:[%s4 + $0xc] sm:$0xf]
        %v658 = vld [vmem:[%s4 + $0x10] sm:$0xf]
        %v659 = vld [vmem:[%s4 + $0x14] sm:$0xf]
        %v660 = vld [vmem:[%s4 + $0x18] sm:$0xf]
        %v661 = vld [vmem:[%s4 + $0x1c] sm:$0xf]
        %v662 = vld [vmem:[%s4 + $0x20] sm:$0xf]
        %v663 = vld [vmem:[%s4 + $0x24] sm:$0xf]
        %v664 = vld [vmem:[%s4 + $0x28] sm:$0xf]
        %v665 = vld [vmem:[%s4 + $0x2c] sm:$0xf]
        %v666 = vld [vmem:[%s4 + $0x30] sm:$0xf]
        %v667 = vld [vmem:[%s4 + $0x34] sm:$0xf]
        %v668 = vld [vmem:[%s4 + $0x38] sm:$0xf]
        %v669 = vld [vmem:[%s4 + $0x3c] sm:$0xf]
        %v670 = vpack.c.bf16 %v653, %v653
        %v671 = vlaneseq
        %v672 = vshrl.u32 %v671, 7
        %v673 = vsub.s32 0, %v672
        %v674 = vrot.slane %v652, %v673
        %v691 = vunpack.c.l.b16 %v654
        %v692 = vunpack.c.l.b16 %v655
        %v693 = vunpack.c.l.b16 %v656
        %v694 = vunpack.c.l.b16 %v657
        %v695 = vunpack.c.l.b16 %v658
        %v696 = vunpack.c.l.b16 %v659
        %v697 = vunpack.c.l.b16 %v660
        %v698 = vunpack.c.l.b16 %v661
        %v699 = vunpack.c.l.b16 %v662
        %v700 = vunpack.c.l.b16 %v663
        %v701 = vunpack.c.l.b16 %v664
        %v702 = vunpack.c.l.b16 %v665
        %v703 = vunpack.c.l.b16 %v666
        %v704 = vunpack.c.l.b16 %v667
        %v705 = vunpack.c.l.b16 %v668
        %v706 = vunpack.c.l.b16 %v669
        %v707 = vpack.c.b16 %v692, %v691
        %v708 = vpack.c.b16 %v694, %v693
        %v709 = vpack.c.b16 %v696, %v695
        %v710 = vpack.c.b16 %v698, %v697
        %v711 = vpack.c.b16 %v700, %v699
        %v712 = vpack.c.b16 %v702, %v701
        %v713 = vpack.c.b16 %v704, %v703
        %v714 = vpack.c.b16 %v706, %v705
        %723 = vmatprep.subr.bf16.mxu0 0
        %724 = vmatpush1.bf16.msra.mxu0 %v707
        %725 = vmatprep.subr.bf16.mxu0 0
        %726 = vmatpush1.bf16.msra.mxu0 %v708
        %727 = vmatprep.subr.bf16.mxu0 0
        %728 = vmatpush1.bf16.msra.mxu0 %v709
        %729 = vmatprep.subr.bf16.mxu0 0
        %730 = vmatpush1.bf16.msra.mxu0 %v710
        %731 = vmatprep.subr.bf16.mxu0 0
        %732 = vmatpush1.bf16.msra.mxu0 %v711
        %733 = vmatprep.subr.bf16.mxu0 0
        %734 = vmatpush1.bf16.msra.mxu0 %v712
        %735 = vmatprep.subr.bf16.mxu0 0
        %736 = vmatpush1.bf16.msra.mxu0 %v713
        %737 = vmatprep.subr.bf16.mxu0 0
        %738 = vmatpush1.bf16.msra.mxu0 %v714
        %739 = vmatprep.subr.bf16.mxu0 0
        %740 = vmatpush1.bf16.msra.mxu0 0
        %741 = vmatprep.subr.bf16.mxu0 0
        %742 = vmatpush1.bf16.msra.mxu0 0
        %743 = vmatprep.subr.bf16.mxu0 0
        %744 = vmatpush1.bf16.msra.mxu0 0
        %745 = vmatprep.subr.bf16.mxu0 0
        %746 = vmatpush1.bf16.msra.mxu0 0
        %747 = vmatprep.subr.bf16.mxu0 0
        %748 = vmatpush1.bf16.msra.mxu0 0
        %749 = vmatprep.subr.bf16.mxu0 0
        %750 = vmatpush1.bf16.msra.mxu0 0
        %751 = vmatprep.subr.bf16.mxu0 0
        %752 = vmatpush1.bf16.msra.mxu0 0
        %753 = vmatprep.subr.bf16.mxu0 0
        %754 = vmatpush1.bf16.msra.mxu0 0
        %755 = vmatprep.mubr.bf16.mxu0 0
        %756 = vmatmul.mubr.bf16.gmra.mrb[0].mxu0 %v670
        %v757 = vpop.f32.mrb[0].mxu0
        %v758 = vadd.f32 %v674, %v757
        %v759 = vpop.f32.mrb[0].mxu0
        %v760 = vpop.f32.mrb[0].mxu0
        %v761 = vpop.f32.mrb[0].mxu0
        %762 = vdwg.mxu0
        %v763 = vrot.slane %v758, 7
        %v764 = vlaneseq
        %v765 = vshrl.u32 %v764, 7
        %vm766 = vcmp.eq.s32.totalorder %v765, 0
        %v767 = vsel %vm766, 0.0, %v763
        %v768 = vld [vmem:[%s7] sm:$0xf]
        %v769 = vld [vmem:[%s7 + $0x4] sm:$0xf]
        %v770 = vld [vmem:[%s7 + $0x8] sm:$0xf]
        %v771 = vld [vmem:[%s7 + $0xc] sm:$0xf]
        %v772 = vld [vmem:[%s7 + $0x10] sm:$0xf]
        %v773 = vld [vmem:[%s7 + $0x14] sm:$0xf]
        %v774 = vld [vmem:[%s7 + $0x18] sm:$0xf]
        %v775 = vld [vmem:[%s7 + $0x1c] sm:$0xf]
        %v776 = vld [vmem:[%s7 + $0x20] sm:$0xf]
        %v777 = vld [vmem:[%s7 + $0x24] sm:$0xf]
        %v778 = vld [vmem:[%s7 + $0x28] sm:$0xf]
        %v779 = vld [vmem:[%s7 + $0x2c] sm:$0xf]
        %v780 = vld [vmem:[%s7 + $0x30] sm:$0xf]
        %v781 = vld [vmem:[%s7 + $0x34] sm:$0xf]
        %v782 = vld [vmem:[%s7 + $0x38] sm:$0xf]
        %v783 = vld [vmem:[%s7 + $0x3c] sm:$0xf]
        %v784 = vpack.c.bf16 %v767, %v767
        %s785 = scalar_lea.vmem %s7, 64
        %v786 = vld [vmem:[%s785] sm:$0xf]
        %v787 = vld [vmem:[%s785 + $0x4] sm:$0xf]
        %v788 = vld [vmem:[%s785 + $0x8] sm:$0xf]
        %v789 = vld [vmem:[%s785 + $0xc] sm:$0xf]
        %v790 = vld [vmem:[%s785 + $0x10] sm:$0xf]
        %v791 = vld [vmem:[%s785 + $0x14] sm:$0xf]
        %v792 = vld [vmem:[%s785 + $0x18] sm:$0xf]
        %v793 = vld [vmem:[%s785 + $0x1c] sm:$0xf]
        %v794 = vld [vmem:[%s785 + $0x20] sm:$0xf]
        %v795 = vld [vmem:[%s785 + $0x24] sm:$0xf]
        %v796 = vld [vmem:[%s785 + $0x28] sm:$0xf]
        %v797 = vld [vmem:[%s785 + $0x2c] sm:$0xf]
        %v798 = vld [vmem:[%s785 + $0x30] sm:$0xf]
        %v799 = vld [vmem:[%s785 + $0x34] sm:$0xf]
        %v800 = vld [vmem:[%s785 + $0x38] sm:$0xf]
        %v801 = vld [vmem:[%s785 + $0x3c] sm:$0xf]
        %v802 = vpack.c.bf16 %v758, %v758
        %v819 = vunpack.c.l.b16 %v786
        %v820 = vunpack.c.l.b16 %v787
        %v821 = vunpack.c.l.b16 %v788
        %v822 = vunpack.c.l.b16 %v789
        %v823 = vunpack.c.l.b16 %v790
        %v824 = vunpack.c.l.b16 %v791
        %v825 = vunpack.c.l.b16 %v792
        %v826 = vunpack.c.l.b16 %v793
        %v827 = vunpack.c.l.b16 %v794
        %v828 = vunpack.c.l.b16 %v795
        %v829 = vunpack.c.l.b16 %v796
        %v830 = vunpack.c.l.b16 %v797
        %v831 = vunpack.c.l.b16 %v798
        %v832 = vunpack.c.l.b16 %v799
        %v833 = vunpack.c.l.b16 %v800
        %v834 = vunpack.c.l.b16 %v801
        %v835 = vpack.c.b16 %v820, %v819
        %v836 = vpack.c.b16 %v822, %v821
        %v837 = vpack.c.b16 %v824, %v823
        %v838 = vpack.c.b16 %v826, %v825
        %v839 = vpack.c.b16 %v828, %v827
        %v840 = vpack.c.b16 %v830, %v829
        %v841 = vpack.c.b16 %v832, %v831
        %v842 = vpack.c.b16 %v834, %v833
        %851 = vmatprep.subr.bf16.mxu0 0
        %852 = vmatpush1.bf16.msra.mxu0 %v835
        %853 = vmatprep.subr.bf16.mxu0 0
        %854 = vmatpush1.bf16.msra.mxu0 %v836
        %855 = vmatprep.subr.bf16.mxu0 0
        %856 = vmatpush1.bf16.msra.mxu0 %v837
        %857 = vmatprep.subr.bf16.mxu0 0
        %858 = vmatpush1.bf16.msra.mxu0 %v838
        %859 = vmatprep.subr.bf16.mxu0 0
        %860 = vmatpush1.bf16.msra.mxu0 %v839
        %861 = vmatprep.subr.bf16.mxu0 0
        %862 = vmatpush1.bf16.msra.mxu0 %v840
        %863 = vmatprep.subr.bf16.mxu0 0
        %864 = vmatpush1.bf16.msra.mxu0 %v841
        %865 = vmatprep.subr.bf16.mxu0 0
        %866 = vmatpush1.bf16.msra.mxu0 %v842
        %867 = vmatprep.subr.bf16.mxu0 0
        %868 = vmatpush1.bf16.msra.mxu0 0
        %869 = vmatprep.subr.bf16.mxu0 0
        %870 = vmatpush1.bf16.msra.mxu0 0
        %871 = vmatprep.subr.bf16.mxu0 0
        %872 = vmatpush1.bf16.msra.mxu0 0
        %873 = vmatprep.subr.bf16.mxu0 0
        %874 = vmatpush1.bf16.msra.mxu0 0
        %875 = vmatprep.subr.bf16.mxu0 0
        %876 = vmatpush1.bf16.msra.mxu0 0
        %877 = vmatprep.subr.bf16.mxu0 0
        %878 = vmatpush1.bf16.msra.mxu0 0
        %879 = vmatprep.subr.bf16.mxu0 0
        %880 = vmatpush1.bf16.msra.mxu0 0
        %881 = vmatprep.subr.bf16.mxu0 0
        %882 = vmatpush1.bf16.msra.mxu0 0
        %883 = vmatprep.mubr.bf16.mxu0 0
        %884 = vmatmul.mubr.bf16.gmra.mrb[0].mxu0 %v802
        %v885 = vpop.f32.mrb[0].mxu0
        %v886 = vadd.f32 0.0, %v885
        %v887 = vpop.f32.mrb[0].mxu0
        %v888 = vpop.f32.mrb[0].mxu0
        %v889 = vpop.f32.mrb[0].mxu0
        %890 = vdwg.mxu0
        %v907 = vunpack.c.l.b16 %v768
        %v908 = vunpack.c.l.b16 %v769
        %v909 = vunpack.c.l.b16 %v770
        %v910 = vunpack.c.l.b16 %v771
        %v911 = vunpack.c.l.b16 %v772
        %v912 = vunpack.c.l.b16 %v773
        %v913 = vunpack.c.l.b16 %v774
        %v914 = vunpack.c.l.b16 %v775
        %v915 = vunpack.c.l.b16 %v776
        %v916 = vunpack.c.l.b16 %v777
        %v917 = vunpack.c.l.b16 %v778
        %v918 = vunpack.c.l.b16 %v779
        %v919 = vunpack.c.l.b16 %v780
        %v920 = vunpack.c.l.b16 %v781
        %v921 = vunpack.c.l.b16 %v782
        %v922 = vunpack.c.l.b16 %v783
        %v923 = vpack.c.b16 %v908, %v907
        %v924 = vpack.c.b16 %v910, %v909
        %v925 = vpack.c.b16 %v912, %v911
        %v926 = vpack.c.b16 %v914, %v913
        %v927 = vpack.c.b16 %v916, %v915
        %v928 = vpack.c.b16 %v918, %v917
        %v929 = vpack.c.b16 %v920, %v919
        %v930 = vpack.c.b16 %v922, %v921
        %939 = vmatprep.subr.bf16.mxu0 0
        %940 = vmatpush1.bf16.msra.mxu0 %v923
        %941 = vmatprep.subr.bf16.mxu0 0
        %942 = vmatpush1.bf16.msra.mxu0 %v924
        %943 = vmatprep.subr.bf16.mxu0 0
        %944 = vmatpush1.bf16.msra.mxu0 %v925
        %945 = vmatprep.subr.bf16.mxu0 0
        %946 = vmatpush1.bf16.msra.mxu0 %v926
        %947 = vmatprep.subr.bf16.mxu0 0
        %948 = vmatpush1.bf16.msra.mxu0 %v927
        %949 = vmatprep.subr.bf16.mxu0 0
        %950 = vmatpush1.bf16.msra.mxu0 %v928
        %951 = vmatprep.subr.bf16.mxu0 0
        %952 = vmatpush1.bf16.msra.mxu0 %v929
        %953 = vmatprep.subr.bf16.mxu0 0
        %954 = vmatpush1.bf16.msra.mxu0 %v930
        %955 = vmatprep.subr.bf16.mxu0 0
        %956 = vmatpush1.bf16.msra.mxu0 0
        %957 = vmatprep.subr.bf16.mxu0 0
        %958 = vmatpush1.bf16.msra.mxu0 0
        %959 = vmatprep.subr.bf16.mxu0 0
        %960 = vmatpush1.bf16.msra.mxu0 0
        %961 = vmatprep.subr.bf16.mxu0 0
        %962 = vmatpush1.bf16.msra.mxu0 0
        %963 = vmatprep.subr.bf16.mxu0 0
        %964 = vmatpush1.bf16.msra.mxu0 0
        %965 = vmatprep.subr.bf16.mxu0 0
        %966 = vmatpush1.bf16.msra.mxu0 0
        %967 = vmatprep.subr.bf16.mxu0 0
        %968 = vmatpush1.bf16.msra.mxu0 0
        %969 = vmatprep.subr.bf16.mxu0 0
        %970 = vmatpush1.bf16.msra.mxu0 0
        %971 = vmatprep.mubr.bf16.mxu0 0
        %972 = vmatmul.mubr.bf16.gmra.mrb[0].mxu0 %v784
        %v973 = vpop.f32.mrb[0].mxu0
        %v974 = vadd.f32 %v886, %v973
        %v975 = vpop.f32.mrb[0].mxu0
        %v976 = vpop.f32.mrb[0].mxu0
        %v977 = vpop.f32.mrb[0].mxu0
        %978 = vdwg.mxu0
        %v979 = vrot.slane %v758, 1
        %vm980 = vcmp.eq.s32.totalorder %v765, 7
        %v981 = vsel %vm980, 0.0, %v979
        %s982 = scalar_lea.vmem %s7, 128
        %v983 = vld [vmem:[%s982] sm:$0xf]
        %v984 = vld [vmem:[%s982 + $0x4] sm:$0xf]
        %v985 = vld [vmem:[%s982 + $0x8] sm:$0xf]
        %v986 = vld [vmem:[%s982 + $0xc] sm:$0xf]
        %v987 = vld [vmem:[%s982 + $0x10] sm:$0xf]
        %v988 = vld [vmem:[%s982 + $0x14] sm:$0xf]
        %v989 = vld [vmem:[%s982 + $0x18] sm:$0xf]
        %v990 = vld [vmem:[%s982 + $0x1c] sm:$0xf]
        %v991 = vld [vmem:[%s982 + $0x20] sm:$0xf]
        %v992 = vld [vmem:[%s982 + $0x24] sm:$0xf]
        %v993 = vld [vmem:[%s982 + $0x28] sm:$0xf]
        %v994 = vld [vmem:[%s982 + $0x2c] sm:$0xf]
        %v995 = vld [vmem:[%s982 + $0x30] sm:$0xf]
        %v996 = vld [vmem:[%s982 + $0x34] sm:$0xf]
        %v997 = vld [vmem:[%s982 + $0x38] sm:$0xf]
        %v998 = vld [vmem:[%s982 + $0x3c] sm:$0xf]
        %v999 = vpack.c.bf16 %v981, %v981
        %v1016 = vunpack.c.l.b16 %v983
        %v1017 = vunpack.c.l.b16 %v984
        %v1018 = vunpack.c.l.b16 %v985
        %v1019 = vunpack.c.l.b16 %v986
        %v1020 = vunpack.c.l.b16 %v987
        %v1021 = vunpack.c.l.b16 %v988
        %v1022 = vunpack.c.l.b16 %v989
        %v1023 = vunpack.c.l.b16 %v990
        %v1024 = vunpack.c.l.b16 %v991
        %v1025 = vunpack.c.l.b16 %v992
        %v1026 = vunpack.c.l.b16 %v993
        %v1027 = vunpack.c.l.b16 %v994
        %v1028 = vunpack.c.l.b16 %v995
        %v1029 = vunpack.c.l.b16 %v996
        %v1030 = vunpack.c.l.b16 %v997
        %v1031 = vunpack.c.l.b16 %v998
        %v1032 = vpack.c.b16 %v1017, %v1016
        %v1033 = vpack.c.b16 %v1019, %v1018
        %v1034 = vpack.c.b16 %v1021, %v1020
        %v1035 = vpack.c.b16 %v1023, %v1022
        %v1036 = vpack.c.b16 %v1025, %v1024
        %v1037 = vpack.c.b16 %v1027, %v1026
        %v1038 = vpack.c.b16 %v1029, %v1028
        %v1039 = vpack.c.b16 %v1031, %v1030
        %1048 = vmatprep.subr.bf16.mxu0 0
        %1049 = vmatpush1.bf16.msra.mxu0 %v1032
        %1050 = vmatprep.subr.bf16.mxu0 0
        %1051 = vmatpush1.bf16.msra.mxu0 %v1033
        %1052 = vmatprep.subr.bf16.mxu0 0
        %1053 = vmatpush1.bf16.msra.mxu0 %v1034
        %1054 = vmatprep.subr.bf16.mxu0 0
        %1055 = vmatpush1.bf16.msra.mxu0 %v1035
        %1056 = vmatprep.subr.bf16.mxu0 0
        %1057 = vmatpush1.bf16.msra.mxu0 %v1036
        %1058 = vmatprep.subr.bf16.mxu0 0
        %1059 = vmatpush1.bf16.msra.mxu0 %v1037
        %1060 = vmatprep.subr.bf16.mxu0 0
        %1061 = vmatpush1.bf16.msra.mxu0 %v1038
        %1062 = vmatprep.subr.bf16.mxu0 0
        %1063 = vmatpush1.bf16.msra.mxu0 %v1039
        %1064 = vmatprep.subr.bf16.mxu0 0
        %1065 = vmatpush1.bf16.msra.mxu0 0
        %1066 = vmatprep.subr.bf16.mxu0 0
        %1067 = vmatpush1.bf16.msra.mxu0 0
        %1068 = vmatprep.subr.bf16.mxu0 0
        %1069 = vmatpush1.bf16.msra.mxu0 0
        %1070 = vmatprep.subr.bf16.mxu0 0
        %1071 = vmatpush1.bf16.msra.mxu0 0
        %1072 = vmatprep.subr.bf16.mxu0 0
        %1073 = vmatpush1.bf16.msra.mxu0 0
        %1074 = vmatprep.subr.bf16.mxu0 0
        %1075 = vmatpush1.bf16.msra.mxu0 0
        %1076 = vmatprep.subr.bf16.mxu0 0
        %1077 = vmatpush1.bf16.msra.mxu0 0
        %1078 = vmatprep.subr.bf16.mxu0 0
        %1079 = vmatpush1.bf16.msra.mxu0 0
        %1080 = vmatprep.mubr.bf16.mxu0 0
        %1081 = vmatmul.mubr.bf16.gmra.mrb[0].mxu0 %v999
        %v1082 = vpop.f32.mrb[0].mxu0
        %v1083 = vadd.f32 0.0, %v1082
        %v1084 = vpop.f32.mrb[0].mxu0
        %v1085 = vpop.f32.mrb[0].mxu0
        %v1086 = vpop.f32.mrb[0].mxu0
        %1087 = vdwg.mxu0
        %v1088 = vadd.f32 %v974, %v1083
        %v1089 = vlaneseq
        %v1090 = vshrl.u32 %v1089, 7
        %v1091 = vsub.s32 1, %v1090
        %v1092 = vrot.slane %v652, %v1091
        %v1093 = vadd.f32 %v1088, %v1092
        %1094 = vst [vmem:[%s602] sm:$0xff] %v1093
        %v1095 = vld [vmem:[%s625] sm:$0x3]
        %s1096 = scalar_lea.vmem %s625, 2
        %v1097 = vld [vmem:[%s1096] sm:$0x3]
        %s1098 = scalar_lea.vmem %s625, 4
        %v1099 = vld [vmem:[%s1098] sm:$0x3]
        %s1100 = scalar_lea.vmem %s625, 6
        %v1101 = vld [vmem:[%s1100] sm:$0x3]
        %vm1102 = vcmask 1047554
        %v1103 = vrot.slane %v1101, 6
        %v1104 = vsel %vm1102, %v1103, %v1101
        %v1105 = vrot.slane %v1104, 6
        %v1106 = vsel %vm1102, %v1105, %v1101
        %v1108 = vrot.slane %v1106, 1
        %v1110 = vsel %vm766, 0.0, %v1108
        %v1111 = vld [vmem:[%s10] sm:$0xf]
        %v1112 = vld [vmem:[%s10 + $0x4] sm:$0xf]
        %v1113 = vld [vmem:[%s10 + $0x8] sm:$0xf]
        %v1114 = vld [vmem:[%s10 + $0xc] sm:$0xf]
        %v1115 = vld [vmem:[%s10 + $0x10] sm:$0xf]
        %v1116 = vld [vmem:[%s10 + $0x14] sm:$0xf]
        %v1117 = vld [vmem:[%s10 + $0x18] sm:$0xf]
        %v1118 = vld [vmem:[%s10 + $0x1c] sm:$0xf]
        %v1119 = vld [vmem:[%s10 + $0x20] sm:$0xf]
        %v1120 = vld [vmem:[%s10 + $0x24] sm:$0xf]
        %v1121 = vld [vmem:[%s10 + $0x28] sm:$0xf]
        %v1122 = vld [vmem:[%s10 + $0x2c] sm:$0xf]
        %v1123 = vld [vmem:[%s10 + $0x30] sm:$0xf]
        %v1124 = vld [vmem:[%s10 + $0x34] sm:$0xf]
        %v1125 = vld [vmem:[%s10 + $0x38] sm:$0xf]
        %v1126 = vld [vmem:[%s10 + $0x3c] sm:$0xf]
        %v1127 = vpack.c.bf16 %v1110, %v1110
        %s1128 = scalar_lea.vmem %s10, 64
        %v1129 = vld [vmem:[%s1128] sm:$0xf]
        %v1130 = vld [vmem:[%s1128 + $0x4] sm:$0xf]
        %v1131 = vld [vmem:[%s1128 + $0x8] sm:$0xf]
        %v1132 = vld [vmem:[%s1128 + $0xc] sm:$0xf]
        %v1133 = vld [vmem:[%s1128 + $0x10] sm:$0xf]
        %v1134 = vld [vmem:[%s1128 + $0x14] sm:$0xf]
        %v1135 = vld [vmem:[%s1128 + $0x18] sm:$0xf]
        %v1136 = vld [vmem:[%s1128 + $0x1c] sm:$0xf]
        %v1137 = vld [vmem:[%s1128 + $0x20] sm:$0xf]
        %v1138 = vld [vmem:[%s1128 + $0x24] sm:$0xf]
        %v1139 = vld [vmem:[%s1128 + $0x28] sm:$0xf]
        %v1140 = vld [vmem:[%s1128 + $0x2c] sm:$0xf]
        %v1141 = vld [vmem:[%s1128 + $0x30] sm:$0xf]
        %v1142 = vld [vmem:[%s1128 + $0x34] sm:$0xf]
        %v1143 = vld [vmem:[%s1128 + $0x38] sm:$0xf]
        %v1144 = vld [vmem:[%s1128 + $0x3c] sm:$0xf]
        %v1145 = vpack.c.bf16 %v1095, %v1095
        %v1162 = vunpack.c.l.b16 %v1129
        %v1163 = vunpack.c.l.b16 %v1130
        %v1164 = vunpack.c.l.b16 %v1131
        %v1165 = vunpack.c.l.b16 %v1132
        %v1166 = vunpack.c.l.b16 %v1133
        %v1167 = vunpack.c.l.b16 %v1134
        %v1168 = vunpack.c.l.b16 %v1135
        %v1169 = vunpack.c.l.b16 %v1136
        %v1170 = vunpack.c.l.b16 %v1137
        %v1171 = vunpack.c.l.b16 %v1138
        %v1172 = vunpack.c.l.b16 %v1139
        %v1173 = vunpack.c.l.b16 %v1140
        %v1174 = vunpack.c.l.b16 %v1141
        %v1175 = vunpack.c.l.b16 %v1142
        %v1176 = vunpack.c.l.b16 %v1143
        %v1177 = vunpack.c.l.b16 %v1144
        %v1178 = vpack.c.b16 %v1163, %v1162
        %v1179 = vpack.c.b16 %v1165, %v1164
        %v1180 = vpack.c.b16 %v1167, %v1166
        %v1181 = vpack.c.b16 %v1169, %v1168
        %v1182 = vpack.c.b16 %v1171, %v1170
        %v1183 = vpack.c.b16 %v1173, %v1172
        %v1184 = vpack.c.b16 %v1175, %v1174
        %v1185 = vpack.c.b16 %v1177, %v1176
        %1194 = vmatprep.subr.bf16.mxu0 0
        %1195 = vmatpush1.bf16.msra.mxu0 %v1178
        %1196 = vmatprep.subr.bf16.mxu0 0
        %1197 = vmatpush1.bf16.msra.mxu0 %v1179
        %1198 = vmatprep.subr.bf16.mxu0 0
        %1199 = vmatpush1.bf16.msra.mxu0 %v1180
        %1200 = vmatprep.subr.bf16.mxu0 0
        %1201 = vmatpush1.bf16.msra.mxu0 %v1181
        %1202 = vmatprep.subr.bf16.mxu0 0
        %1203 = vmatpush1.bf16.msra.mxu0 %v1182
        %1204 = vmatprep.subr.bf16.mxu0 0
        %1205 = vmatpush1.bf16.msra.mxu0 %v1183
        %1206 = vmatprep.subr.bf16.mxu0 0
        %1207 = vmatpush1.bf16.msra.mxu0 %v1184
        %1208 = vmatprep.subr.bf16.mxu0 0
        %1209 = vmatpush1.bf16.msra.mxu0 %v1185
        %1210 = vmatprep.subr.bf16.mxu0 0
        %1211 = vmatpush1.bf16.msra.mxu0 0
        %1212 = vmatprep.subr.bf16.mxu0 0
        %1213 = vmatpush1.bf16.msra.mxu0 0
        %1214 = vmatprep.subr.bf16.mxu0 0
        %1215 = vmatpush1.bf16.msra.mxu0 0
        %1216 = vmatprep.subr.bf16.mxu0 0
        %1217 = vmatpush1.bf16.msra.mxu0 0
        %1218 = vmatprep.subr.bf16.mxu0 0
        %1219 = vmatpush1.bf16.msra.mxu0 0
        %1220 = vmatprep.subr.bf16.mxu0 0
        %1221 = vmatpush1.bf16.msra.mxu0 0
        %1222 = vmatprep.subr.bf16.mxu0 0
        %1223 = vmatpush1.bf16.msra.mxu0 0
        %1224 = vmatprep.subr.bf16.mxu0 0
        %1225 = vmatpush1.bf16.msra.mxu0 0
        %1226 = vmatprep.mubr.bf16.mxu0 0
        %1227 = vmatmul.mubr.bf16.gmra.mrb[0].mxu0 %v1145
        %v1228 = vpop.f32.mrb[0].mxu0
        %v1229 = vadd.f32 0.0, %v1228
        %v1230 = vpop.f32.mrb[0].mxu0
        %v1231 = vpop.f32.mrb[0].mxu0
        %v1232 = vpop.f32.mrb[0].mxu0
        %1233 = vdwg.mxu0
        %v1250 = vunpack.c.l.b16 %v1111
        %v1251 = vunpack.c.l.b16 %v1112
        %v1252 = vunpack.c.l.b16 %v1113
        %v1253 = vunpack.c.l.b16 %v1114
        %v1254 = vunpack.c.l.b16 %v1115
        %v1255 = vunpack.c.l.b16 %v1116
        %v1256 = vunpack.c.l.b16 %v1117
        %v1257 = vunpack.c.l.b16 %v1118
        %v1258 = vunpack.c.l.b16 %v1119
        %v1259 = vunpack.c.l.b16 %v1120
        %v1260 = vunpack.c.l.b16 %v1121
        %v1261 = vunpack.c.l.b16 %v1122
        %v1262 = vunpack.c.l.b16 %v1123
        %v1263 = vunpack.c.l.b16 %v1124
        %v1264 = vunpack.c.l.b16 %v1125
        %v1265 = vunpack.c.l.b16 %v1126
        %v1266 = vpack.c.b16 %v1251, %v1250
        %v1267 = vpack.c.b16 %v1253, %v1252
        %v1268 = vpack.c.b16 %v1255, %v1254
        %v1269 = vpack.c.b16 %v1257, %v1256
        %v1270 = vpack.c.b16 %v1259, %v1258
        %v1271 = vpack.c.b16 %v1261, %v1260
        %v1272 = vpack.c.b16 %v1263, %v1262
        %v1273 = vpack.c.b16 %v1265, %v1264
        %1282 = vmatprep.subr.bf16.mxu0 0
        %1283 = vmatpush1.bf16.msra.mxu0 %v1266
        %1284 = vmatprep.subr.bf16.mxu0 0
        %1285 = vmatpush1.bf16.msra.mxu0 %v1267
        %1286 = vmatprep.subr.bf16.mxu0 0
        %1287 = vmatpush1.bf16.msra.mxu0 %v1268
        %1288 = vmatprep.subr.bf16.mxu0 0
        %1289 = vmatpush1.bf16.msra.mxu0 %v1269
        %1290 = vmatprep.subr.bf16.mxu0 0
        %1291 = vmatpush1.bf16.msra.mxu0 %v1270
        %1292 = vmatprep.subr.bf16.mxu0 0
        %1293 = vmatpush1.bf16.msra.mxu0 %v1271
        %1294 = vmatprep.subr.bf16.mxu0 0
        %1295 = vmatpush1.bf16.msra.mxu0 %v1272
        %1296 = vmatprep.subr.bf16.mxu0 0
        %1297 = vmatpush1.bf16.msra.mxu0 %v1273
        %1298 = vmatprep.subr.bf16.mxu0 0
        %1299 = vmatpush1.bf16.msra.mxu0 0
        %1300 = vmatprep.subr.bf16.mxu0 0
        %1301 = vmatpush1.bf16.msra.mxu0 0
        %1302 = vmatprep.subr.bf16.mxu0 0
        %1303 = vmatpush1.bf16.msra.mxu0 0
        %1304 = vmatprep.subr.bf16.mxu0 0
        %1305 = vmatpush1.bf16.msra.mxu0 0
        %1306 = vmatprep.subr.bf16.mxu0 0
        %1307 = vmatpush1.bf16.msra.mxu0 0
        %1308 = vmatprep.subr.bf16.mxu0 0
        %1309 = vmatpush1.bf16.msra.mxu0 0
        %1310 = vmatprep.subr.bf16.mxu0 0
        %1311 = vmatpush1.bf16.msra.mxu0 0
        %1312 = vmatprep.subr.bf16.mxu0 0
        %1313 = vmatpush1.bf16.msra.mxu0 0
        %1314 = vmatprep.mubr.bf16.mxu0 0
        %1315 = vmatmul.mubr.bf16.gmra.mrb[0].mxu0 %v1127
        %v1316 = vpop.f32.mrb[0].mxu0
        %v1317 = vadd.f32 %v1229, %v1316
        %v1318 = vpop.f32.mrb[0].mxu0
        %v1319 = vpop.f32.mrb[0].mxu0
        %v1320 = vpop.f32.mrb[0].mxu0
        %1321 = vdwg.mxu0
        %s1322 = scalar_lea.vmem %s10, 128
        %v1323 = vld [vmem:[%s1322] sm:$0xf]
        %v1324 = vld [vmem:[%s1322 + $0x4] sm:$0xf]
        %v1325 = vld [vmem:[%s1322 + $0x8] sm:$0xf]
        %v1326 = vld [vmem:[%s1322 + $0xc] sm:$0xf]
        %v1327 = vld [vmem:[%s1322 + $0x10] sm:$0xf]
        %v1328 = vld [vmem:[%s1322 + $0x14] sm:$0xf]
        %v1329 = vld [vmem:[%s1322 + $0x18] sm:$0xf]
        %v1330 = vld [vmem:[%s1322 + $0x1c] sm:$0xf]
        %v1331 = vld [vmem:[%s1322 + $0x20] sm:$0xf]
        %v1332 = vld [vmem:[%s1322 + $0x24] sm:$0xf]
        %v1333 = vld [vmem:[%s1322 + $0x28] sm:$0xf]
        %v1334 = vld [vmem:[%s1322 + $0x2c] sm:$0xf]
        %v1335 = vld [vmem:[%s1322 + $0x30] sm:$0xf]
        %v1336 = vld [vmem:[%s1322 + $0x34] sm:$0xf]
        %v1337 = vld [vmem:[%s1322 + $0x38] sm:$0xf]
        %v1338 = vld [vmem:[%s1322 + $0x3c] sm:$0xf]
        %v1339 = vpack.c.bf16 %v1097, %v1097
        %v1356 = vunpack.c.l.b16 %v1323
        %v1357 = vunpack.c.l.b16 %v1324
        %v1358 = vunpack.c.l.b16 %v1325
        %v1359 = vunpack.c.l.b16 %v1326
        %v1360 = vunpack.c.l.b16 %v1327
        %v1361 = vunpack.c.l.b16 %v1328
        %v1362 = vunpack.c.l.b16 %v1329
        %v1363 = vunpack.c.l.b16 %v1330
        %v1364 = vunpack.c.l.b16 %v1331
        %v1365 = vunpack.c.l.b16 %v1332
        %v1366 = vunpack.c.l.b16 %v1333
        %v1367 = vunpack.c.l.b16 %v1334
        %v1368 = vunpack.c.l.b16 %v1335
        %v1369 = vunpack.c.l.b16 %v1336
        %v1370 = vunpack.c.l.b16 %v1337
        %v1371 = vunpack.c.l.b16 %v1338
        %v1372 = vpack.c.b16 %v1357, %v1356
        %v1373 = vpack.c.b16 %v1359, %v1358
        %v1374 = vpack.c.b16 %v1361, %v1360
        %v1375 = vpack.c.b16 %v1363, %v1362
        %v1376 = vpack.c.b16 %v1365, %v1364
        %v1377 = vpack.c.b16 %v1367, %v1366
        %v1378 = vpack.c.b16 %v1369, %v1368
        %v1379 = vpack.c.b16 %v1371, %v1370
        %1388 = vmatprep.subr.bf16.mxu0 0
        %1389 = vmatpush1.bf16.msra.mxu0 %v1372
        %1390 = vmatprep.subr.bf16.mxu0 0
        %1391 = vmatpush1.bf16.msra.mxu0 %v1373
        %1392 = vmatprep.subr.bf16.mxu0 0
        %1393 = vmatpush1.bf16.msra.mxu0 %v1374
        %1394 = vmatprep.subr.bf16.mxu0 0
        %1395 = vmatpush1.bf16.msra.mxu0 %v1375
        %1396 = vmatprep.subr.bf16.mxu0 0
        %1397 = vmatpush1.bf16.msra.mxu0 %v1376
        %1398 = vmatprep.subr.bf16.mxu0 0
        %1399 = vmatpush1.bf16.msra.mxu0 %v1377
        %1400 = vmatprep.subr.bf16.mxu0 0
        %1401 = vmatpush1.bf16.msra.mxu0 %v1378
        %1402 = vmatprep.subr.bf16.mxu0 0
        %1403 = vmatpush1.bf16.msra.mxu0 %v1379
        %1404 = vmatprep.subr.bf16.mxu0 0
        %1405 = vmatpush1.bf16.msra.mxu0 0
        %1406 = vmatprep.subr.bf16.mxu0 0
        %1407 = vmatpush1.bf16.msra.mxu0 0
        %1408 = vmatprep.subr.bf16.mxu0 0
        %1409 = vmatpush1.bf16.msra.mxu0 0
        %1410 = vmatprep.subr.bf16.mxu0 0
        %1411 = vmatpush1.bf16.msra.mxu0 0
        %1412 = vmatprep.subr.bf16.mxu0 0
        %1413 = vmatpush1.bf16.msra.mxu0 0
        %1414 = vmatprep.subr.bf16.mxu0 0
        %1415 = vmatpush1.bf16.msra.mxu0 0
        %1416 = vmatprep.subr.bf16.mxu0 0
        %1417 = vmatpush1.bf16.msra.mxu0 0
        %1418 = vmatprep.subr.bf16.mxu0 0
        %1419 = vmatpush1.bf16.msra.mxu0 0
        %1420 = vmatprep.mubr.bf16.mxu0 0
        %1421 = vmatmul.mubr.bf16.gmra.mrb[0].mxu0 %v1339
        %v1422 = vpop.f32.mrb[0].mxu0
        %v1423 = vadd.f32 0.0, %v1422
        %v1424 = vpop.f32.mrb[0].mxu0
        %v1425 = vpop.f32.mrb[0].mxu0
        %v1426 = vpop.f32.mrb[0].mxu0
        %1427 = vdwg.mxu0
        %v1428 = vadd.f32 %v1317, %v1423
        %v1429 = vlaneseq
        %v1430 = vshrl.u32 %v1429, 7
        %v1431 = vsub.s32 6, %v1430
        %v1432 = vrot.slane %v652, %v1431
        %v1433 = vadd.f32 %v1428, %v1432
        %v1434 = vpack.c.bf16 %v1099, %v1099
        %1435 = vmatprep.subr.bf16.mxu0 0
        %1436 = vmatpush1.bf16.msra.mxu0 %v1178
        %1437 = vmatprep.subr.bf16.mxu0 0
        %1438 = vmatpush1.bf16.msra.mxu0 %v1179
        %1439 = vmatprep.subr.bf16.mxu0 0
        %1440 = vmatpush1.bf16.msra.mxu0 %v1180
        %1441 = vmatprep.subr.bf16.mxu0 0
        %1442 = vmatpush1.bf16.msra.mxu0 %v1181
        %1443 = vmatprep.subr.bf16.mxu0 0
        %1444 = vmatpush1.bf16.msra.mxu0 %v1182
        %1445 = vmatprep.subr.bf16.mxu0 0
        %1446 = vmatpush1.bf16.msra.mxu0 %v1183
        %1447 = vmatprep.subr.bf16.mxu0 0
        %1448 = vmatpush1.bf16.msra.mxu0 %v1184
        %1449 = vmatprep.subr.bf16.mxu0 0
        %1450 = vmatpush1.bf16.msra.mxu0 %v1185
        %1451 = vmatprep.subr.bf16.mxu0 0
        %1452 = vmatpush1.bf16.msra.mxu0 0
        %1453 = vmatprep.subr.bf16.mxu0 0
        %1454 = vmatpush1.bf16.msra.mxu0 0
        %1455 = vmatprep.subr.bf16.mxu0 0
        %1456 = vmatpush1.bf16.msra.mxu0 0
        %1457 = vmatprep.subr.bf16.mxu0 0
        %1458 = vmatpush1.bf16.msra.mxu0 0
        %1459 = vmatprep.subr.bf16.mxu0 0
        %1460 = vmatpush1.bf16.msra.mxu0 0
        %1461 = vmatprep.subr.bf16.mxu0 0
        %1462 = vmatpush1.bf16.msra.mxu0 0
        %1463 = vmatprep.subr.bf16.mxu0 0
        %1464 = vmatpush1.bf16.msra.mxu0 0
        %1465 = vmatprep.subr.bf16.mxu0 0
        %1466 = vmatpush1.bf16.msra.mxu0 0
        %1467 = vmatprep.mubr.bf16.mxu0 0
        %1468 = vmatmul.mubr.bf16.gmra.mrb[0].mxu0 %v1434
        %v1469 = vpop.f32.mrb[0].mxu0
        %v1470 = vadd.f32 0.0, %v1469
        %v1471 = vpop.f32.mrb[0].mxu0
        %v1472 = vpop.f32.mrb[0].mxu0
        %v1473 = vpop.f32.mrb[0].mxu0
        %1474 = vdwg.mxu0
        %1475 = vmatprep.subr.bf16.mxu0 0
        %1476 = vmatpush1.bf16.msra.mxu0 %v1266
        %1477 = vmatprep.subr.bf16.mxu0 0
        %1478 = vmatpush1.bf16.msra.mxu0 %v1267
        %1479 = vmatprep.subr.bf16.mxu0 0
        %1480 = vmatpush1.bf16.msra.mxu0 %v1268
        %1481 = vmatprep.subr.bf16.mxu0 0
        %1482 = vmatpush1.bf16.msra.mxu0 %v1269
        %1483 = vmatprep.subr.bf16.mxu0 0
        %1484 = vmatpush1.bf16.msra.mxu0 %v1270
        %1485 = vmatprep.subr.bf16.mxu0 0
        %1486 = vmatpush1.bf16.msra.mxu0 %v1271
        %1487 = vmatprep.subr.bf16.mxu0 0
        %1488 = vmatpush1.bf16.msra.mxu0 %v1272
        %1489 = vmatprep.subr.bf16.mxu0 0
        %1490 = vmatpush1.bf16.msra.mxu0 %v1273
        %1491 = vmatprep.subr.bf16.mxu0 0
        %1492 = vmatpush1.bf16.msra.mxu0 0
        %1493 = vmatprep.subr.bf16.mxu0 0
        %1494 = vmatpush1.bf16.msra.mxu0 0
        %1495 = vmatprep.subr.bf16.mxu0 0
        %1496 = vmatpush1.bf16.msra.mxu0 0
        %1497 = vmatprep.subr.bf16.mxu0 0
        %1498 = vmatpush1.bf16.msra.mxu0 0
        %1499 = vmatprep.subr.bf16.mxu0 0
        %1500 = vmatpush1.bf16.msra.mxu0 0
        %1501 = vmatprep.subr.bf16.mxu0 0
        %1502 = vmatpush1.bf16.msra.mxu0 0
        %1503 = vmatprep.subr.bf16.mxu0 0
        %1504 = vmatpush1.bf16.msra.mxu0 0
        %1505 = vmatprep.subr.bf16.mxu0 0
        %1506 = vmatpush1.bf16.msra.mxu0 0
        %1507 = vmatprep.mubr.bf16.mxu0 0
        %1508 = vmatmul.mubr.bf16.gmra.mrb[0].mxu0 %v1339
        %v1509 = vpop.f32.mrb[0].mxu0
        %v1510 = vadd.f32 %v1470, %v1509
        %v1511 = vpop.f32.mrb[0].mxu0
        %v1512 = vpop.f32.mrb[0].mxu0
        %v1513 = vpop.f32.mrb[0].mxu0
        %1514 = vdwg.mxu0
        %v1515 = vpack.c.bf16 %v1101, %v1101
        %1516 = vmatprep.subr.bf16.mxu0 0
        %1517 = vmatpush1.bf16.msra.mxu0 %v1372
        %1518 = vmatprep.subr.bf16.mxu0 0
        %1519 = vmatpush1.bf16.msra.mxu0 %v1373
        %1520 = vmatprep.subr.bf16.mxu0 0
        %1521 = vmatpush1.bf16.msra.mxu0 %v1374
        %1522 = vmatprep.subr.bf16.mxu0 0
        %1523 = vmatpush1.bf16.msra.mxu0 %v1375
        %1524 = vmatprep.subr.bf16.mxu0 0
        %1525 = vmatpush1.bf16.msra.mxu0 %v1376
        %1526 = vmatprep.subr.bf16.mxu0 0
        %1527 = vmatpush1.bf16.msra.mxu0 %v1377
        %1528 = vmatprep.subr.bf16.mxu0 0
        %1529 = vmatpush1.bf16.msra.mxu0 %v1378
        %1530 = vmatprep.subr.bf16.mxu0 0
        %1531 = vmatpush1.bf16.msra.mxu0 %v1379
        %1532 = vmatprep.subr.bf16.mxu0 0
        %1533 = vmatpush1.bf16.msra.mxu0 0
        %1534 = vmatprep.subr.bf16.mxu0 0
        %1535 = vmatpush1.bf16.msra.mxu0 0
        %1536 = vmatprep.subr.bf16.mxu0 0
        %1537 = vmatpush1.bf16.msra.mxu0 0
        %1538 = vmatprep.subr.bf16.mxu0 0
        %1539 = vmatpush1.bf16.msra.mxu0 0
        %1540 = vmatprep.subr.bf16.mxu0 0
        %1541 = vmatpush1.bf16.msra.mxu0 0
        %1542 = vmatprep.subr.bf16.mxu0 0
        %1543 = vmatpush1.bf16.msra.mxu0 0
        %1544 = vmatprep.subr.bf16.mxu0 0
        %1545 = vmatpush1.bf16.msra.mxu0 0
        %1546 = vmatprep.subr.bf16.mxu0 0
        %1547 = vmatpush1.bf16.msra.mxu0 0
        %1548 = vmatprep.mubr.bf16.mxu0 0
        %1549 = vmatmul.mubr.bf16.gmra.mrb[0].mxu0 %v1515
        %v1550 = vpop.f32.mrb[0].mxu0
        %v1551 = vadd.f32 0.0, %v1550
        %v1552 = vpop.f32.mrb[0].mxu0
        %v1553 = vpop.f32.mrb[0].mxu0
        %v1554 = vpop.f32.mrb[0].mxu0
        %1555 = vdwg.mxu0
        %v1556 = vadd.f32 %v1510, %v1551
        %v1557 = vadd.f32 %v1556, %v1432
        %1558 = vst [vmem:[%s650] sm:$0x3] %v1433
        %s1559 = scalar_lea.vmem %s650, 2
        %1560 = vst [vmem:[%s1559] sm:$0x3] %v1557
        %v1561 = vmax.f32 %v1433, 0.0
        %v1562 = vmax.f32 %v1557, 0.0
        %v1563 = vrot.slane %v1562, 6
        %v1564 = vsel %vm1102, %v1563, %v1562
        %v1565 = vrot.slane %v1564, 6
        %v1566 = vsel %vm1102, %v1565, %v1562
        %v1568 = vrot.slane %v1566, 1
        %v1570 = vsel %vm766, 0.0, %v1568
        %v1571 = vld [vmem:[%s11] sm:$0xf]
        %v1572 = vld [vmem:[%s11 + $0x4] sm:$0xf]
        %v1573 = vld [vmem:[%s11 + $0x8] sm:$0xf]
        %v1574 = vld [vmem:[%s11 + $0xc] sm:$0xf]
        %v1575 = vld [vmem:[%s11 + $0x10] sm:$0xf]
        %v1576 = vld [vmem:[%s11 + $0x14] sm:$0xf]
        %v1577 = vld [vmem:[%s11 + $0x18] sm:$0xf]
        %v1578 = vld [vmem:[%s11 + $0x1c] sm:$0xf]
        %v1579 = vld [vmem:[%s11 + $0x20] sm:$0xf]
        %v1580 = vld [vmem:[%s11 + $0x24] sm:$0xf]
        %v1581 = vld [vmem:[%s11 + $0x28] sm:$0xf]
        %v1582 = vld [vmem:[%s11 + $0x2c] sm:$0xf]
        %v1583 = vld [vmem:[%s11 + $0x30] sm:$0xf]
        %v1584 = vld [vmem:[%s11 + $0x34] sm:$0xf]
        %v1585 = vld [vmem:[%s11 + $0x38] sm:$0xf]
        %v1586 = vld [vmem:[%s11 + $0x3c] sm:$0xf]
        %v1587 = vpack.c.bf16 %v1570, %v1570
        %s1588 = scalar_lea.vmem %s11, 64
        %v1589 = vld [vmem:[%s1588] sm:$0xf]
        %v1590 = vld [vmem:[%s1588 + $0x4] sm:$0xf]
        %v1591 = vld [vmem:[%s1588 + $0x8] sm:$0xf]
        %v1592 = vld [vmem:[%s1588 + $0xc] sm:$0xf]
        %v1593 = vld [vmem:[%s1588 + $0x10] sm:$0xf]
        %v1594 = vld [vmem:[%s1588 + $0x14] sm:$0xf]
        %v1595 = vld [vmem:[%s1588 + $0x18] sm:$0xf]
        %v1596 = vld [vmem:[%s1588 + $0x1c] sm:$0xf]
        %v1597 = vld [vmem:[%s1588 + $0x20] sm:$0xf]
        %v1598 = vld [vmem:[%s1588 + $0x24] sm:$0xf]
        %v1599 = vld [vmem:[%s1588 + $0x28] sm:$0xf]
        %v1600 = vld [vmem:[%s1588 + $0x2c] sm:$0xf]
        %v1601 = vld [vmem:[%s1588 + $0x30] sm:$0xf]
        %v1602 = vld [vmem:[%s1588 + $0x34] sm:$0xf]
        %v1603 = vld [vmem:[%s1588 + $0x38] sm:$0xf]
        %v1604 = vld [vmem:[%s1588 + $0x3c] sm:$0xf]
        %v1605 = vpack.c.bf16 %v1561, %v1561
        %v1622 = vunpack.c.l.b16 %v1589
        %v1623 = vunpack.c.l.b16 %v1590
        %v1624 = vunpack.c.l.b16 %v1591
        %v1625 = vunpack.c.l.b16 %v1592
        %v1626 = vunpack.c.l.b16 %v1593
        %v1627 = vunpack.c.l.b16 %v1594
        %v1628 = vunpack.c.l.b16 %v1595
        %v1629 = vunpack.c.l.b16 %v1596
        %v1630 = vunpack.c.l.b16 %v1597
        %v1631 = vunpack.c.l.b16 %v1598
        %v1632 = vunpack.c.l.b16 %v1599
        %v1633 = vunpack.c.l.b16 %v1600
        %v1634 = vunpack.c.l.b16 %v1601
        %v1635 = vunpack.c.l.b16 %v1602
        %v1636 = vunpack.c.l.b16 %v1603
        %v1637 = vunpack.c.l.b16 %v1604
        %v1638 = vpack.c.b16 %v1623, %v1622
        %v1639 = vpack.c.b16 %v1625, %v1624
        %v1640 = vpack.c.b16 %v1627, %v1626
        %v1641 = vpack.c.b16 %v1629, %v1628
        %v1642 = vpack.c.b16 %v1631, %v1630
        %v1643 = vpack.c.b16 %v1633, %v1632
        %v1644 = vpack.c.b16 %v1635, %v1634
        %v1645 = vpack.c.b16 %v1637, %v1636
        %1654 = vmatprep.subr.bf16.mxu0 0
        %1655 = vmatpush1.bf16.msra.mxu0 %v1638
        %1656 = vmatprep.subr.bf16.mxu0 0
        %1657 = vmatpush1.bf16.msra.mxu0 %v1639
        %1658 = vmatprep.subr.bf16.mxu0 0
        %1659 = vmatpush1.bf16.msra.mxu0 %v1640
        %1660 = vmatprep.subr.bf16.mxu0 0
        %1661 = vmatpush1.bf16.msra.mxu0 %v1641
        %1662 = vmatprep.subr.bf16.mxu0 0
        %1663 = vmatpush1.bf16.msra.mxu0 %v1642
        %1664 = vmatprep.subr.bf16.mxu0 0
        %1665 = vmatpush1.bf16.msra.mxu0 %v1643
        %1666 = vmatprep.subr.bf16.mxu0 0
        %1667 = vmatpush1.bf16.msra.mxu0 %v1644
        %1668 = vmatprep.subr.bf16.mxu0 0
        %1669 = vmatpush1.bf16.msra.mxu0 %v1645
        %1670 = vmatprep.subr.bf16.mxu0 0
        %1671 = vmatpush1.bf16.msra.mxu0 0
        %1672 = vmatprep.subr.bf16.mxu0 0
        %1673 = vmatpush1.bf16.msra.mxu0 0
        %1674 = vmatprep.subr.bf16.mxu0 0
        %1675 = vmatpush1.bf16.msra.mxu0 0
        %1676 = vmatprep.subr.bf16.mxu0 0
        %1677 = vmatpush1.bf16.msra.mxu0 0
        %1678 = vmatprep.subr.bf16.mxu0 0
        %1679 = vmatpush1.bf16.msra.mxu0 0
        %1680 = vmatprep.subr.bf16.mxu0 0
        %1681 = vmatpush1.bf16.msra.mxu0 0
        %1682 = vmatprep.subr.bf16.mxu0 0
        %1683 = vmatpush1.bf16.msra.mxu0 0
        %1684 = vmatprep.subr.bf16.mxu0 0
        %1685 = vmatpush1.bf16.msra.mxu0 0
        %1686 = vmatprep.mubr.bf16.mxu0 0
        %1687 = vmatmul.mubr.bf16.gmra.mrb[0].mxu0 %v1605
        %v1688 = vpop.f32.mrb[0].mxu0
        %v1689 = vadd.f32 0.0, %v1688
        %v1690 = vpop.f32.mrb[0].mxu0
        %v1691 = vpop.f32.mrb[0].mxu0
        %v1692 = vpop.f32.mrb[0].mxu0
        %1693 = vdwg.mxu0
        %v1710 = vunpack.c.l.b16 %v1571
        %v1711 = vunpack.c.l.b16 %v1572
        %v1712 = vunpack.c.l.b16 %v1573
        %v1713 = vunpack.c.l.b16 %v1574
        %v1714 = vunpack.c.l.b16 %v1575
        %v1715 = vunpack.c.l.b16 %v1576
        %v1716 = vunpack.c.l.b16 %v1577
        %v1717 = vunpack.c.l.b16 %v1578
        %v1718 = vunpack.c.l.b16 %v1579
        %v1719 = vunpack.c.l.b16 %v1580
        %v1720 = vunpack.c.l.b16 %v1581
        %v1721 = vunpack.c.l.b16 %v1582
        %v1722 = vunpack.c.l.b16 %v1583
        %v1723 = vunpack.c.l.b16 %v1584
        %v1724 = vunpack.c.l.b16 %v1585
        %v1725 = vunpack.c.l.b16 %v1586
        %v1726 = vpack.c.b16 %v1711, %v1710
        %v1727 = vpack.c.b16 %v1713, %v1712
        %v1728 = vpack.c.b16 %v1715, %v1714
        %v1729 = vpack.c.b16 %v1717, %v1716
        %v1730 = vpack.c.b16 %v1719, %v1718
        %v1731 = vpack.c.b16 %v1721, %v1720
        %v1732 = vpack.c.b16 %v1723, %v1722
        %v1733 = vpack.c.b16 %v1725, %v1724
        %1742 = vmatprep.subr.bf16.mxu0 0
        %1743 = vmatpush1.bf16.msra.mxu0 %v1726
        %1744 = vmatprep.subr.bf16.mxu0 0
        %1745 = vmatpush1.bf16.msra.mxu0 %v1727
        %1746 = vmatprep.subr.bf16.mxu0 0
        %1747 = vmatpush1.bf16.msra.mxu0 %v1728
        %1748 = vmatprep.subr.bf16.mxu0 0
        %1749 = vmatpush1.bf16.msra.mxu0 %v1729
        %1750 = vmatprep.subr.bf16.mxu0 0
        %1751 = vmatpush1.bf16.msra.mxu0 %v1730
        %1752 = vmatprep.subr.bf16.mxu0 0
        %1753 = vmatpush1.bf16.msra.mxu0 %v1731
        %1754 = vmatprep.subr.bf16.mxu0 0
        %1755 = vmatpush1.bf16.msra.mxu0 %v1732
        %1756 = vmatprep.subr.bf16.mxu0 0
        %1757 = vmatpush1.bf16.msra.mxu0 %v1733
        %1758 = vmatprep.subr.bf16.mxu0 0
        %1759 = vmatpush1.bf16.msra.mxu0 0
        %1760 = vmatprep.subr.bf16.mxu0 0
        %1761 = vmatpush1.bf16.msra.mxu0 0
        %1762 = vmatprep.subr.bf16.mxu0 0
        %1763 = vmatpush1.bf16.msra.mxu0 0
        %1764 = vmatprep.subr.bf16.mxu0 0
        %1765 = vmatpush1.bf16.msra.mxu0 0
        %1766 = vmatprep.subr.bf16.mxu0 0
        %1767 = vmatpush1.bf16.msra.mxu0 0
        %1768 = vmatprep.subr.bf16.mxu0 0
        %1769 = vmatpush1.bf16.msra.mxu0 0
        %1770 = vmatprep.subr.bf16.mxu0 0
        %1771 = vmatpush1.bf16.msra.mxu0 0
        %1772 = vmatprep.subr.bf16.mxu0 0
        %1773 = vmatpush1.bf16.msra.mxu0 0
        %1774 = vmatprep.mubr.bf16.mxu0 0
        %1775 = vmatmul.mubr.bf16.gmra.mrb[0].mxu0 %v1587
        %v1776 = vpop.f32.mrb[0].mxu0
        %v1777 = vadd.f32 %v1689, %v1776
        %v1778 = vpop.f32.mrb[0].mxu0
        %v1779 = vpop.f32.mrb[0].mxu0
        %v1780 = vpop.f32.mrb[0].mxu0
        %1781 = vdwg.mxu0
        %s1782 = scalar_lea.vmem %s11, 128
        %v1783 = vld [vmem:[%s1782] sm:$0xf]
        %v1784 = vld [vmem:[%s1782 + $0x4] sm:$0xf]
        %v1785 = vld [vmem:[%s1782 + $0x8] sm:$0xf]
        %v1786 = vld [vmem:[%s1782 + $0xc] sm:$0xf]
        %v1787 = vld [vmem:[%s1782 + $0x10] sm:$0xf]
        %v1788 = vld [vmem:[%s1782 + $0x14] sm:$0xf]
        %v1789 = vld [vmem:[%s1782 + $0x18] sm:$0xf]
        %v1790 = vld [vmem:[%s1782 + $0x1c] sm:$0xf]
        %v1791 = vld [vmem:[%s1782 + $0x20] sm:$0xf]
        %v1792 = vld [vmem:[%s1782 + $0x24] sm:$0xf]
        %v1793 = vld [vmem:[%s1782 + $0x28] sm:$0xf]
        %v1794 = vld [vmem:[%s1782 + $0x2c] sm:$0xf]
        %v1795 = vld [vmem:[%s1782 + $0x30] sm:$0xf]
        %v1796 = vld [vmem:[%s1782 + $0x34] sm:$0xf]
        %v1797 = vld [vmem:[%s1782 + $0x38] sm:$0xf]
        %v1798 = vld [vmem:[%s1782 + $0x3c] sm:$0xf]
        %v1799 = vpack.c.bf16 %v1562, %v1562
        %v1816 = vunpack.c.l.b16 %v1783
        %v1817 = vunpack.c.l.b16 %v1784
        %v1818 = vunpack.c.l.b16 %v1785
        %v1819 = vunpack.c.l.b16 %v1786
        %v1820 = vunpack.c.l.b16 %v1787
        %v1821 = vunpack.c.l.b16 %v1788
        %v1822 = vunpack.c.l.b16 %v1789
        %v1823 = vunpack.c.l.b16 %v1790
        %v1824 = vunpack.c.l.b16 %v1791
        %v1825 = vunpack.c.l.b16 %v1792
        %v1826 = vunpack.c.l.b16 %v1793
        %v1827 = vunpack.c.l.b16 %v1794
        %v1828 = vunpack.c.l.b16 %v1795
        %v1829 = vunpack.c.l.b16 %v1796
        %v1830 = vunpack.c.l.b16 %v1797
        %v1831 = vunpack.c.l.b16 %v1798
        %v1832 = vpack.c.b16 %v1817, %v1816
        %v1833 = vpack.c.b16 %v1819, %v1818
        %v1834 = vpack.c.b16 %v1821, %v1820
        %v1835 = vpack.c.b16 %v1823, %v1822
        %v1836 = vpack.c.b16 %v1825, %v1824
        %v1837 = vpack.c.b16 %v1827, %v1826
        %v1838 = vpack.c.b16 %v1829, %v1828
        %v1839 = vpack.c.b16 %v1831, %v1830
        %1848 = vmatprep.subr.bf16.mxu0 0
        %1849 = vmatpush1.bf16.msra.mxu0 %v1832
        %1850 = vmatprep.subr.bf16.mxu0 0
        %1851 = vmatpush1.bf16.msra.mxu0 %v1833
        %1852 = vmatprep.subr.bf16.mxu0 0
        %1853 = vmatpush1.bf16.msra.mxu0 %v1834
        %1854 = vmatprep.subr.bf16.mxu0 0
        %1855 = vmatpush1.bf16.msra.mxu0 %v1835
        %1856 = vmatprep.subr.bf16.mxu0 0
        %1857 = vmatpush1.bf16.msra.mxu0 %v1836
        %1858 = vmatprep.subr.bf16.mxu0 0
        %1859 = vmatpush1.bf16.msra.mxu0 %v1837
        %1860 = vmatprep.subr.bf16.mxu0 0
        %1861 = vmatpush1.bf16.msra.mxu0 %v1838
        %1862 = vmatprep.subr.bf16.mxu0 0
        %1863 = vmatpush1.bf16.msra.mxu0 %v1839
        %1864 = vmatprep.subr.bf16.mxu0 0
        %1865 = vmatpush1.bf16.msra.mxu0 0
        %1866 = vmatprep.subr.bf16.mxu0 0
        %1867 = vmatpush1.bf16.msra.mxu0 0
        %1868 = vmatprep.subr.bf16.mxu0 0
        %1869 = vmatpush1.bf16.msra.mxu0 0
        %1870 = vmatprep.subr.bf16.mxu0 0
        %1871 = vmatpush1.bf16.msra.mxu0 0
        %1872 = vmatprep.subr.bf16.mxu0 0
        %1873 = vmatpush1.bf16.msra.mxu0 0
        %1874 = vmatprep.subr.bf16.mxu0 0
        %1875 = vmatpush1.bf16.msra.mxu0 0
        %1876 = vmatprep.subr.bf16.mxu0 0
        %1877 = vmatpush1.bf16.msra.mxu0 0
        %1878 = vmatprep.subr.bf16.mxu0 0
        %1879 = vmatpush1.bf16.msra.mxu0 0
        %1880 = vmatprep.mubr.bf16.mxu0 0
        %1881 = vmatmul.mubr.bf16.gmra.mrb[0].mxu0 %v1799
        %v1882 = vpop.f32.mrb[0].mxu0
        %v1883 = vadd.f32 0.0, %v1882
        %v1884 = vpop.f32.mrb[0].mxu0
        %v1885 = vpop.f32.mrb[0].mxu0
        %v1886 = vpop.f32.mrb[0].mxu0
        %1887 = vdwg.mxu0
        %v1888 = vadd.f32 %v1777, %v1883
        %v1889 = vlaneseq
        %v1890 = vshrl.u32 %v1889, 7
        %v1891 = vsub.s32 7, %v1890
        %v1892 = vrot.slane %v652, %v1891
        %v1893 = vadd.f32 %v1888, %v1892
        %1894 = vst [vmem:[%s616] sm:$0x3] %v1893
        %v1895 = vld [vmem:[%s630] sm:$0xff]
        %v1896 = vld [vmem:[%s5] sm:$0xf]
        %v1897 = vld [vmem:[%s5 + $0x4] sm:$0xf]
        %v1898 = vld [vmem:[%s5 + $0x8] sm:$0xf]
        %v1899 = vld [vmem:[%s5 + $0xc] sm:$0xf]
        %v1900 = vld [vmem:[%s5 + $0x10] sm:$0xf]
        %v1901 = vld [vmem:[%s5 + $0x14] sm:$0xf]
        %v1902 = vld [vmem:[%s5 + $0x18] sm:$0xf]
        %v1903 = vld [vmem:[%s5 + $0x1c] sm:$0xf]
        %v1904 = vpack.c.bf16 %v1895, %v1895
        %v1905 = vlaneseq
        %v1906 = vshrl.u32 %v1905, 7
        %v1907 = vsub.s32 2, %v1906
        %v1908 = vrot.slane %v652, %v1907
        %v1917 = vunpack.c.l.b16 %v1896
        %v1918 = vunpack.c.l.b16 %v1897
        %v1919 = vunpack.c.l.b16 %v1898
        %v1920 = vunpack.c.l.b16 %v1899
        %v1921 = vunpack.c.l.b16 %v1900
        %v1922 = vunpack.c.l.b16 %v1901
        %v1923 = vunpack.c.l.b16 %v1902
        %v1924 = vunpack.c.l.b16 %v1903
        %v1925 = vpack.c.b16 %v1918, %v1917
        %v1926 = vpack.c.b16 %v1920, %v1919
        %v1927 = vpack.c.b16 %v1922, %v1921
        %v1928 = vpack.c.b16 %v1924, %v1923
        %vm1933 = vcmask 523264
        %v1935 = vsel %vm1933, %v1904, 0
        %1937 = vmatprep.subr.bf16.mxu0 0
        %1938 = vmatpush1.bf16.msra.mxu0 %v1925
        %1939 = vmatprep.subr.bf16.mxu0 0
        %1940 = vmatpush1.bf16.msra.mxu0 %v1926
        %1941 = vmatprep.subr.bf16.mxu0 0
        %1942 = vmatpush1.bf16.msra.mxu0 %v1927
        %1943 = vmatprep.subr.bf16.mxu0 0
        %1944 = vmatpush1.bf16.msra.mxu0 %v1928
        %1945 = vmatprep.subr.bf16.mxu0 0
        %1946 = vmatpush1.bf16.msra.mxu0 0
        %1947 = vmatprep.subr.bf16.mxu0 0
        %1948 = vmatpush1.bf16.msra.mxu0 0
        %1949 = vmatprep.subr.bf16.mxu0 0
        %1950 = vmatpush1.bf16.msra.mxu0 0
        %1951 = vmatprep.subr.bf16.mxu0 0
        %1952 = vmatpush1.bf16.msra.mxu0 0
        %1953 = vmatprep.subr.bf16.mxu0 0
        %1954 = vmatpush1.bf16.msra.mxu0 0
        %1955 = vmatprep.subr.bf16.mxu0 0
        %1956 = vmatpush1.bf16.msra.mxu0 0
        %1957 = vmatprep.subr.bf16.mxu0 0
        %1958 = vmatpush1.bf16.msra.mxu0 0
        %1959 = vmatprep.subr.bf16.mxu0 0
        %1960 = vmatpush1.bf16.msra.mxu0 0
        %1961 = vmatprep.subr.bf16.mxu0 0
        %1962 = vmatpush1.bf16.msra.mxu0 0
        %1963 = vmatprep.subr.bf16.mxu0 0
        %1964 = vmatpush1.bf16.msra.mxu0 0
        %1965 = vmatprep.subr.bf16.mxu0 0
        %1966 = vmatpush1.bf16.msra.mxu0 0
        %1967 = vmatprep.subr.bf16.mxu0 0
        %1968 = vmatpush1.bf16.msra.mxu0 0
        %1969 = vmatprep.mubr.bf16.mxu0 0
        %1970 = vmatmul.mubr.bf16.gmra.mrb[0].mxu0 %v1935
        %v1971 = vpop.f32.mrb[0].mxu0
        %v1972 = vadd.f32 %v1908, %v1971
        %v1973 = vpop.f32.mrb[0].mxu0
        %v1974 = vpop.f32.mrb[0].mxu0
        %v1975 = vpop.f32.mrb[0].mxu0
        %1976 = vdwg.mxu0
        %v1977 = vadd.f32 %v1972, %v758
        %s1978 = scalar_lea.vmem %s630, 8
        %v1979 = vld [vmem:[%s1978] sm:$0xff]
        %v1980 = vpack.c.bf16 %v1979, %v1979
        %v1982 = vsel %vm1933, %v1980, 0
        %1984 = vmatprep.subr.bf16.mxu0 0
        %1985 = vmatpush1.bf16.msra.mxu0 %v1925
        %1986 = vmatprep.subr.bf16.mxu0 0
        %1987 = vmatpush1.bf16.msra.mxu0 %v1926
        %1988 = vmatprep.subr.bf16.mxu0 0
        %1989 = vmatpush1.bf16.msra.mxu0 %v1927
        %1990 = vmatprep.subr.bf16.mxu0 0
        %1991 = vmatpush1.bf16.msra.mxu0 %v1928
        %1992 = vmatprep.subr.bf16.mxu0 0
        %1993 = vmatpush1.bf16.msra.mxu0 0
        %1994 = vmatprep.subr.bf16.mxu0 0
        %1995 = vmatpush1.bf16.msra.mxu0 0
        %1996 = vmatprep.subr.bf16.mxu0 0
        %1997 = vmatpush1.bf16.msra.mxu0 0
        %1998 = vmatprep.subr.bf16.mxu0 0
        %1999 = vmatpush1.bf16.msra.mxu0 0
        %2000 = vmatprep.subr.bf16.mxu0 0
        %2001 = vmatpush1.bf16.msra.mxu0 0
        %2002 = vmatprep.subr.bf16.mxu0 0
        %2003 = vmatpush1.bf16.msra.mxu0 0
        %2004 = vmatprep.subr.bf16.mxu0 0
        %2005 = vmatpush1.bf16.msra.mxu0 0
        %2006 = vmatprep.subr.bf16.mxu0 0
        %2007 = vmatpush1.bf16.msra.mxu0 0
        %2008 = vmatprep.subr.bf16.mxu0 0
        %2009 = vmatpush1.bf16.msra.mxu0 0
        %2010 = vmatprep.subr.bf16.mxu0 0
        %2011 = vmatpush1.bf16.msra.mxu0 0
        %2012 = vmatprep.subr.bf16.mxu0 0
        %2013 = vmatpush1.bf16.msra.mxu0 0
        %2014 = vmatprep.subr.bf16.mxu0 0
        %2015 = vmatpush1.bf16.msra.mxu0 0
        %2016 = vmatprep.mubr.bf16.mxu0 0
        %2017 = vmatmul.mubr.bf16.gmra.mrb[0].mxu0 %v1982
        %v2018 = vpop.f32.mrb[0].mxu0
        %v2019 = vadd.f32 %v1908, %v2018
        %v2020 = vpop.f32.mrb[0].mxu0
        %v2021 = vpop.f32.mrb[0].mxu0
        %v2022 = vpop.f32.mrb[0].mxu0
        %2023 = vdwg.mxu0
        %v2024 = vadd.f32 %v2019, %v758
        %v2025 = vrot.slane %v2024, 7
        %v2026 = vsel %vm766, 0.0, %v2025
        %v2027 = vld [vmem:[%s8] sm:$0xf]
        %v2028 = vld [vmem:[%s8 + $0x4] sm:$0xf]
        %v2029 = vld [vmem:[%s8 + $0x8] sm:$0xf]
        %v2030 = vld [vmem:[%s8 + $0xc] sm:$0xf]
        %v2031 = vld [vmem:[%s8 + $0x10] sm:$0xf]
        %v2032 = vld [vmem:[%s8 + $0x14] sm:$0xf]
        %v2033 = vld [vmem:[%s8 + $0x18] sm:$0xf]
        %v2034 = vld [vmem:[%s8 + $0x1c] sm:$0xf]
        %v2035 = vld [vmem:[%s8 + $0x20] sm:$0xf]
        %v2036 = vld [vmem:[%s8 + $0x24] sm:$0xf]
        %v2037 = vld [vmem:[%s8 + $0x28] sm:$0xf]
        %v2038 = vld [vmem:[%s8 + $0x2c] sm:$0xf]
        %v2039 = vld [vmem:[%s8 + $0x30] sm:$0xf]
        %v2040 = vld [vmem:[%s8 + $0x34] sm:$0xf]
        %v2041 = vld [vmem:[%s8 + $0x38] sm:$0xf]
        %v2042 = vld [vmem:[%s8 + $0x3c] sm:$0xf]
        %v2043 = vpack.c.bf16 %v2026, %v2026
        %s2044 = scalar_lea.vmem %s8, 64
        %v2045 = vld [vmem:[%s2044] sm:$0xf]
        %v2046 = vld [vmem:[%s2044 + $0x4] sm:$0xf]
        %v2047 = vld [vmem:[%s2044 + $0x8] sm:$0xf]
        %v2048 = vld [vmem:[%s2044 + $0xc] sm:$0xf]
        %v2049 = vld [vmem:[%s2044 + $0x10] sm:$0xf]
        %v2050 = vld [vmem:[%s2044 + $0x14] sm:$0xf]
        %v2051 = vld [vmem:[%s2044 + $0x18] sm:$0xf]
        %v2052 = vld [vmem:[%s2044 + $0x1c] sm:$0xf]
        %v2053 = vld [vmem:[%s2044 + $0x20] sm:$0xf]
        %v2054 = vld [vmem:[%s2044 + $0x24] sm:$0xf]
        %v2055 = vld [vmem:[%s2044 + $0x28] sm:$0xf]
        %v2056 = vld [vmem:[%s2044 + $0x2c] sm:$0xf]
        %v2057 = vld [vmem:[%s2044 + $0x30] sm:$0xf]
        %v2058 = vld [vmem:[%s2044 + $0x34] sm:$0xf]
        %v2059 = vld [vmem:[%s2044 + $0x38] sm:$0xf]
        %v2060 = vld [vmem:[%s2044 + $0x3c] sm:$0xf]
        %v2061 = vpack.c.bf16 %v1977, %v1977
        %v2078 = vunpack.c.l.b16 %v2045
        %v2079 = vunpack.c.l.b16 %v2046
        %v2080 = vunpack.c.l.b16 %v2047
        %v2081 = vunpack.c.l.b16 %v2048
        %v2082 = vunpack.c.l.b16 %v2049
        %v2083 = vunpack.c.l.b16 %v2050
        %v2084 = vunpack.c.l.b16 %v2051
        %v2085 = vunpack.c.l.b16 %v2052
        %v2086 = vunpack.c.l.b16 %v2053
        %v2087 = vunpack.c.l.b16 %v2054
        %v2088 = vunpack.c.l.b16 %v2055
        %v2089 = vunpack.c.l.b16 %v2056
        %v2090 = vunpack.c.l.b16 %v2057
        %v2091 = vunpack.c.l.b16 %v2058
        %v2092 = vunpack.c.l.b16 %v2059
        %v2093 = vunpack.c.l.b16 %v2060
        %v2094 = vpack.c.b16 %v2079, %v2078
        %v2095 = vpack.c.b16 %v2081, %v2080
        %v2096 = vpack.c.b16 %v2083, %v2082
        %v2097 = vpack.c.b16 %v2085, %v2084
        %v2098 = vpack.c.b16 %v2087, %v2086
        %v2099 = vpack.c.b16 %v2089, %v2088
        %v2100 = vpack.c.b16 %v2091, %v2090
        %v2101 = vpack.c.b16 %v2093, %v2092
        %2110 = vmatprep.subr.bf16.mxu0 0
        %2111 = vmatpush1.bf16.msra.mxu0 %v2094
        %2112 = vmatprep.subr.bf16.mxu0 0
        %2113 = vmatpush1.bf16.msra.mxu0 %v2095
        %2114 = vmatprep.subr.bf16.mxu0 0
        %2115 = vmatpush1.bf16.msra.mxu0 %v2096
        %2116 = vmatprep.subr.bf16.mxu0 0
        %2117 = vmatpush1.bf16.msra.mxu0 %v2097
        %2118 = vmatprep.subr.bf16.mxu0 0
        %2119 = vmatpush1.bf16.msra.mxu0 %v2098
        %2120 = vmatprep.subr.bf16.mxu0 0
        %2121 = vmatpush1.bf16.msra.mxu0 %v2099
        %2122 = vmatprep.subr.bf16.mxu0 0
        %2123 = vmatpush1.bf16.msra.mxu0 %v2100
        %2124 = vmatprep.subr.bf16.mxu0 0
        %2125 = vmatpush1.bf16.msra.mxu0 %v2101
        %2126 = vmatprep.subr.bf16.mxu0 0
        %2127 = vmatpush1.bf16.msra.mxu0 0
        %2128 = vmatprep.subr.bf16.mxu0 0
        %2129 = vmatpush1.bf16.msra.mxu0 0
        %2130 = vmatprep.subr.bf16.mxu0 0
        %2131 = vmatpush1.bf16.msra.mxu0 0
        %2132 = vmatprep.subr.bf16.mxu0 0
        %2133 = vmatpush1.bf16.msra.mxu0 0
        %2134 = vmatprep.subr.bf16.mxu0 0
        %2135 = vmatpush1.bf16.msra.mxu0 0
        %2136 = vmatprep.subr.bf16.mxu0 0
        %2137 = vmatpush1.bf16.msra.mxu0 0
        %2138 = vmatprep.subr.bf16.mxu0 0
        %2139 = vmatpush1.bf16.msra.mxu0 0
        %2140 = vmatprep.subr.bf16.mxu0 0
        %2141 = vmatpush1.bf16.msra.mxu0 0
        %2142 = vmatprep.mubr.bf16.mxu0 0
        %2143 = vmatmul.mubr.bf16.gmra.mrb[0].mxu0 %v2061
        %v2144 = vpop.f32.mrb[0].mxu0
        %v2145 = vadd.f32 0.0, %v2144
        %v2146 = vpop.f32.mrb[0].mxu0
        %v2147 = vpop.f32.mrb[0].mxu0
        %v2148 = vpop.f32.mrb[0].mxu0
        %2149 = vdwg.mxu0
        %v2166 = vunpack.c.l.b16 %v2027
        %v2167 = vunpack.c.l.b16 %v2028
        %v2168 = vunpack.c.l.b16 %v2029
        %v2169 = vunpack.c.l.b16 %v2030
        %v2170 = vunpack.c.l.b16 %v2031
        %v2171 = vunpack.c.l.b16 %v2032
        %v2172 = vunpack.c.l.b16 %v2033
        %v2173 = vunpack.c.l.b16 %v2034
        %v2174 = vunpack.c.l.b16 %v2035
        %v2175 = vunpack.c.l.b16 %v2036
        %v2176 = vunpack.c.l.b16 %v2037
        %v2177 = vunpack.c.l.b16 %v2038
        %v2178 = vunpack.c.l.b16 %v2039
        %v2179 = vunpack.c.l.b16 %v2040
        %v2180 = vunpack.c.l.b16 %v2041
        %v2181 = vunpack.c.l.b16 %v2042
        %v2182 = vpack.c.b16 %v2167, %v2166
        %v2183 = vpack.c.b16 %v2169, %v2168
        %v2184 = vpack.c.b16 %v2171, %v2170
        %v2185 = vpack.c.b16 %v2173, %v2172
        %v2186 = vpack.c.b16 %v2175, %v2174
        %v2187 = vpack.c.b16 %v2177, %v2176
        %v2188 = vpack.c.b16 %v2179, %v2178
        %v2189 = vpack.c.b16 %v2181, %v2180
        %2198 = vmatprep.subr.bf16.mxu0 0
        %2199 = vmatpush1.bf16.msra.mxu0 %v2182
        %2200 = vmatprep.subr.bf16.mxu0 0
        %2201 = vmatpush1.bf16.msra.mxu0 %v2183
        %2202 = vmatprep.subr.bf16.mxu0 0
        %2203 = vmatpush1.bf16.msra.mxu0 %v2184
        %2204 = vmatprep.subr.bf16.mxu0 0
        %2205 = vmatpush1.bf16.msra.mxu0 %v2185
        %2206 = vmatprep.subr.bf16.mxu0 0
        %2207 = vmatpush1.bf16.msra.mxu0 %v2186
        %2208 = vmatprep.subr.bf16.mxu0 0
        %2209 = vmatpush1.bf16.msra.mxu0 %v2187
        %2210 = vmatprep.subr.bf16.mxu0 0
        %2211 = vmatpush1.bf16.msra.mxu0 %v2188
        %2212 = vmatprep.subr.bf16.mxu0 0
        %2213 = vmatpush1.bf16.msra.mxu0 %v2189
        %2214 = vmatprep.subr.bf16.mxu0 0
        %2215 = vmatpush1.bf16.msra.mxu0 0
        %2216 = vmatprep.subr.bf16.mxu0 0
        %2217 = vmatpush1.bf16.msra.mxu0 0
        %2218 = vmatprep.subr.bf16.mxu0 0
        %2219 = vmatpush1.bf16.msra.mxu0 0
        %2220 = vmatprep.subr.bf16.mxu0 0
        %2221 = vmatpush1.bf16.msra.mxu0 0
        %2222 = vmatprep.subr.bf16.mxu0 0
        %2223 = vmatpush1.bf16.msra.mxu0 0
        %2224 = vmatprep.subr.bf16.mxu0 0
        %2225 = vmatpush1.bf16.msra.mxu0 0
        %2226 = vmatprep.subr.bf16.mxu0 0
        %2227 = vmatpush1.bf16.msra.mxu0 0
        %2228 = vmatprep.subr.bf16.mxu0 0
        %2229 = vmatpush1.bf16.msra.mxu0 0
        %2230 = vmatprep.mubr.bf16.mxu0 0
        %2231 = vmatmul.mubr.bf16.gmra.mrb[0].mxu0 %v2043
        %v2232 = vpop.f32.mrb[0].mxu0
        %v2233 = vadd.f32 %v2145, %v2232
        %v2234 = vpop.f32.mrb[0].mxu0
        %v2235 = vpop.f32.mrb[0].mxu0
        %v2236 = vpop.f32.mrb[0].mxu0
        %2237 = vdwg.mxu0
        %s2238 = scalar_lea.vmem %s8, 128
        %v2239 = vld [vmem:[%s2238] sm:$0xf]
        %v2240 = vld [vmem:[%s2238 + $0x4] sm:$0xf]
        %v2241 = vld [vmem:[%s2238 + $0x8] sm:$0xf]
        %v2242 = vld [vmem:[%s2238 + $0xc] sm:$0xf]
        %v2243 = vld [vmem:[%s2238 + $0x10] sm:$0xf]
        %v2244 = vld [vmem:[%s2238 + $0x14] sm:$0xf]
        %v2245 = vld [vmem:[%s2238 + $0x18] sm:$0xf]
        %v2246 = vld [vmem:[%s2238 + $0x1c] sm:$0xf]
        %v2247 = vld [vmem:[%s2238 + $0x20] sm:$0xf]
        %v2248 = vld [vmem:[%s2238 + $0x24] sm:$0xf]
        %v2249 = vld [vmem:[%s2238 + $0x28] sm:$0xf]
        %v2250 = vld [vmem:[%s2238 + $0x2c] sm:$0xf]
        %v2251 = vld [vmem:[%s2238 + $0x30] sm:$0xf]
        %v2252 = vld [vmem:[%s2238 + $0x34] sm:$0xf]
        %v2253 = vld [vmem:[%s2238 + $0x38] sm:$0xf]
        %v2254 = vld [vmem:[%s2238 + $0x3c] sm:$0xf]
        %v2255 = vpack.c.bf16 %v2024, %v2024
        %v2272 = vunpack.c.l.b16 %v2239
        %v2273 = vunpack.c.l.b16 %v2240
        %v2274 = vunpack.c.l.b16 %v2241
        %v2275 = vunpack.c.l.b16 %v2242
        %v2276 = vunpack.c.l.b16 %v2243
        %v2277 = vunpack.c.l.b16 %v2244
        %v2278 = vunpack.c.l.b16 %v2245
        %v2279 = vunpack.c.l.b16 %v2246
        %v2280 = vunpack.c.l.b16 %v2247
        %v2281 = vunpack.c.l.b16 %v2248
        %v2282 = vunpack.c.l.b16 %v2249
        %v2283 = vunpack.c.l.b16 %v2250
        %v2284 = vunpack.c.l.b16 %v2251
        %v2285 = vunpack.c.l.b16 %v2252
        %v2286 = vunpack.c.l.b16 %v2253
        %v2287 = vunpack.c.l.b16 %v2254
        %v2288 = vpack.c.b16 %v2273, %v2272
        %v2289 = vpack.c.b16 %v2275, %v2274
        %v2290 = vpack.c.b16 %v2277, %v2276
        %v2291 = vpack.c.b16 %v2279, %v2278
        %v2292 = vpack.c.b16 %v2281, %v2280
        %v2293 = vpack.c.b16 %v2283, %v2282
        %v2294 = vpack.c.b16 %v2285, %v2284
        %v2295 = vpack.c.b16 %v2287, %v2286
        %2304 = vmatprep.subr.bf16.mxu0 0
        %2305 = vmatpush1.bf16.msra.mxu0 %v2288
        %2306 = vmatprep.subr.bf16.mxu0 0
        %2307 = vmatpush1.bf16.msra.mxu0 %v2289
        %2308 = vmatprep.subr.bf16.mxu0 0
        %2309 = vmatpush1.bf16.msra.mxu0 %v2290
        %2310 = vmatprep.subr.bf16.mxu0 0
        %2311 = vmatpush1.bf16.msra.mxu0 %v2291
        %2312 = vmatprep.subr.bf16.mxu0 0
        %2313 = vmatpush1.bf16.msra.mxu0 %v2292
        %2314 = vmatprep.subr.bf16.mxu0 0
        %2315 = vmatpush1.bf16.msra.mxu0 %v2293
        %2316 = vmatprep.subr.bf16.mxu0 0
        %2317 = vmatpush1.bf16.msra.mxu0 %v2294
        %2318 = vmatprep.subr.bf16.mxu0 0
        %2319 = vmatpush1.bf16.msra.mxu0 %v2295
        %2320 = vmatprep.subr.bf16.mxu0 0
        %2321 = vmatpush1.bf16.msra.mxu0 0
        %2322 = vmatprep.subr.bf16.mxu0 0
        %2323 = vmatpush1.bf16.msra.mxu0 0
        %2324 = vmatprep.subr.bf16.mxu0 0
        %2325 = vmatpush1.bf16.msra.mxu0 0
        %2326 = vmatprep.subr.bf16.mxu0 0
        %2327 = vmatpush1.bf16.msra.mxu0 0
        %2328 = vmatprep.subr.bf16.mxu0 0
        %2329 = vmatpush1.bf16.msra.mxu0 0
        %2330 = vmatprep.subr.bf16.mxu0 0
        %2331 = vmatpush1.bf16.msra.mxu0 0
        %2332 = vmatprep.subr.bf16.mxu0 0
        %2333 = vmatpush1.bf16.msra.mxu0 0
        %2334 = vmatprep.subr.bf16.mxu0 0
        %2335 = vmatpush1.bf16.msra.mxu0 0
        %2336 = vmatprep.mubr.bf16.mxu0 0
        %2337 = vmatmul.mubr.bf16.gmra.mrb[0].mxu0 %v2255
        %v2338 = vpop.f32.mrb[0].mxu0
        %v2339 = vadd.f32 0.0, %v2338
        %v2340 = vpop.f32.mrb[0].mxu0
        %v2341 = vpop.f32.mrb[0].mxu0
        %v2342 = vpop.f32.mrb[0].mxu0
        %2343 = vdwg.mxu0
        %v2344 = vadd.f32 %v2233, %v2339
        %v2345 = vlaneseq
        %v2346 = vshrl.u32 %v2345, 7
        %v2347 = vsub.s32 3, %v2346
        %v2348 = vrot.slane %v652, %v2347
        %v2349 = vadd.f32 %v2344, %v2348
        %2350 = vst [vmem:[%s645] sm:$0xff] %v2349
        %v2351 = vld [vmem:[%s8] sm:$0xf]
        %v2352 = vld [vmem:[%s8 + $0x4] sm:$0xf]
        %v2353 = vld [vmem:[%s8 + $0x8] sm:$0xf]
        %v2354 = vld [vmem:[%s8 + $0xc] sm:$0xf]
        %v2355 = vld [vmem:[%s8 + $0x10] sm:$0xf]
        %v2356 = vld [vmem:[%s8 + $0x14] sm:$0xf]
        %v2357 = vld [vmem:[%s8 + $0x18] sm:$0xf]
        %v2358 = vld [vmem:[%s8 + $0x1c] sm:$0xf]
        %v2359 = vld [vmem:[%s8 + $0x20] sm:$0xf]
        %v2360 = vld [vmem:[%s8 + $0x24] sm:$0xf]
        %v2361 = vld [vmem:[%s8 + $0x28] sm:$0xf]
        %v2362 = vld [vmem:[%s8 + $0x2c] sm:$0xf]
        %v2363 = vld [vmem:[%s8 + $0x30] sm:$0xf]
        %v2364 = vld [vmem:[%s8 + $0x34] sm:$0xf]
        %v2365 = vld [vmem:[%s8 + $0x38] sm:$0xf]
        %v2366 = vld [vmem:[%s8 + $0x3c] sm:$0xf]
        %v2367 = vld [vmem:[%s2044] sm:$0xf]
        %v2368 = vld [vmem:[%s2044 + $0x4] sm:$0xf]
        %v2369 = vld [vmem:[%s2044 + $0x8] sm:$0xf]
        %v2370 = vld [vmem:[%s2044 + $0xc] sm:$0xf]
        %v2371 = vld [vmem:[%s2044 + $0x10] sm:$0xf]
        %v2372 = vld [vmem:[%s2044 + $0x14] sm:$0xf]
        %v2373 = vld [vmem:[%s2044 + $0x18] sm:$0xf]
        %v2374 = vld [vmem:[%s2044 + $0x1c] sm:$0xf]
        %v2375 = vld [vmem:[%s2044 + $0x20] sm:$0xf]
        %v2376 = vld [vmem:[%s2044 + $0x24] sm:$0xf]
        %v2377 = vld [vmem:[%s2044 + $0x28] sm:$0xf]
        %v2378 = vld [vmem:[%s2044 + $0x2c] sm:$0xf]
        %v2379 = vld [vmem:[%s2044 + $0x30] sm:$0xf]
        %v2380 = vld [vmem:[%s2044 + $0x34] sm:$0xf]
        %v2381 = vld [vmem:[%s2044 + $0x38] sm:$0xf]
        %v2382 = vld [vmem:[%s2044 + $0x3c] sm:$0xf]
        %v2399 = vunpack.c.l.b16 %v2367
        %v2400 = vunpack.c.l.b16 %v2368
        %v2401 = vunpack.c.l.b16 %v2369
        %v2402 = vunpack.c.l.b16 %v2370
        %v2403 = vunpack.c.l.b16 %v2371
        %v2404 = vunpack.c.l.b16 %v2372
        %v2405 = vunpack.c.l.b16 %v2373
        %v2406 = vunpack.c.l.b16 %v2374
        %v2407 = vunpack.c.l.b16 %v2375
        %v2408 = vunpack.c.l.b16 %v2376
        %v2409 = vunpack.c.l.b16 %v2377
        %v2410 = vunpack.c.l.b16 %v2378
        %v2411 = vunpack.c.l.b16 %v2379
        %v2412 = vunpack.c.l.b16 %v2380
        %v2413 = vunpack.c.l.b16 %v2381
        %v2414 = vunpack.c.l.b16 %v2382
        %v2415 = vpack.c.b16 %v2400, %v2399
        %v2416 = vpack.c.b16 %v2402, %v2401
        %v2417 = vpack.c.b16 %v2404, %v2403
        %v2418 = vpack.c.b16 %v2406, %v2405
        %v2419 = vpack.c.b16 %v2408, %v2407
        %v2420 = vpack.c.b16 %v2410, %v2409
        %v2421 = vpack.c.b16 %v2412, %v2411
        %v2422 = vpack.c.b16 %v2414, %v2413
        %2431 = vmatprep.subr.bf16.mxu0 0
        %2432 = vmatpush1.bf16.msra.mxu0 %v2415
        %2433 = vmatprep.subr.bf16.mxu0 0
        %2434 = vmatpush1.bf16.msra.mxu0 %v2416
        %2435 = vmatprep.subr.bf16.mxu0 0
        %2436 = vmatpush1.bf16.msra.mxu0 %v2417
        %2437 = vmatprep.subr.bf16.mxu0 0
        %2438 = vmatpush1.bf16.msra.mxu0 %v2418
        %2439 = vmatprep.subr.bf16.mxu0 0
        %2440 = vmatpush1.bf16.msra.mxu0 %v2419
        %2441 = vmatprep.subr.bf16.mxu0 0
        %2442 = vmatpush1.bf16.msra.mxu0 %v2420
        %2443 = vmatprep.subr.bf16.mxu0 0
        %2444 = vmatpush1.bf16.msra.mxu0 %v2421
        %2445 = vmatprep.subr.bf16.mxu0 0
        %2446 = vmatpush1.bf16.msra.mxu0 %v2422
        %2447 = vmatprep.subr.bf16.mxu0 0
        %2448 = vmatpush1.bf16.msra.mxu0 0
        %2449 = vmatprep.subr.bf16.mxu0 0
        %2450 = vmatpush1.bf16.msra.mxu0 0
        %2451 = vmatprep.subr.bf16.mxu0 0
        %2452 = vmatpush1.bf16.msra.mxu0 0
        %2453 = vmatprep.subr.bf16.mxu0 0
        %2454 = vmatpush1.bf16.msra.mxu0 0
        %2455 = vmatprep.subr.bf16.mxu0 0
        %2456 = vmatpush1.bf16.msra.mxu0 0
        %2457 = vmatprep.subr.bf16.mxu0 0
        %2458 = vmatpush1.bf16.msra.mxu0 0
        %2459 = vmatprep.subr.bf16.mxu0 0
        %2460 = vmatpush1.bf16.msra.mxu0 0
        %2461 = vmatprep.subr.bf16.mxu0 0
        %2462 = vmatpush1.bf16.msra.mxu0 0
        %2463 = vmatprep.mubr.bf16.mxu0 0
        %2464 = vmatmul.mubr.bf16.gmra.mrb[0].mxu0 %v2255
        %v2465 = vpop.f32.mrb[0].mxu0
        %v2466 = vadd.f32 0.0, %v2465
        %v2467 = vpop.f32.mrb[0].mxu0
        %v2468 = vpop.f32.mrb[0].mxu0
        %v2469 = vpop.f32.mrb[0].mxu0
        %2470 = vdwg.mxu0
        %v2487 = vunpack.c.l.b16 %v2351
        %v2488 = vunpack.c.l.b16 %v2352
        %v2489 = vunpack.c.l.b16 %v2353
        %v2490 = vunpack.c.l.b16 %v2354
        %v2491 = vunpack.c.l.b16 %v2355
        %v2492 = vunpack.c.l.b16 %v2356
        %v2493 = vunpack.c.l.b16 %v2357
        %v2494 = vunpack.c.l.b16 %v2358
        %v2495 = vunpack.c.l.b16 %v2359
        %v2496 = vunpack.c.l.b16 %v2360
        %v2497 = vunpack.c.l.b16 %v2361
        %v2498 = vunpack.c.l.b16 %v2362
        %v2499 = vunpack.c.l.b16 %v2363
        %v2500 = vunpack.c.l.b16 %v2364
        %v2501 = vunpack.c.l.b16 %v2365
        %v2502 = vunpack.c.l.b16 %v2366
        %v2503 = vpack.c.b16 %v2488, %v2487
        %v2504 = vpack.c.b16 %v2490, %v2489
        %v2505 = vpack.c.b16 %v2492, %v2491
        %v2506 = vpack.c.b16 %v2494, %v2493
        %v2507 = vpack.c.b16 %v2496, %v2495
        %v2508 = vpack.c.b16 %v2498, %v2497
        %v2509 = vpack.c.b16 %v2500, %v2499
        %v2510 = vpack.c.b16 %v2502, %v2501
        %2519 = vmatprep.subr.bf16.mxu0 0
        %2520 = vmatpush1.bf16.msra.mxu0 %v2503
        %2521 = vmatprep.subr.bf16.mxu0 0
        %2522 = vmatpush1.bf16.msra.mxu0 %v2504
        %2523 = vmatprep.subr.bf16.mxu0 0
        %2524 = vmatpush1.bf16.msra.mxu0 %v2505
        %2525 = vmatprep.subr.bf16.mxu0 0
        %2526 = vmatpush1.bf16.msra.mxu0 %v2506
        %2527 = vmatprep.subr.bf16.mxu0 0
        %2528 = vmatpush1.bf16.msra.mxu0 %v2507
        %2529 = vmatprep.subr.bf16.mxu0 0
        %2530 = vmatpush1.bf16.msra.mxu0 %v2508
        %2531 = vmatprep.subr.bf16.mxu0 0
        %2532 = vmatpush1.bf16.msra.mxu0 %v2509
        %2533 = vmatprep.subr.bf16.mxu0 0
        %2534 = vmatpush1.bf16.msra.mxu0 %v2510
        %2535 = vmatprep.subr.bf16.mxu0 0
        %2536 = vmatpush1.bf16.msra.mxu0 0
        %2537 = vmatprep.subr.bf16.mxu0 0
        %2538 = vmatpush1.bf16.msra.mxu0 0
        %2539 = vmatprep.subr.bf16.mxu0 0
        %2540 = vmatpush1.bf16.msra.mxu0 0
        %2541 = vmatprep.subr.bf16.mxu0 0
        %2542 = vmatpush1.bf16.msra.mxu0 0
        %2543 = vmatprep.subr.bf16.mxu0 0
        %2544 = vmatpush1.bf16.msra.mxu0 0
        %2545 = vmatprep.subr.bf16.mxu0 0
        %2546 = vmatpush1.bf16.msra.mxu0 0
        %2547 = vmatprep.subr.bf16.mxu0 0
        %2548 = vmatpush1.bf16.msra.mxu0 0
        %2549 = vmatprep.subr.bf16.mxu0 0
        %2550 = vmatpush1.bf16.msra.mxu0 0
        %2551 = vmatprep.mubr.bf16.mxu0 0
        %2552 = vmatmul.mubr.bf16.gmra.mrb[0].mxu0 %v2061
        %v2553 = vpop.f32.mrb[0].mxu0
        %v2554 = vadd.f32 %v2466, %v2553
        %v2555 = vpop.f32.mrb[0].mxu0
        %v2556 = vpop.f32.mrb[0].mxu0
        %v2557 = vpop.f32.mrb[0].mxu0
        %2558 = vdwg.mxu0
        %v2559 = vrot.slane %v1977, 1
        %v2560 = vsel %vm980, 0.0, %v2559
        %v2561 = vld [vmem:[%s2238] sm:$0xf]
        %v2562 = vld [vmem:[%s2238 + $0x4] sm:$0xf]
        %v2563 = vld [vmem:[%s2238 + $0x8] sm:$0xf]
        %v2564 = vld [vmem:[%s2238 + $0xc] sm:$0xf]
        %v2565 = vld [vmem:[%s2238 + $0x10] sm:$0xf]
        %v2566 = vld [vmem:[%s2238 + $0x14] sm:$0xf]
        %v2567 = vld [vmem:[%s2238 + $0x18] sm:$0xf]
        %v2568 = vld [vmem:[%s2238 + $0x1c] sm:$0xf]
        %v2569 = vld [vmem:[%s2238 + $0x20] sm:$0xf]
        %v2570 = vld [vmem:[%s2238 + $0x24] sm:$0xf]
        %v2571 = vld [vmem:[%s2238 + $0x28] sm:$0xf]
        %v2572 = vld [vmem:[%s2238 + $0x2c] sm:$0xf]
        %v2573 = vld [vmem:[%s2238 + $0x30] sm:$0xf]
        %v2574 = vld [vmem:[%s2238 + $0x34] sm:$0xf]
        %v2575 = vld [vmem:[%s2238 + $0x38] sm:$0xf]
        %v2576 = vld [vmem:[%s2238 + $0x3c] sm:$0xf]
        %v2577 = vpack.c.bf16 %v2560, %v2560
        %v2594 = vunpack.c.l.b16 %v2561
        %v2595 = vunpack.c.l.b16 %v2562
        %v2596 = vunpack.c.l.b16 %v2563
        %v2597 = vunpack.c.l.b16 %v2564
        %v2598 = vunpack.c.l.b16 %v2565
        %v2599 = vunpack.c.l.b16 %v2566
        %v2600 = vunpack.c.l.b16 %v2567
        %v2601 = vunpack.c.l.b16 %v2568
        %v2602 = vunpack.c.l.b16 %v2569
        %v2603 = vunpack.c.l.b16 %v2570
        %v2604 = vunpack.c.l.b16 %v2571
        %v2605 = vunpack.c.l.b16 %v2572
        %v2606 = vunpack.c.l.b16 %v2573
        %v2607 = vunpack.c.l.b16 %v2574
        %v2608 = vunpack.c.l.b16 %v2575
        %v2609 = vunpack.c.l.b16 %v2576
        %v2610 = vpack.c.b16 %v2595, %v2594
        %v2611 = vpack.c.b16 %v2597, %v2596
        %v2612 = vpack.c.b16 %v2599, %v2598
        %v2613 = vpack.c.b16 %v2601, %v2600
        %v2614 = vpack.c.b16 %v2603, %v2602
        %v2615 = vpack.c.b16 %v2605, %v2604
        %v2616 = vpack.c.b16 %v2607, %v2606
        %v2617 = vpack.c.b16 %v2609, %v2608
        %2626 = vmatprep.subr.bf16.mxu0 0
        %2627 = vmatpush1.bf16.msra.mxu0 %v2610
        %2628 = vmatprep.subr.bf16.mxu0 0
        %2629 = vmatpush1.bf16.msra.mxu0 %v2611
        %2630 = vmatprep.subr.bf16.mxu0 0
        %2631 = vmatpush1.bf16.msra.mxu0 %v2612
        %2632 = vmatprep.subr.bf16.mxu0 0
        %2633 = vmatpush1.bf16.msra.mxu0 %v2613
        %2634 = vmatprep.subr.bf16.mxu0 0
        %2635 = vmatpush1.bf16.msra.mxu0 %v2614
        %2636 = vmatprep.subr.bf16.mxu0 0
        %2637 = vmatpush1.bf16.msra.mxu0 %v2615
        %2638 = vmatprep.subr.bf16.mxu0 0
        %2639 = vmatpush1.bf16.msra.mxu0 %v2616
        %2640 = vmatprep.subr.bf16.mxu0 0
        %2641 = vmatpush1.bf16.msra.mxu0 %v2617
        %2642 = vmatprep.subr.bf16.mxu0 0
        %2643 = vmatpush1.bf16.msra.mxu0 0
        %2644 = vmatprep.subr.bf16.mxu0 0
        %2645 = vmatpush1.bf16.msra.mxu0 0
        %2646 = vmatprep.subr.bf16.mxu0 0
        %2647 = vmatpush1.bf16.msra.mxu0 0
        %2648 = vmatprep.subr.bf16.mxu0 0
        %2649 = vmatpush1.bf16.msra.mxu0 0
        %2650 = vmatprep.subr.bf16.mxu0 0
        %2651 = vmatpush1.bf16.msra.mxu0 0
        %2652 = vmatprep.subr.bf16.mxu0 0
        %2653 = vmatpush1.bf16.msra.mxu0 0
        %2654 = vmatprep.subr.bf16.mxu0 0
        %2655 = vmatpush1.bf16.msra.mxu0 0
        %2656 = vmatprep.subr.bf16.mxu0 0
        %2657 = vmatpush1.bf16.msra.mxu0 0
        %2658 = vmatprep.mubr.bf16.mxu0 0
        %2659 = vmatmul.mubr.bf16.gmra.mrb[0].mxu0 %v2577
        %v2660 = vpop.f32.mrb[0].mxu0
        %v2661 = vadd.f32 0.0, %v2660
        %v2662 = vpop.f32.mrb[0].mxu0
        %v2663 = vpop.f32.mrb[0].mxu0
        %v2664 = vpop.f32.mrb[0].mxu0
        %2665 = vdwg.mxu0
        %v2666 = vadd.f32 %v2554, %v2661
        %v2667 = vadd.f32 %v2666, %v2348
        %s2668 = scalar_lea.vmem %s645, 8
        %2669 = vst [vmem:[%s2668] sm:$0xff] %v2667
        %v2670 = vld [vmem:[%s635] sm:$0xff]
        %v2671 = vld [vmem:[%s6] sm:$0xf]
        %v2672 = vld [vmem:[%s6 + $0x4] sm:$0xf]
        %v2673 = vld [vmem:[%s6 + $0x8] sm:$0xf]
        %v2674 = vld [vmem:[%s6 + $0xc] sm:$0xf]
        %v2675 = vpack.c.bf16 %v2670, %v2670
        %v2676 = vlaneseq
        %v2677 = vshrl.u32 %v2676, 7
        %v2678 = vsub.s32 4, %v2677
        %v2679 = vrot.slane %v652, %v2678
        %v2684 = vunpack.c.l.b16 %v2671
        %v2685 = vunpack.c.l.b16 %v2672
        %v2686 = vunpack.c.l.b16 %v2673
        %v2687 = vunpack.c.l.b16 %v2674
        %v2688 = vpack.c.b16 %v2685, %v2684
        %v2689 = vpack.c.b16 %v2687, %v2686
        %vm2692 = vcmask 261120
        %v2694 = vsel %vm2692, %v2675, 0
        %2696 = vmatprep.subr.bf16.mxu0 0
        %2697 = vmatpush1.bf16.msra.mxu0 %v2688
        %2698 = vmatprep.subr.bf16.mxu0 0
        %2699 = vmatpush1.bf16.msra.mxu0 %v2689
        %2700 = vmatprep.subr.bf16.mxu0 0
        %2701 = vmatpush1.bf16.msra.mxu0 0
        %2702 = vmatprep.subr.bf16.mxu0 0
        %2703 = vmatpush1.bf16.msra.mxu0 0
        %2704 = vmatprep.subr.bf16.mxu0 0
        %2705 = vmatpush1.bf16.msra.mxu0 0
        %2706 = vmatprep.subr.bf16.mxu0 0
        %2707 = vmatpush1.bf16.msra.mxu0 0
        %2708 = vmatprep.subr.bf16.mxu0 0
        %2709 = vmatpush1.bf16.msra.mxu0 0
        %2710 = vmatprep.subr.bf16.mxu0 0
        %2711 = vmatpush1.bf16.msra.mxu0 0
        %2712 = vmatprep.subr.bf16.mxu0 0
        %2713 = vmatpush1.bf16.msra.mxu0 0
        %2714 = vmatprep.subr.bf16.mxu0 0
        %2715 = vmatpush1.bf16.msra.mxu0 0
        %2716 = vmatprep.subr.bf16.mxu0 0
        %2717 = vmatpush1.bf16.msra.mxu0 0
        %2718 = vmatprep.subr.bf16.mxu0 0
        %2719 = vmatpush1.bf16.msra.mxu0 0
        %2720 = vmatprep.subr.bf16.mxu0 0
        %2721 = vmatpush1.bf16.msra.mxu0 0
        %2722 = vmatprep.subr.bf16.mxu0 0
        %2723 = vmatpush1.bf16.msra.mxu0 0
        %2724 = vmatprep.subr.bf16.mxu0 0
        %2725 = vmatpush1.bf16.msra.mxu0 0
        %2726 = vmatprep.subr.bf16.mxu0 0
        %2727 = vmatpush1.bf16.msra.mxu0 0
        %2728 = vmatprep.mubr.bf16.mxu0 0
        %2729 = vmatmul.mubr.bf16.gmra.mrb[0].mxu0 %v2694
        %v2730 = vpop.f32.mrb[0].mxu0
        %v2731 = vadd.f32 %v2679, %v2730
        %v2732 = vpop.f32.mrb[0].mxu0
        %v2733 = vpop.f32.mrb[0].mxu0
        %v2734 = vpop.f32.mrb[0].mxu0
        %2735 = vdwg.mxu0
        %v2736 = vadd.f32 %v2731, %v1977
        %s2737 = scalar_lea.vmem %s635, 8
        %v2738 = vld [vmem:[%s2737] sm:$0xff]
        %v2739 = vpack.c.bf16 %v2738, %v2738
        %v2741 = vsel %vm2692, %v2739, 0
        %2743 = vmatprep.subr.bf16.mxu0 0
        %2744 = vmatpush1.bf16.msra.mxu0 %v2688
        %2745 = vmatprep.subr.bf16.mxu0 0
        %2746 = vmatpush1.bf16.msra.mxu0 %v2689
        %2747 = vmatprep.subr.bf16.mxu0 0
        %2748 = vmatpush1.bf16.msra.mxu0 0
        %2749 = vmatprep.subr.bf16.mxu0 0
        %2750 = vmatpush1.bf16.msra.mxu0 0
        %2751 = vmatprep.subr.bf16.mxu0 0
        %2752 = vmatpush1.bf16.msra.mxu0 0
        %2753 = vmatprep.subr.bf16.mxu0 0
        %2754 = vmatpush1.bf16.msra.mxu0 0
        %2755 = vmatprep.subr.bf16.mxu0 0
        %2756 = vmatpush1.bf16.msra.mxu0 0
        %2757 = vmatprep.subr.bf16.mxu0 0
        %2758 = vmatpush1.bf16.msra.mxu0 0
        %2759 = vmatprep.subr.bf16.mxu0 0
        %2760 = vmatpush1.bf16.msra.mxu0 0
        %2761 = vmatprep.subr.bf16.mxu0 0
        %2762 = vmatpush1.bf16.msra.mxu0 0
        %2763 = vmatprep.subr.bf16.mxu0 0
        %2764 = vmatpush1.bf16.msra.mxu0 0
        %2765 = vmatprep.subr.bf16.mxu0 0
        %2766 = vmatpush1.bf16.msra.mxu0 0
        %2767 = vmatprep.subr.bf16.mxu0 0
        %2768 = vmatpush1.bf16.msra.mxu0 0
        %2769 = vmatprep.subr.bf16.mxu0 0
        %2770 = vmatpush1.bf16.msra.mxu0 0
        %2771 = vmatprep.subr.bf16.mxu0 0
        %2772 = vmatpush1.bf16.msra.mxu0 0
        %2773 = vmatprep.subr.bf16.mxu0 0
        %2774 = vmatpush1.bf16.msra.mxu0 0
        %2775 = vmatprep.mubr.bf16.mxu0 0
        %2776 = vmatmul.mubr.bf16.gmra.mrb[0].mxu0 %v2741
        %v2777 = vpop.f32.mrb[0].mxu0
        %v2778 = vadd.f32 %v2679, %v2777
        %v2779 = vpop.f32.mrb[0].mxu0
        %v2780 = vpop.f32.mrb[0].mxu0
        %v2781 = vpop.f32.mrb[0].mxu0
        %2782 = vdwg.mxu0
        %v2783 = vadd.f32 %v2778, %v1977
        %s2784 = scalar_lea.vmem %s635, 16
        %v2785 = vld [vmem:[%s2784] sm:$0xff]
        %v2786 = vpack.c.bf16 %v2785, %v2785
        %v2788 = vsel %vm2692, %v2786, 0
        %2790 = vmatprep.subr.bf16.mxu0 0
        %2791 = vmatpush1.bf16.msra.mxu0 %v2688
        %2792 = vmatprep.subr.bf16.mxu0 0
        %2793 = vmatpush1.bf16.msra.mxu0 %v2689
        %2794 = vmatprep.subr.bf16.mxu0 0
        %2795 = vmatpush1.bf16.msra.mxu0 0
        %2796 = vmatprep.subr.bf16.mxu0 0
        %2797 = vmatpush1.bf16.msra.mxu0 0
        %2798 = vmatprep.subr.bf16.mxu0 0
        %2799 = vmatpush1.bf16.msra.mxu0 0
        %2800 = vmatprep.subr.bf16.mxu0 0
        %2801 = vmatpush1.bf16.msra.mxu0 0
        %2802 = vmatprep.subr.bf16.mxu0 0
        %2803 = vmatpush1.bf16.msra.mxu0 0
        %2804 = vmatprep.subr.bf16.mxu0 0
        %2805 = vmatpush1.bf16.msra.mxu0 0
        %2806 = vmatprep.subr.bf16.mxu0 0
        %2807 = vmatpush1.bf16.msra.mxu0 0
        %2808 = vmatprep.subr.bf16.mxu0 0
        %2809 = vmatpush1.bf16.msra.mxu0 0
        %2810 = vmatprep.subr.bf16.mxu0 0
        %2811 = vmatpush1.bf16.msra.mxu0 0
        %2812 = vmatprep.subr.bf16.mxu0 0
        %2813 = vmatpush1.bf16.msra.mxu0 0
        %2814 = vmatprep.subr.bf16.mxu0 0
        %2815 = vmatpush1.bf16.msra.mxu0 0
        %2816 = vmatprep.subr.bf16.mxu0 0
        %2817 = vmatpush1.bf16.msra.mxu0 0
        %2818 = vmatprep.subr.bf16.mxu0 0
        %2819 = vmatpush1.bf16.msra.mxu0 0
        %2820 = vmatprep.subr.bf16.mxu0 0
        %2821 = vmatpush1.bf16.msra.mxu0 0
        %2822 = vmatprep.mubr.bf16.mxu0 0
        %2823 = vmatmul.mubr.bf16.gmra.mrb[0].mxu0 %v2788
        %v2824 = vpop.f32.mrb[0].mxu0
        %v2825 = vadd.f32 %v2679, %v2824
        %v2826 = vpop.f32.mrb[0].mxu0
        %v2827 = vpop.f32.mrb[0].mxu0
        %v2828 = vpop.f32.mrb[0].mxu0
        %2829 = vdwg.mxu0
        %v2830 = vadd.f32 %v2825, %v2024
        %s2831 = scalar_lea.vmem %s635, 24
        %v2832 = vld [vmem:[%s2831] sm:$0xff]
        %v2833 = vpack.c.bf16 %v2832, %v2832
        %v2835 = vsel %vm2692, %v2833, 0
        %2837 = vmatprep.subr.bf16.mxu0 0
        %2838 = vmatpush1.bf16.msra.mxu0 %v2688
        %2839 = vmatprep.subr.bf16.mxu0 0
        %2840 = vmatpush1.bf16.msra.mxu0 %v2689
        %2841 = vmatprep.subr.bf16.mxu0 0
        %2842 = vmatpush1.bf16.msra.mxu0 0
        %2843 = vmatprep.subr.bf16.mxu0 0
        %2844 = vmatpush1.bf16.msra.mxu0 0
        %2845 = vmatprep.subr.bf16.mxu0 0
        %2846 = vmatpush1.bf16.msra.mxu0 0
        %2847 = vmatprep.subr.bf16.mxu0 0
        %2848 = vmatpush1.bf16.msra.mxu0 0
        %2849 = vmatprep.subr.bf16.mxu0 0
        %2850 = vmatpush1.bf16.msra.mxu0 0
        %2851 = vmatprep.subr.bf16.mxu0 0
        %2852 = vmatpush1.bf16.msra.mxu0 0
        %2853 = vmatprep.subr.bf16.mxu0 0
        %2854 = vmatpush1.bf16.msra.mxu0 0
        %2855 = vmatprep.subr.bf16.mxu0 0
        %2856 = vmatpush1.bf16.msra.mxu0 0
        %2857 = vmatprep.subr.bf16.mxu0 0
        %2858 = vmatpush1.bf16.msra.mxu0 0
        %2859 = vmatprep.subr.bf16.mxu0 0
        %2860 = vmatpush1.bf16.msra.mxu0 0
        %2861 = vmatprep.subr.bf16.mxu0 0
        %2862 = vmatpush1.bf16.msra.mxu0 0
        %2863 = vmatprep.subr.bf16.mxu0 0
        %2864 = vmatpush1.bf16.msra.mxu0 0
        %2865 = vmatprep.subr.bf16.mxu0 0
        %2866 = vmatpush1.bf16.msra.mxu0 0
        %2867 = vmatprep.subr.bf16.mxu0 0
        %2868 = vmatpush1.bf16.msra.mxu0 0
        %2869 = vmatprep.mubr.bf16.mxu0 0
        %2870 = vmatmul.mubr.bf16.gmra.mrb[0].mxu0 %v2835
        %v2871 = vpop.f32.mrb[0].mxu0
        %v2872 = vadd.f32 %v2679, %v2871
        %v2873 = vpop.f32.mrb[0].mxu0
        %v2874 = vpop.f32.mrb[0].mxu0
        %v2875 = vpop.f32.mrb[0].mxu0
        %2876 = vdwg.mxu0
        %v2877 = vadd.f32 %v2872, %v2024
        %v2878 = vrot.slane %v2877, 7
        %v2879 = vsel %vm766, 0.0, %v2878
        %v2880 = vld [vmem:[%s9] sm:$0xf]
        %v2881 = vld [vmem:[%s9 + $0x4] sm:$0xf]
        %v2882 = vld [vmem:[%s9 + $0x8] sm:$0xf]
        %v2883 = vld [vmem:[%s9 + $0xc] sm:$0xf]
        %v2884 = vld [vmem:[%s9 + $0x10] sm:$0xf]
        %v2885 = vld [vmem:[%s9 + $0x14] sm:$0xf]
        %v2886 = vld [vmem:[%s9 + $0x18] sm:$0xf]
        %v2887 = vld [vmem:[%s9 + $0x1c] sm:$0xf]
        %v2888 = vld [vmem:[%s9 + $0x20] sm:$0xf]
        %v2889 = vld [vmem:[%s9 + $0x24] sm:$0xf]
        %v2890 = vld [vmem:[%s9 + $0x28] sm:$0xf]
        %v2891 = vld [vmem:[%s9 + $0x2c] sm:$0xf]
        %v2892 = vld [vmem:[%s9 + $0x30] sm:$0xf]
        %v2893 = vld [vmem:[%s9 + $0x34] sm:$0xf]
        %v2894 = vld [vmem:[%s9 + $0x38] sm:$0xf]
        %v2895 = vld [vmem:[%s9 + $0x3c] sm:$0xf]
        %v2896 = vpack.c.bf16 %v2879, %v2879
        %s2897 = scalar_lea.vmem %s9, 64
        %v2898 = vld [vmem:[%s2897] sm:$0xf]
        %v2899 = vld [vmem:[%s2897 + $0x4] sm:$0xf]
        %v2900 = vld [vmem:[%s2897 + $0x8] sm:$0xf]
        %v2901 = vld [vmem:[%s2897 + $0xc] sm:$0xf]
        %v2902 = vld [vmem:[%s2897 + $0x10] sm:$0xf]
        %v2903 = vld [vmem:[%s2897 + $0x14] sm:$0xf]
        %v2904 = vld [vmem:[%s2897 + $0x18] sm:$0xf]
        %v2905 = vld [vmem:[%s2897 + $0x1c] sm:$0xf]
        %v2906 = vld [vmem:[%s2897 + $0x20] sm:$0xf]
        %v2907 = vld [vmem:[%s2897 + $0x24] sm:$0xf]
        %v2908 = vld [vmem:[%s2897 + $0x28] sm:$0xf]
        %v2909 = vld [vmem:[%s2897 + $0x2c] sm:$0xf]
        %v2910 = vld [vmem:[%s2897 + $0x30] sm:$0xf]
        %v2911 = vld [vmem:[%s2897 + $0x34] sm:$0xf]
        %v2912 = vld [vmem:[%s2897 + $0x38] sm:$0xf]
        %v2913 = vld [vmem:[%s2897 + $0x3c] sm:$0xf]
        %v2914 = vpack.c.bf16 %v2736, %v2736
        %v2931 = vunpack.c.l.b16 %v2898
        %v2932 = vunpack.c.l.b16 %v2899
        %v2933 = vunpack.c.l.b16 %v2900
        %v2934 = vunpack.c.l.b16 %v2901
        %v2935 = vunpack.c.l.b16 %v2902
        %v2936 = vunpack.c.l.b16 %v2903
        %v2937 = vunpack.c.l.b16 %v2904
        %v2938 = vunpack.c.l.b16 %v2905
        %v2939 = vunpack.c.l.b16 %v2906
        %v2940 = vunpack.c.l.b16 %v2907
        %v2941 = vunpack.c.l.b16 %v2908
        %v2942 = vunpack.c.l.b16 %v2909
        %v2943 = vunpack.c.l.b16 %v2910
        %v2944 = vunpack.c.l.b16 %v2911
        %v2945 = vunpack.c.l.b16 %v2912
        %v2946 = vunpack.c.l.b16 %v2913
        %v2947 = vpack.c.b16 %v2932, %v2931
        %v2948 = vpack.c.b16 %v2934, %v2933
        %v2949 = vpack.c.b16 %v2936, %v2935
        %v2950 = vpack.c.b16 %v2938, %v2937
        %v2951 = vpack.c.b16 %v2940, %v2939
        %v2952 = vpack.c.b16 %v2942, %v2941
        %v2953 = vpack.c.b16 %v2944, %v2943
        %v2954 = vpack.c.b16 %v2946, %v2945
        %2963 = vmatprep.subr.bf16.mxu0 0
        %2964 = vmatpush1.bf16.msra.mxu0 %v2947
        %2965 = vmatprep.subr.bf16.mxu0 0
        %2966 = vmatpush1.bf16.msra.mxu0 %v2948
        %2967 = vmatprep.subr.bf16.mxu0 0
        %2968 = vmatpush1.bf16.msra.mxu0 %v2949
        %2969 = vmatprep.subr.bf16.mxu0 0
        %2970 = vmatpush1.bf16.msra.mxu0 %v2950
        %2971 = vmatprep.subr.bf16.mxu0 0
        %2972 = vmatpush1.bf16.msra.mxu0 %v2951
        %2973 = vmatprep.subr.bf16.mxu0 0
        %2974 = vmatpush1.bf16.msra.mxu0 %v2952
        %2975 = vmatprep.subr.bf16.mxu0 0
        %2976 = vmatpush1.bf16.msra.mxu0 %v2953
        %2977 = vmatprep.subr.bf16.mxu0 0
        %2978 = vmatpush1.bf16.msra.mxu0 %v2954
        %2979 = vmatprep.subr.bf16.mxu0 0
        %2980 = vmatpush1.bf16.msra.mxu0 0
        %2981 = vmatprep.subr.bf16.mxu0 0
        %2982 = vmatpush1.bf16.msra.mxu0 0
        %2983 = vmatprep.subr.bf16.mxu0 0
        %2984 = vmatpush1.bf16.msra.mxu0 0
        %2985 = vmatprep.subr.bf16.mxu0 0
        %2986 = vmatpush1.bf16.msra.mxu0 0
        %2987 = vmatprep.subr.bf16.mxu0 0
        %2988 = vmatpush1.bf16.msra.mxu0 0
        %2989 = vmatprep.subr.bf16.mxu0 0
        %2990 = vmatpush1.bf16.msra.mxu0 0
        %2991 = vmatprep.subr.bf16.mxu0 0
        %2992 = vmatpush1.bf16.msra.mxu0 0
        %2993 = vmatprep.subr.bf16.mxu0 0
        %2994 = vmatpush1.bf16.msra.mxu0 0
        %2995 = vmatprep.mubr.bf16.mxu0 0
        %2996 = vmatmul.mubr.bf16.gmra.mrb[0].mxu0 %v2914
        %v2997 = vpop.f32.mrb[0].mxu0
        %v2998 = vadd.f32 0.0, %v2997
        %v2999 = vpop.f32.mrb[0].mxu0
        %v3000 = vpop.f32.mrb[0].mxu0
        %v3001 = vpop.f32.mrb[0].mxu0
        %3002 = vdwg.mxu0
        %v3019 = vunpack.c.l.b16 %v2880
        %v3020 = vunpack.c.l.b16 %v2881
        %v3021 = vunpack.c.l.b16 %v2882
        %v3022 = vunpack.c.l.b16 %v2883
        %v3023 = vunpack.c.l.b16 %v2884
        %v3024 = vunpack.c.l.b16 %v2885
        %v3025 = vunpack.c.l.b16 %v2886
        %v3026 = vunpack.c.l.b16 %v2887
        %v3027 = vunpack.c.l.b16 %v2888
        %v3028 = vunpack.c.l.b16 %v2889
        %v3029 = vunpack.c.l.b16 %v2890
        %v3030 = vunpack.c.l.b16 %v2891
        %v3031 = vunpack.c.l.b16 %v2892
        %v3032 = vunpack.c.l.b16 %v2893
        %v3033 = vunpack.c.l.b16 %v2894
        %v3034 = vunpack.c.l.b16 %v2895
        %v3035 = vpack.c.b16 %v3020, %v3019
        %v3036 = vpack.c.b16 %v3022, %v3021
        %v3037 = vpack.c.b16 %v3024, %v3023
        %v3038 = vpack.c.b16 %v3026, %v3025
        %v3039 = vpack.c.b16 %v3028, %v3027
        %v3040 = vpack.c.b16 %v3030, %v3029
        %v3041 = vpack.c.b16 %v3032, %v3031
        %v3042 = vpack.c.b16 %v3034, %v3033
        %3051 = vmatprep.subr.bf16.mxu0 0
        %3052 = vmatpush1.bf16.msra.mxu0 %v3035
        %3053 = vmatprep.subr.bf16.mxu0 0
        %3054 = vmatpush1.bf16.msra.mxu0 %v3036
        %3055 = vmatprep.subr.bf16.mxu0 0
        %3056 = vmatpush1.bf16.msra.mxu0 %v3037
        %3057 = vmatprep.subr.bf16.mxu0 0
        %3058 = vmatpush1.bf16.msra.mxu0 %v3038
        %3059 = vmatprep.subr.bf16.mxu0 0
        %3060 = vmatpush1.bf16.msra.mxu0 %v3039
        %3061 = vmatprep.subr.bf16.mxu0 0
        %3062 = vmatpush1.bf16.msra.mxu0 %v3040
        %3063 = vmatprep.subr.bf16.mxu0 0
        %3064 = vmatpush1.bf16.msra.mxu0 %v3041
        %3065 = vmatprep.subr.bf16.mxu0 0
        %3066 = vmatpush1.bf16.msra.mxu0 %v3042
        %3067 = vmatprep.subr.bf16.mxu0 0
        %3068 = vmatpush1.bf16.msra.mxu0 0
        %3069 = vmatprep.subr.bf16.mxu0 0
        %3070 = vmatpush1.bf16.msra.mxu0 0
        %3071 = vmatprep.subr.bf16.mxu0 0
        %3072 = vmatpush1.bf16.msra.mxu0 0
        %3073 = vmatprep.subr.bf16.mxu0 0
        %3074 = vmatpush1.bf16.msra.mxu0 0
        %3075 = vmatprep.subr.bf16.mxu0 0
        %3076 = vmatpush1.bf16.msra.mxu0 0
        %3077 = vmatprep.subr.bf16.mxu0 0
        %3078 = vmatpush1.bf16.msra.mxu0 0
        %3079 = vmatprep.subr.bf16.mxu0 0
        %3080 = vmatpush1.bf16.msra.mxu0 0
        %3081 = vmatprep.subr.bf16.mxu0 0
        %3082 = vmatpush1.bf16.msra.mxu0 0
        %3083 = vmatprep.mubr.bf16.mxu0 0
        %3084 = vmatmul.mubr.bf16.gmra.mrb[0].mxu0 %v2896
        %v3085 = vpop.f32.mrb[0].mxu0
        %v3086 = vadd.f32 %v2998, %v3085
        %v3087 = vpop.f32.mrb[0].mxu0
        %v3088 = vpop.f32.mrb[0].mxu0
        %v3089 = vpop.f32.mrb[0].mxu0
        %3090 = vdwg.mxu0
        %s3091 = scalar_lea.vmem %s9, 128
        %v3092 = vld [vmem:[%s3091] sm:$0xf]
        %v3093 = vld [vmem:[%s3091 + $0x4] sm:$0xf]
        %v3094 = vld [vmem:[%s3091 + $0x8] sm:$0xf]
        %v3095 = vld [vmem:[%s3091 + $0xc] sm:$0xf]
        %v3096 = vld [vmem:[%s3091 + $0x10] sm:$0xf]
        %v3097 = vld [vmem:[%s3091 + $0x14] sm:$0xf]
        %v3098 = vld [vmem:[%s3091 + $0x18] sm:$0xf]
        %v3099 = vld [vmem:[%s3091 + $0x1c] sm:$0xf]
        %v3100 = vld [vmem:[%s3091 + $0x20] sm:$0xf]
        %v3101 = vld [vmem:[%s3091 + $0x24] sm:$0xf]
        %v3102 = vld [vmem:[%s3091 + $0x28] sm:$0xf]
        %v3103 = vld [vmem:[%s3091 + $0x2c] sm:$0xf]
        %v3104 = vld [vmem:[%s3091 + $0x30] sm:$0xf]
        %v3105 = vld [vmem:[%s3091 + $0x34] sm:$0xf]
        %v3106 = vld [vmem:[%s3091 + $0x38] sm:$0xf]
        %v3107 = vld [vmem:[%s3091 + $0x3c] sm:$0xf]
        %v3108 = vpack.c.bf16 %v2783, %v2783
        %v3125 = vunpack.c.l.b16 %v3092
        %v3126 = vunpack.c.l.b16 %v3093
        %v3127 = vunpack.c.l.b16 %v3094
        %v3128 = vunpack.c.l.b16 %v3095
        %v3129 = vunpack.c.l.b16 %v3096
        %v3130 = vunpack.c.l.b16 %v3097
        %v3131 = vunpack.c.l.b16 %v3098
        %v3132 = vunpack.c.l.b16 %v3099
        %v3133 = vunpack.c.l.b16 %v3100
        %v3134 = vunpack.c.l.b16 %v3101
        %v3135 = vunpack.c.l.b16 %v3102
        %v3136 = vunpack.c.l.b16 %v3103
        %v3137 = vunpack.c.l.b16 %v3104
        %v3138 = vunpack.c.l.b16 %v3105
        %v3139 = vunpack.c.l.b16 %v3106
        %v3140 = vunpack.c.l.b16 %v3107
        %v3141 = vpack.c.b16 %v3126, %v3125
        %v3142 = vpack.c.b16 %v3128, %v3127
        %v3143 = vpack.c.b16 %v3130, %v3129
        %v3144 = vpack.c.b16 %v3132, %v3131
        %v3145 = vpack.c.b16 %v3134, %v3133
        %v3146 = vpack.c.b16 %v3136, %v3135
        %v3147 = vpack.c.b16 %v3138, %v3137
        %v3148 = vpack.c.b16 %v3140, %v3139
        %3157 = vmatprep.subr.bf16.mxu0 0
        %3158 = vmatpush1.bf16.msra.mxu0 %v3141
        %3159 = vmatprep.subr.bf16.mxu0 0
        %3160 = vmatpush1.bf16.msra.mxu0 %v3142
        %3161 = vmatprep.subr.bf16.mxu0 0
        %3162 = vmatpush1.bf16.msra.mxu0 %v3143
        %3163 = vmatprep.subr.bf16.mxu0 0
        %3164 = vmatpush1.bf16.msra.mxu0 %v3144
        %3165 = vmatprep.subr.bf16.mxu0 0
        %3166 = vmatpush1.bf16.msra.mxu0 %v3145
        %3167 = vmatprep.subr.bf16.mxu0 0
        %3168 = vmatpush1.bf16.msra.mxu0 %v3146
        %3169 = vmatprep.subr.bf16.mxu0 0
        %3170 = vmatpush1.bf16.msra.mxu0 %v3147
        %3171 = vmatprep.subr.bf16.mxu0 0
        %3172 = vmatpush1.bf16.msra.mxu0 %v3148
        %3173 = vmatprep.subr.bf16.mxu0 0
        %3174 = vmatpush1.bf16.msra.mxu0 0
        %3175 = vmatprep.subr.bf16.mxu0 0
        %3176 = vmatpush1.bf16.msra.mxu0 0
        %3177 = vmatprep.subr.bf16.mxu0 0
        %3178 = vmatpush1.bf16.msra.mxu0 0
        %3179 = vmatprep.subr.bf16.mxu0 0
        %3180 = vmatpush1.bf16.msra.mxu0 0
        %3181 = vmatprep.subr.bf16.mxu0 0
        %3182 = vmatpush1.bf16.msra.mxu0 0
        %3183 = vmatprep.subr.bf16.mxu0 0
        %3184 = vmatpush1.bf16.msra.mxu0 0
        %3185 = vmatprep.subr.bf16.mxu0 0
        %3186 = vmatpush1.bf16.msra.mxu0 0
        %3187 = vmatprep.subr.bf16.mxu0 0
        %3188 = vmatpush1.bf16.msra.mxu0 0
        %3189 = vmatprep.mubr.bf16.mxu0 0
        %3190 = vmatmul.mubr.bf16.gmra.mrb[0].mxu0 %v3108
        %v3191 = vpop.f32.mrb[0].mxu0
        %v3192 = vadd.f32 0.0, %v3191
        %v3193 = vpop.f32.mrb[0].mxu0
        %v3194 = vpop.f32.mrb[0].mxu0
        %v3195 = vpop.f32.mrb[0].mxu0
        %3196 = vdwg.mxu0
        %v3197 = vadd.f32 %v3086, %v3192
        %v3198 = vlaneseq
        %v3199 = vshrl.u32 %v3198, 7
        %v3200 = vsub.s32 5, %v3199
        %v3201 = vrot.slane %v652, %v3200
        %v3202 = vadd.f32 %v3197, %v3201
        %3203 = vst [vmem:[%s640] sm:$0xff] %v3202
        %v3204 = vld [vmem:[%s9] sm:$0xf]
        %v3205 = vld [vmem:[%s9 + $0x4] sm:$0xf]
        %v3206 = vld [vmem:[%s9 + $0x8] sm:$0xf]
        %v3207 = vld [vmem:[%s9 + $0xc] sm:$0xf]
        %v3208 = vld [vmem:[%s9 + $0x10] sm:$0xf]
        %v3209 = vld [vmem:[%s9 + $0x14] sm:$0xf]
        %v3210 = vld [vmem:[%s9 + $0x18] sm:$0xf]
        %v3211 = vld [vmem:[%s9 + $0x1c] sm:$0xf]
        %v3212 = vld [vmem:[%s9 + $0x20] sm:$0xf]
        %v3213 = vld [vmem:[%s9 + $0x24] sm:$0xf]
        %v3214 = vld [vmem:[%s9 + $0x28] sm:$0xf]
        %v3215 = vld [vmem:[%s9 + $0x2c] sm:$0xf]
        %v3216 = vld [vmem:[%s9 + $0x30] sm:$0xf]
        %v3217 = vld [vmem:[%s9 + $0x34] sm:$0xf]
        %v3218 = vld [vmem:[%s9 + $0x38] sm:$0xf]
        %v3219 = vld [vmem:[%s9 + $0x3c] sm:$0xf]
        %v3220 = vld [vmem:[%s2897] sm:$0xf]
        %v3221 = vld [vmem:[%s2897 + $0x4] sm:$0xf]
        %v3222 = vld [vmem:[%s2897 + $0x8] sm:$0xf]
        %v3223 = vld [vmem:[%s2897 + $0xc] sm:$0xf]
        %v3224 = vld [vmem:[%s2897 + $0x10] sm:$0xf]
        %v3225 = vld [vmem:[%s2897 + $0x14] sm:$0xf]
        %v3226 = vld [vmem:[%s2897 + $0x18] sm:$0xf]
        %v3227 = vld [vmem:[%s2897 + $0x1c] sm:$0xf]
        %v3228 = vld [vmem:[%s2897 + $0x20] sm:$0xf]
        %v3229 = vld [vmem:[%s2897 + $0x24] sm:$0xf]
        %v3230 = vld [vmem:[%s2897 + $0x28] sm:$0xf]
        %v3231 = vld [vmem:[%s2897 + $0x2c] sm:$0xf]
        %v3232 = vld [vmem:[%s2897 + $0x30] sm:$0xf]
        %v3233 = vld [vmem:[%s2897 + $0x34] sm:$0xf]
        %v3234 = vld [vmem:[%s2897 + $0x38] sm:$0xf]
        %v3235 = vld [vmem:[%s2897 + $0x3c] sm:$0xf]
        %v3252 = vunpack.c.l.b16 %v3220
        %v3253 = vunpack.c.l.b16 %v3221
        %v3254 = vunpack.c.l.b16 %v3222
        %v3255 = vunpack.c.l.b16 %v3223
        %v3256 = vunpack.c.l.b16 %v3224
        %v3257 = vunpack.c.l.b16 %v3225
        %v3258 = vunpack.c.l.b16 %v3226
        %v3259 = vunpack.c.l.b16 %v3227
        %v3260 = vunpack.c.l.b16 %v3228
        %v3261 = vunpack.c.l.b16 %v3229
        %v3262 = vunpack.c.l.b16 %v3230
        %v3263 = vunpack.c.l.b16 %v3231
        %v3264 = vunpack.c.l.b16 %v3232
        %v3265 = vunpack.c.l.b16 %v3233
        %v3266 = vunpack.c.l.b16 %v3234
        %v3267 = vunpack.c.l.b16 %v3235
        %v3268 = vpack.c.b16 %v3253, %v3252
        %v3269 = vpack.c.b16 %v3255, %v3254
        %v3270 = vpack.c.b16 %v3257, %v3256
        %v3271 = vpack.c.b16 %v3259, %v3258
        %v3272 = vpack.c.b16 %v3261, %v3260
        %v3273 = vpack.c.b16 %v3263, %v3262
        %v3274 = vpack.c.b16 %v3265, %v3264
        %v3275 = vpack.c.b16 %v3267, %v3266
        %3284 = vmatprep.subr.bf16.mxu0 0
        %3285 = vmatpush1.bf16.msra.mxu0 %v3268
        %3286 = vmatprep.subr.bf16.mxu0 0
        %3287 = vmatpush1.bf16.msra.mxu0 %v3269
        %3288 = vmatprep.subr.bf16.mxu0 0
        %3289 = vmatpush1.bf16.msra.mxu0 %v3270
        %3290 = vmatprep.subr.bf16.mxu0 0
        %3291 = vmatpush1.bf16.msra.mxu0 %v3271
        %3292 = vmatprep.subr.bf16.mxu0 0
        %3293 = vmatpush1.bf16.msra.mxu0 %v3272
        %3294 = vmatprep.subr.bf16.mxu0 0
        %3295 = vmatpush1.bf16.msra.mxu0 %v3273
        %3296 = vmatprep.subr.bf16.mxu0 0
        %3297 = vmatpush1.bf16.msra.mxu0 %v3274
        %3298 = vmatprep.subr.bf16.mxu0 0
        %3299 = vmatpush1.bf16.msra.mxu0 %v3275
        %3300 = vmatprep.subr.bf16.mxu0 0
        %3301 = vmatpush1.bf16.msra.mxu0 0
        %3302 = vmatprep.subr.bf16.mxu0 0
        %3303 = vmatpush1.bf16.msra.mxu0 0
        %3304 = vmatprep.subr.bf16.mxu0 0
        %3305 = vmatpush1.bf16.msra.mxu0 0
        %3306 = vmatprep.subr.bf16.mxu0 0
        %3307 = vmatpush1.bf16.msra.mxu0 0
        %3308 = vmatprep.subr.bf16.mxu0 0
        %3309 = vmatpush1.bf16.msra.mxu0 0
        %3310 = vmatprep.subr.bf16.mxu0 0
        %3311 = vmatpush1.bf16.msra.mxu0 0
        %3312 = vmatprep.subr.bf16.mxu0 0
        %3313 = vmatpush1.bf16.msra.mxu0 0
        %3314 = vmatprep.subr.bf16.mxu0 0
        %3315 = vmatpush1.bf16.msra.mxu0 0
        %3316 = vmatprep.mubr.bf16.mxu0 0
        %3317 = vmatmul.mubr.bf16.gmra.mrb[0].mxu0 %v3108
        %v3318 = vpop.f32.mrb[0].mxu0
        %v3319 = vadd.f32 0.0, %v3318
        %v3320 = vpop.f32.mrb[0].mxu0
        %v3321 = vpop.f32.mrb[0].mxu0
        %v3322 = vpop.f32.mrb[0].mxu0
        %3323 = vdwg.mxu0
        %v3340 = vunpack.c.l.b16 %v3204
        %v3341 = vunpack.c.l.b16 %v3205
        %v3342 = vunpack.c.l.b16 %v3206
        %v3343 = vunpack.c.l.b16 %v3207
        %v3344 = vunpack.c.l.b16 %v3208
        %v3345 = vunpack.c.l.b16 %v3209
        %v3346 = vunpack.c.l.b16 %v3210
        %v3347 = vunpack.c.l.b16 %v3211
        %v3348 = vunpack.c.l.b16 %v3212
        %v3349 = vunpack.c.l.b16 %v3213
        %v3350 = vunpack.c.l.b16 %v3214
        %v3351 = vunpack.c.l.b16 %v3215
        %v3352 = vunpack.c.l.b16 %v3216
        %v3353 = vunpack.c.l.b16 %v3217
        %v3354 = vunpack.c.l.b16 %v3218
        %v3355 = vunpack.c.l.b16 %v3219
        %v3356 = vpack.c.b16 %v3341, %v3340
        %v3357 = vpack.c.b16 %v3343, %v3342
        %v3358 = vpack.c.b16 %v3345, %v3344
        %v3359 = vpack.c.b16 %v3347, %v3346
        %v3360 = vpack.c.b16 %v3349, %v3348
        %v3361 = vpack.c.b16 %v3351, %v3350
        %v3362 = vpack.c.b16 %v3353, %v3352
        %v3363 = vpack.c.b16 %v3355, %v3354
        %3372 = vmatprep.subr.bf16.mxu0 0
        %3373 = vmatpush1.bf16.msra.mxu0 %v3356
        %3374 = vmatprep.subr.bf16.mxu0 0
        %3375 = vmatpush1.bf16.msra.mxu0 %v3357
        %3376 = vmatprep.subr.bf16.mxu0 0
        %3377 = vmatpush1.bf16.msra.mxu0 %v3358
        %3378 = vmatprep.subr.bf16.mxu0 0
        %3379 = vmatpush1.bf16.msra.mxu0 %v3359
        %3380 = vmatprep.subr.bf16.mxu0 0
        %3381 = vmatpush1.bf16.msra.mxu0 %v3360
        %3382 = vmatprep.subr.bf16.mxu0 0
        %3383 = vmatpush1.bf16.msra.mxu0 %v3361
        %3384 = vmatprep.subr.bf16.mxu0 0
        %3385 = vmatpush1.bf16.msra.mxu0 %v3362
        %3386 = vmatprep.subr.bf16.mxu0 0
        %3387 = vmatpush1.bf16.msra.mxu0 %v3363
        %3388 = vmatprep.subr.bf16.mxu0 0
        %3389 = vmatpush1.bf16.msra.mxu0 0
        %3390 = vmatprep.subr.bf16.mxu0 0
        %3391 = vmatpush1.bf16.msra.mxu0 0
        %3392 = vmatprep.subr.bf16.mxu0 0
        %3393 = vmatpush1.bf16.msra.mxu0 0
        %3394 = vmatprep.subr.bf16.mxu0 0
        %3395 = vmatpush1.bf16.msra.mxu0 0
        %3396 = vmatprep.subr.bf16.mxu0 0
        %3397 = vmatpush1.bf16.msra.mxu0 0
        %3398 = vmatprep.subr.bf16.mxu0 0
        %3399 = vmatpush1.bf16.msra.mxu0 0
        %3400 = vmatprep.subr.bf16.mxu0 0
        %3401 = vmatpush1.bf16.msra.mxu0 0
        %3402 = vmatprep.subr.bf16.mxu0 0
        %3403 = vmatpush1.bf16.msra.mxu0 0
        %3404 = vmatprep.mubr.bf16.mxu0 0
        %3405 = vmatmul.mubr.bf16.gmra.mrb[0].mxu0 %v2914
        %v3406 = vpop.f32.mrb[0].mxu0
        %v3407 = vadd.f32 %v3319, %v3406
        %v3408 = vpop.f32.mrb[0].mxu0
        %v3409 = vpop.f32.mrb[0].mxu0
        %v3410 = vpop.f32.mrb[0].mxu0
        %3411 = vdwg.mxu0
        %v3412 = vld [vmem:[%s3091] sm:$0xf]
        %v3413 = vld [vmem:[%s3091 + $0x4] sm:$0xf]
        %v3414 = vld [vmem:[%s3091 + $0x8] sm:$0xf]
        %v3415 = vld [vmem:[%s3091 + $0xc] sm:$0xf]
        %v3416 = vld [vmem:[%s3091 + $0x10] sm:$0xf]
        %v3417 = vld [vmem:[%s3091 + $0x14] sm:$0xf]
        %v3418 = vld [vmem:[%s3091 + $0x18] sm:$0xf]
        %v3419 = vld [vmem:[%s3091 + $0x1c] sm:$0xf]
        %v3420 = vld [vmem:[%s3091 + $0x20] sm:$0xf]
        %v3421 = vld [vmem:[%s3091 + $0x24] sm:$0xf]
        %v3422 = vld [vmem:[%s3091 + $0x28] sm:$0xf]
        %v3423 = vld [vmem:[%s3091 + $0x2c] sm:$0xf]
        %v3424 = vld [vmem:[%s3091 + $0x30] sm:$0xf]
        %v3425 = vld [vmem:[%s3091 + $0x34] sm:$0xf]
        %v3426 = vld [vmem:[%s3091 + $0x38] sm:$0xf]
        %v3427 = vld [vmem:[%s3091 + $0x3c] sm:$0xf]
        %v3428 = vpack.c.bf16 %v2830, %v2830
        %v3445 = vunpack.c.l.b16 %v3412
        %v3446 = vunpack.c.l.b16 %v3413
        %v3447 = vunpack.c.l.b16 %v3414
        %v3448 = vunpack.c.l.b16 %v3415
        %v3449 = vunpack.c.l.b16 %v3416
        %v3450 = vunpack.c.l.b16 %v3417
        %v3451 = vunpack.c.l.b16 %v3418
        %v3452 = vunpack.c.l.b16 %v3419
        %v3453 = vunpack.c.l.b16 %v3420
        %v3454 = vunpack.c.l.b16 %v3421
        %v3455 = vunpack.c.l.b16 %v3422
        %v3456 = vunpack.c.l.b16 %v3423
        %v3457 = vunpack.c.l.b16 %v3424
        %v3458 = vunpack.c.l.b16 %v3425
        %v3459 = vunpack.c.l.b16 %v3426
        %v3460 = vunpack.c.l.b16 %v3427
        %v3461 = vpack.c.b16 %v3446, %v3445
        %v3462 = vpack.c.b16 %v3448, %v3447
        %v3463 = vpack.c.b16 %v3450, %v3449
        %v3464 = vpack.c.b16 %v3452, %v3451
        %v3465 = vpack.c.b16 %v3454, %v3453
        %v3466 = vpack.c.b16 %v3456, %v3455
        %v3467 = vpack.c.b16 %v3458, %v3457
        %v3468 = vpack.c.b16 %v3460, %v3459
        %3477 = vmatprep.subr.bf16.mxu0 0
        %3478 = vmatpush1.bf16.msra.mxu0 %v3461
        %3479 = vmatprep.subr.bf16.mxu0 0
        %3480 = vmatpush1.bf16.msra.mxu0 %v3462
        %3481 = vmatprep.subr.bf16.mxu0 0
        %3482 = vmatpush1.bf16.msra.mxu0 %v3463
        %3483 = vmatprep.subr.bf16.mxu0 0
        %3484 = vmatpush1.bf16.msra.mxu0 %v3464
        %3485 = vmatprep.subr.bf16.mxu0 0
        %3486 = vmatpush1.bf16.msra.mxu0 %v3465
        %3487 = vmatprep.subr.bf16.mxu0 0
        %3488 = vmatpush1.bf16.msra.mxu0 %v3466
        %3489 = vmatprep.subr.bf16.mxu0 0
        %3490 = vmatpush1.bf16.msra.mxu0 %v3467
        %3491 = vmatprep.subr.bf16.mxu0 0
        %3492 = vmatpush1.bf16.msra.mxu0 %v3468
        %3493 = vmatprep.subr.bf16.mxu0 0
        %3494 = vmatpush1.bf16.msra.mxu0 0
        %3495 = vmatprep.subr.bf16.mxu0 0
        %3496 = vmatpush1.bf16.msra.mxu0 0
        %3497 = vmatprep.subr.bf16.mxu0 0
        %3498 = vmatpush1.bf16.msra.mxu0 0
        %3499 = vmatprep.subr.bf16.mxu0 0
        %3500 = vmatpush1.bf16.msra.mxu0 0
        %3501 = vmatprep.subr.bf16.mxu0 0
        %3502 = vmatpush1.bf16.msra.mxu0 0
        %3503 = vmatprep.subr.bf16.mxu0 0
        %3504 = vmatpush1.bf16.msra.mxu0 0
        %3505 = vmatprep.subr.bf16.mxu0 0
        %3506 = vmatpush1.bf16.msra.mxu0 0
        %3507 = vmatprep.subr.bf16.mxu0 0
        %3508 = vmatpush1.bf16.msra.mxu0 0
        %3509 = vmatprep.mubr.bf16.mxu0 0
        %3510 = vmatmul.mubr.bf16.gmra.mrb[0].mxu0 %v3428
        %v3511 = vpop.f32.mrb[0].mxu0
        %v3512 = vadd.f32 0.0, %v3511
        %v3513 = vpop.f32.mrb[0].mxu0
        %v3514 = vpop.f32.mrb[0].mxu0
        %v3515 = vpop.f32.mrb[0].mxu0
        %3516 = vdwg.mxu0
        %v3517 = vadd.f32 %v3407, %v3512
        %v3518 = vadd.f32 %v3517, %v3201
        %s3519 = scalar_lea.vmem %s640, 8
        %3520 = vst [vmem:[%s3519] sm:$0xff] %v3518
        %v3521 = vld [vmem:[%s9] sm:$0xf]
        %v3522 = vld [vmem:[%s9 + $0x4] sm:$0xf]
        %v3523 = vld [vmem:[%s9 + $0x8] sm:$0xf]
        %v3524 = vld [vmem:[%s9 + $0xc] sm:$0xf]
        %v3525 = vld [vmem:[%s9 + $0x10] sm:$0xf]
        %v3526 = vld [vmem:[%s9 + $0x14] sm:$0xf]
        %v3527 = vld [vmem:[%s9 + $0x18] sm:$0xf]
        %v3528 = vld [vmem:[%s9 + $0x1c] sm:$0xf]
        %v3529 = vld [vmem:[%s9 + $0x20] sm:$0xf]
        %v3530 = vld [vmem:[%s9 + $0x24] sm:$0xf]
        %v3531 = vld [vmem:[%s9 + $0x28] sm:$0xf]
        %v3532 = vld [vmem:[%s9 + $0x2c] sm:$0xf]
        %v3533 = vld [vmem:[%s9 + $0x30] sm:$0xf]
        %v3534 = vld [vmem:[%s9 + $0x34] sm:$0xf]
        %v3535 = vld [vmem:[%s9 + $0x38] sm:$0xf]
        %v3536 = vld [vmem:[%s9 + $0x3c] sm:$0xf]
        %v3537 = vld [vmem:[%s2897] sm:$0xf]
        %v3538 = vld [vmem:[%s2897 + $0x4] sm:$0xf]
        %v3539 = vld [vmem:[%s2897 + $0x8] sm:$0xf]
        %v3540 = vld [vmem:[%s2897 + $0xc] sm:$0xf]
        %v3541 = vld [vmem:[%s2897 + $0x10] sm:$0xf]
        %v3542 = vld [vmem:[%s2897 + $0x14] sm:$0xf]
        %v3543 = vld [vmem:[%s2897 + $0x18] sm:$0xf]
        %v3544 = vld [vmem:[%s2897 + $0x1c] sm:$0xf]
        %v3545 = vld [vmem:[%s2897 + $0x20] sm:$0xf]
        %v3546 = vld [vmem:[%s2897 + $0x24] sm:$0xf]
        %v3547 = vld [vmem:[%s2897 + $0x28] sm:$0xf]
        %v3548 = vld [vmem:[%s2897 + $0x2c] sm:$0xf]
        %v3549 = vld [vmem:[%s2897 + $0x30] sm:$0xf]
        %v3550 = vld [vmem:[%s2897 + $0x34] sm:$0xf]
        %v3551 = vld [vmem:[%s2897 + $0x38] sm:$0xf]
        %v3552 = vld [vmem:[%s2897 + $0x3c] sm:$0xf]
        %v3569 = vunpack.c.l.b16 %v3537
        %v3570 = vunpack.c.l.b16 %v3538
        %v3571 = vunpack.c.l.b16 %v3539
        %v3572 = vunpack.c.l.b16 %v3540
        %v3573 = vunpack.c.l.b16 %v3541
        %v3574 = vunpack.c.l.b16 %v3542
        %v3575 = vunpack.c.l.b16 %v3543
        %v3576 = vunpack.c.l.b16 %v3544
        %v3577 = vunpack.c.l.b16 %v3545
        %v3578 = vunpack.c.l.b16 %v3546
        %v3579 = vunpack.c.l.b16 %v3547
        %v3580 = vunpack.c.l.b16 %v3548
        %v3581 = vunpack.c.l.b16 %v3549
        %v3582 = vunpack.c.l.b16 %v3550
        %v3583 = vunpack.c.l.b16 %v3551
        %v3584 = vunpack.c.l.b16 %v3552
        %v3585 = vpack.c.b16 %v3570, %v3569
        %v3586 = vpack.c.b16 %v3572, %v3571
        %v3587 = vpack.c.b16 %v3574, %v3573
        %v3588 = vpack.c.b16 %v3576, %v3575
        %v3589 = vpack.c.b16 %v3578, %v3577
        %v3590 = vpack.c.b16 %v3580, %v3579
        %v3591 = vpack.c.b16 %v3582, %v3581
        %v3592 = vpack.c.b16 %v3584, %v3583
        %3601 = vmatprep.subr.bf16.mxu0 0
        %3602 = vmatpush1.bf16.msra.mxu0 %v3585
        %3603 = vmatprep.subr.bf16.mxu0 0
        %3604 = vmatpush1.bf16.msra.mxu0 %v3586
        %3605 = vmatprep.subr.bf16.mxu0 0
        %3606 = vmatpush1.bf16.msra.mxu0 %v3587
        %3607 = vmatprep.subr.bf16.mxu0 0
        %3608 = vmatpush1.bf16.msra.mxu0 %v3588
        %3609 = vmatprep.subr.bf16.mxu0 0
        %3610 = vmatpush1.bf16.msra.mxu0 %v3589
        %3611 = vmatprep.subr.bf16.mxu0 0
        %3612 = vmatpush1.bf16.msra.mxu0 %v3590
        %3613 = vmatprep.subr.bf16.mxu0 0
        %3614 = vmatpush1.bf16.msra.mxu0 %v3591
        %3615 = vmatprep.subr.bf16.mxu0 0
        %3616 = vmatpush1.bf16.msra.mxu0 %v3592
        %3617 = vmatprep.subr.bf16.mxu0 0
        %3618 = vmatpush1.bf16.msra.mxu0 0
        %3619 = vmatprep.subr.bf16.mxu0 0
        %3620 = vmatpush1.bf16.msra.mxu0 0
        %3621 = vmatprep.subr.bf16.mxu0 0
        %3622 = vmatpush1.bf16.msra.mxu0 0
        %3623 = vmatprep.subr.bf16.mxu0 0
        %3624 = vmatpush1.bf16.msra.mxu0 0
        %3625 = vmatprep.subr.bf16.mxu0 0
        %3626 = vmatpush1.bf16.msra.mxu0 0
        %3627 = vmatprep.subr.bf16.mxu0 0
        %3628 = vmatpush1.bf16.msra.mxu0 0
        %3629 = vmatprep.subr.bf16.mxu0 0
        %3630 = vmatpush1.bf16.msra.mxu0 0
        %3631 = vmatprep.subr.bf16.mxu0 0
        %3632 = vmatpush1.bf16.msra.mxu0 0
        %3633 = vmatprep.mubr.bf16.mxu0 0
        %3634 = vmatmul.mubr.bf16.gmra.mrb[0].mxu0 %v3428
        %v3635 = vpop.f32.mrb[0].mxu0
        %v3636 = vadd.f32 0.0, %v3635
        %v3637 = vpop.f32.mrb[0].mxu0
        %v3638 = vpop.f32.mrb[0].mxu0
        %v3639 = vpop.f32.mrb[0].mxu0
        %3640 = vdwg.mxu0
        %v3657 = vunpack.c.l.b16 %v3521
        %v3658 = vunpack.c.l.b16 %v3522
        %v3659 = vunpack.c.l.b16 %v3523
        %v3660 = vunpack.c.l.b16 %v3524
        %v3661 = vunpack.c.l.b16 %v3525
        %v3662 = vunpack.c.l.b16 %v3526
        %v3663 = vunpack.c.l.b16 %v3527
        %v3664 = vunpack.c.l.b16 %v3528
        %v3665 = vunpack.c.l.b16 %v3529
        %v3666 = vunpack.c.l.b16 %v3530
        %v3667 = vunpack.c.l.b16 %v3531
        %v3668 = vunpack.c.l.b16 %v3532
        %v3669 = vunpack.c.l.b16 %v3533
        %v3670 = vunpack.c.l.b16 %v3534
        %v3671 = vunpack.c.l.b16 %v3535
        %v3672 = vunpack.c.l.b16 %v3536
        %v3673 = vpack.c.b16 %v3658, %v3657
        %v3674 = vpack.c.b16 %v3660, %v3659
        %v3675 = vpack.c.b16 %v3662, %v3661
        %v3676 = vpack.c.b16 %v3664, %v3663
        %v3677 = vpack.c.b16 %v3666, %v3665
        %v3678 = vpack.c.b16 %v3668, %v3667
        %v3679 = vpack.c.b16 %v3670, %v3669
        %v3680 = vpack.c.b16 %v3672, %v3671
        %3689 = vmatprep.subr.bf16.mxu0 0
        %3690 = vmatpush1.bf16.msra.mxu0 %v3673
        %3691 = vmatprep.subr.bf16.mxu0 0
        %3692 = vmatpush1.bf16.msra.mxu0 %v3674
        %3693 = vmatprep.subr.bf16.mxu0 0
        %3694 = vmatpush1.bf16.msra.mxu0 %v3675
        %3695 = vmatprep.subr.bf16.mxu0 0
        %3696 = vmatpush1.bf16.msra.mxu0 %v3676
        %3697 = vmatprep.subr.bf16.mxu0 0
        %3698 = vmatpush1.bf16.msra.mxu0 %v3677
        %3699 = vmatprep.subr.bf16.mxu0 0
        %3700 = vmatpush1.bf16.msra.mxu0 %v3678
        %3701 = vmatprep.subr.bf16.mxu0 0
        %3702 = vmatpush1.bf16.msra.mxu0 %v3679
        %3703 = vmatprep.subr.bf16.mxu0 0
        %3704 = vmatpush1.bf16.msra.mxu0 %v3680
        %3705 = vmatprep.subr.bf16.mxu0 0
        %3706 = vmatpush1.bf16.msra.mxu0 0
        %3707 = vmatprep.subr.bf16.mxu0 0
        %3708 = vmatpush1.bf16.msra.mxu0 0
        %3709 = vmatprep.subr.bf16.mxu0 0
        %3710 = vmatpush1.bf16.msra.mxu0 0
        %3711 = vmatprep.subr.bf16.mxu0 0
        %3712 = vmatpush1.bf16.msra.mxu0 0
        %3713 = vmatprep.subr.bf16.mxu0 0
        %3714 = vmatpush1.bf16.msra.mxu0 0
        %3715 = vmatprep.subr.bf16.mxu0 0
        %3716 = vmatpush1.bf16.msra.mxu0 0
        %3717 = vmatprep.subr.bf16.mxu0 0
        %3718 = vmatpush1.bf16.msra.mxu0 0
        %3719 = vmatprep.subr.bf16.mxu0 0
        %3720 = vmatpush1.bf16.msra.mxu0 0
        %3721 = vmatprep.mubr.bf16.mxu0 0
        %3722 = vmatmul.mubr.bf16.gmra.mrb[0].mxu0 %v3108
        %v3723 = vpop.f32.mrb[0].mxu0
        %v3724 = vadd.f32 %v3636, %v3723
        %v3725 = vpop.f32.mrb[0].mxu0
        %v3726 = vpop.f32.mrb[0].mxu0
        %v3727 = vpop.f32.mrb[0].mxu0
        %3728 = vdwg.mxu0
        %v3729 = vld [vmem:[%s3091] sm:$0xf]
        %v3730 = vld [vmem:[%s3091 + $0x4] sm:$0xf]
        %v3731 = vld [vmem:[%s3091 + $0x8] sm:$0xf]
        %v3732 = vld [vmem:[%s3091 + $0xc] sm:$0xf]
        %v3733 = vld [vmem:[%s3091 + $0x10] sm:$0xf]
        %v3734 = vld [vmem:[%s3091 + $0x14] sm:$0xf]
        %v3735 = vld [vmem:[%s3091 + $0x18] sm:$0xf]
        %v3736 = vld [vmem:[%s3091 + $0x1c] sm:$0xf]
        %v3737 = vld [vmem:[%s3091 + $0x20] sm:$0xf]
        %v3738 = vld [vmem:[%s3091 + $0x24] sm:$0xf]
        %v3739 = vld [vmem:[%s3091 + $0x28] sm:$0xf]
        %v3740 = vld [vmem:[%s3091 + $0x2c] sm:$0xf]
        %v3741 = vld [vmem:[%s3091 + $0x30] sm:$0xf]
        %v3742 = vld [vmem:[%s3091 + $0x34] sm:$0xf]
        %v3743 = vld [vmem:[%s3091 + $0x38] sm:$0xf]
        %v3744 = vld [vmem:[%s3091 + $0x3c] sm:$0xf]
        %v3745 = vpack.c.bf16 %v2877, %v2877
        %v3762 = vunpack.c.l.b16 %v3729
        %v3763 = vunpack.c.l.b16 %v3730
        %v3764 = vunpack.c.l.b16 %v3731
        %v3765 = vunpack.c.l.b16 %v3732
        %v3766 = vunpack.c.l.b16 %v3733
        %v3767 = vunpack.c.l.b16 %v3734
        %v3768 = vunpack.c.l.b16 %v3735
        %v3769 = vunpack.c.l.b16 %v3736
        %v3770 = vunpack.c.l.b16 %v3737
        %v3771 = vunpack.c.l.b16 %v3738
        %v3772 = vunpack.c.l.b16 %v3739
        %v3773 = vunpack.c.l.b16 %v3740
        %v3774 = vunpack.c.l.b16 %v3741
        %v3775 = vunpack.c.l.b16 %v3742
        %v3776 = vunpack.c.l.b16 %v3743
        %v3777 = vunpack.c.l.b16 %v3744
        %v3778 = vpack.c.b16 %v3763, %v3762
        %v3779 = vpack.c.b16 %v3765, %v3764
        %v3780 = vpack.c.b16 %v3767, %v3766
        %v3781 = vpack.c.b16 %v3769, %v3768
        %v3782 = vpack.c.b16 %v3771, %v3770
        %v3783 = vpack.c.b16 %v3773, %v3772
        %v3784 = vpack.c.b16 %v3775, %v3774
        %v3785 = vpack.c.b16 %v3777, %v3776
        %3794 = vmatprep.subr.bf16.mxu0 0
        %3795 = vmatpush1.bf16.msra.mxu0 %v3778
        %3796 = vmatprep.subr.bf16.mxu0 0
        %3797 = vmatpush1.bf16.msra.mxu0 %v3779
        %3798 = vmatprep.subr.bf16.mxu0 0
        %3799 = vmatpush1.bf16.msra.mxu0 %v3780
        %3800 = vmatprep.subr.bf16.mxu0 0
        %3801 = vmatpush1.bf16.msra.mxu0 %v3781
        %3802 = vmatprep.subr.bf16.mxu0 0
        %3803 = vmatpush1.bf16.msra.mxu0 %v3782
        %3804 = vmatprep.subr.bf16.mxu0 0
        %3805 = vmatpush1.bf16.msra.mxu0 %v3783
        %3806 = vmatprep.subr.bf16.mxu0 0
        %3807 = vmatpush1.bf16.msra.mxu0 %v3784
        %3808 = vmatprep.subr.bf16.mxu0 0
        %3809 = vmatpush1.bf16.msra.mxu0 %v3785
        %3810 = vmatprep.subr.bf16.mxu0 0
        %3811 = vmatpush1.bf16.msra.mxu0 0
        %3812 = vmatprep.subr.bf16.mxu0 0
        %3813 = vmatpush1.bf16.msra.mxu0 0
        %3814 = vmatprep.subr.bf16.mxu0 0
        %3815 = vmatpush1.bf16.msra.mxu0 0
        %3816 = vmatprep.subr.bf16.mxu0 0
        %3817 = vmatpush1.bf16.msra.mxu0 0
        %3818 = vmatprep.subr.bf16.mxu0 0
        %3819 = vmatpush1.bf16.msra.mxu0 0
        %3820 = vmatprep.subr.bf16.mxu0 0
        %3821 = vmatpush1.bf16.msra.mxu0 0
        %3822 = vmatprep.subr.bf16.mxu0 0
        %3823 = vmatpush1.bf16.msra.mxu0 0
        %3824 = vmatprep.subr.bf16.mxu0 0
        %3825 = vmatpush1.bf16.msra.mxu0 0
        %3826 = vmatprep.mubr.bf16.mxu0 0
        %3827 = vmatmul.mubr.bf16.gmra.mrb[0].mxu0 %v3745
        %v3828 = vpop.f32.mrb[0].mxu0
        %v3829 = vadd.f32 0.0, %v3828
        %v3830 = vpop.f32.mrb[0].mxu0
        %v3831 = vpop.f32.mrb[0].mxu0
        %v3832 = vpop.f32.mrb[0].mxu0
        %3833 = vdwg.mxu0
        %v3834 = vadd.f32 %v3724, %v3829
        %v3835 = vadd.f32 %v3834, %v3201
        %s3836 = scalar_lea.vmem %s640, 16
        %3837 = vst [vmem:[%s3836] sm:$0xff] %v3835
        %v3838 = vld [vmem:[%s9] sm:$0xf]
        %v3839 = vld [vmem:[%s9 + $0x4] sm:$0xf]
        %v3840 = vld [vmem:[%s9 + $0x8] sm:$0xf]
        %v3841 = vld [vmem:[%s9 + $0xc] sm:$0xf]
        %v3842 = vld [vmem:[%s9 + $0x10] sm:$0xf]
        %v3843 = vld [vmem:[%s9 + $0x14] sm:$0xf]
        %v3844 = vld [vmem:[%s9 + $0x18] sm:$0xf]
        %v3845 = vld [vmem:[%s9 + $0x1c] sm:$0xf]
        %v3846 = vld [vmem:[%s9 + $0x20] sm:$0xf]
        %v3847 = vld [vmem:[%s9 + $0x24] sm:$0xf]
        %v3848 = vld [vmem:[%s9 + $0x28] sm:$0xf]
        %v3849 = vld [vmem:[%s9 + $0x2c] sm:$0xf]
        %v3850 = vld [vmem:[%s9 + $0x30] sm:$0xf]
        %v3851 = vld [vmem:[%s9 + $0x34] sm:$0xf]
        %v3852 = vld [vmem:[%s9 + $0x38] sm:$0xf]
        %v3853 = vld [vmem:[%s9 + $0x3c] sm:$0xf]
        %v3854 = vld [vmem:[%s2897] sm:$0xf]
        %v3855 = vld [vmem:[%s2897 + $0x4] sm:$0xf]
        %v3856 = vld [vmem:[%s2897 + $0x8] sm:$0xf]
        %v3857 = vld [vmem:[%s2897 + $0xc] sm:$0xf]
        %v3858 = vld [vmem:[%s2897 + $0x10] sm:$0xf]
        %v3859 = vld [vmem:[%s2897 + $0x14] sm:$0xf]
        %v3860 = vld [vmem:[%s2897 + $0x18] sm:$0xf]
        %v3861 = vld [vmem:[%s2897 + $0x1c] sm:$0xf]
        %v3862 = vld [vmem:[%s2897 + $0x20] sm:$0xf]
        %v3863 = vld [vmem:[%s2897 + $0x24] sm:$0xf]
        %v3864 = vld [vmem:[%s2897 + $0x28] sm:$0xf]
        %v3865 = vld [vmem:[%s2897 + $0x2c] sm:$0xf]
        %v3866 = vld [vmem:[%s2897 + $0x30] sm:$0xf]
        %v3867 = vld [vmem:[%s2897 + $0x34] sm:$0xf]
        %v3868 = vld [vmem:[%s2897 + $0x38] sm:$0xf]
        %v3869 = vld [vmem:[%s2897 + $0x3c] sm:$0xf]
        %v3886 = vunpack.c.l.b16 %v3854
        %v3887 = vunpack.c.l.b16 %v3855
        %v3888 = vunpack.c.l.b16 %v3856
        %v3889 = vunpack.c.l.b16 %v3857
        %v3890 = vunpack.c.l.b16 %v3858
        %v3891 = vunpack.c.l.b16 %v3859
        %v3892 = vunpack.c.l.b16 %v3860
        %v3893 = vunpack.c.l.b16 %v3861
        %v3894 = vunpack.c.l.b16 %v3862
        %v3895 = vunpack.c.l.b16 %v3863
        %v3896 = vunpack.c.l.b16 %v3864
        %v3897 = vunpack.c.l.b16 %v3865
        %v3898 = vunpack.c.l.b16 %v3866
        %v3899 = vunpack.c.l.b16 %v3867
        %v3900 = vunpack.c.l.b16 %v3868
        %v3901 = vunpack.c.l.b16 %v3869
        %v3902 = vpack.c.b16 %v3887, %v3886
        %v3903 = vpack.c.b16 %v3889, %v3888
        %v3904 = vpack.c.b16 %v3891, %v3890
        %v3905 = vpack.c.b16 %v3893, %v3892
        %v3906 = vpack.c.b16 %v3895, %v3894
        %v3907 = vpack.c.b16 %v3897, %v3896
        %v3908 = vpack.c.b16 %v3899, %v3898
        %v3909 = vpack.c.b16 %v3901, %v3900
        %3918 = vmatprep.subr.bf16.mxu0 0
        %3919 = vmatpush1.bf16.msra.mxu0 %v3902
        %3920 = vmatprep.subr.bf16.mxu0 0
        %3921 = vmatpush1.bf16.msra.mxu0 %v3903
        %3922 = vmatprep.subr.bf16.mxu0 0
        %3923 = vmatpush1.bf16.msra.mxu0 %v3904
        %3924 = vmatprep.subr.bf16.mxu0 0
        %3925 = vmatpush1.bf16.msra.mxu0 %v3905
        %3926 = vmatprep.subr.bf16.mxu0 0
        %3927 = vmatpush1.bf16.msra.mxu0 %v3906
        %3928 = vmatprep.subr.bf16.mxu0 0
        %3929 = vmatpush1.bf16.msra.mxu0 %v3907
        %3930 = vmatprep.subr.bf16.mxu0 0
        %3931 = vmatpush1.bf16.msra.mxu0 %v3908
        %3932 = vmatprep.subr.bf16.mxu0 0
        %3933 = vmatpush1.bf16.msra.mxu0 %v3909
        %3934 = vmatprep.subr.bf16.mxu0 0
        %3935 = vmatpush1.bf16.msra.mxu0 0
        %3936 = vmatprep.subr.bf16.mxu0 0
        %3937 = vmatpush1.bf16.msra.mxu0 0
        %3938 = vmatprep.subr.bf16.mxu0 0
        %3939 = vmatpush1.bf16.msra.mxu0 0
        %3940 = vmatprep.subr.bf16.mxu0 0
        %3941 = vmatpush1.bf16.msra.mxu0 0
        %3942 = vmatprep.subr.bf16.mxu0 0
        %3943 = vmatpush1.bf16.msra.mxu0 0
        %3944 = vmatprep.subr.bf16.mxu0 0
        %3945 = vmatpush1.bf16.msra.mxu0 0
        %3946 = vmatprep.subr.bf16.mxu0 0
        %3947 = vmatpush1.bf16.msra.mxu0 0
        %3948 = vmatprep.subr.bf16.mxu0 0
        %3949 = vmatpush1.bf16.msra.mxu0 0
        %3950 = vmatprep.mubr.bf16.mxu0 0
        %3951 = vmatmul.mubr.bf16.gmra.mrb[0].mxu0 %v3745
        %v3952 = vpop.f32.mrb[0].mxu0
        %v3953 = vadd.f32 0.0, %v3952
        %v3954 = vpop.f32.mrb[0].mxu0
        %v3955 = vpop.f32.mrb[0].mxu0
        %v3956 = vpop.f32.mrb[0].mxu0
        %3957 = vdwg.mxu0
        %v3974 = vunpack.c.l.b16 %v3838
        %v3975 = vunpack.c.l.b16 %v3839
        %v3976 = vunpack.c.l.b16 %v3840
        %v3977 = vunpack.c.l.b16 %v3841
        %v3978 = vunpack.c.l.b16 %v3842
        %v3979 = vunpack.c.l.b16 %v3843
        %v3980 = vunpack.c.l.b16 %v3844
        %v3981 = vunpack.c.l.b16 %v3845
        %v3982 = vunpack.c.l.b16 %v3846
        %v3983 = vunpack.c.l.b16 %v3847
        %v3984 = vunpack.c.l.b16 %v3848
        %v3985 = vunpack.c.l.b16 %v3849
        %v3986 = vunpack.c.l.b16 %v3850
        %v3987 = vunpack.c.l.b16 %v3851
        %v3988 = vunpack.c.l.b16 %v3852
        %v3989 = vunpack.c.l.b16 %v3853
        %v3990 = vpack.c.b16 %v3975, %v3974
        %v3991 = vpack.c.b16 %v3977, %v3976
        %v3992 = vpack.c.b16 %v3979, %v3978
        %v3993 = vpack.c.b16 %v3981, %v3980
        %v3994 = vpack.c.b16 %v3983, %v3982
        %v3995 = vpack.c.b16 %v3985, %v3984
        %v3996 = vpack.c.b16 %v3987, %v3986
        %v3997 = vpack.c.b16 %v3989, %v3988
        %4006 = vmatprep.subr.bf16.mxu0 0
        %4007 = vmatpush1.bf16.msra.mxu0 %v3990
        %4008 = vmatprep.subr.bf16.mxu0 0
        %4009 = vmatpush1.bf16.msra.mxu0 %v3991
        %4010 = vmatprep.subr.bf16.mxu0 0
        %4011 = vmatpush1.bf16.msra.mxu0 %v3992
        %4012 = vmatprep.subr.bf16.mxu0 0
        %4013 = vmatpush1.bf16.msra.mxu0 %v3993
        %4014 = vmatprep.subr.bf16.mxu0 0
        %4015 = vmatpush1.bf16.msra.mxu0 %v3994
        %4016 = vmatprep.subr.bf16.mxu0 0
        %4017 = vmatpush1.bf16.msra.mxu0 %v3995
        %4018 = vmatprep.subr.bf16.mxu0 0
        %4019 = vmatpush1.bf16.msra.mxu0 %v3996
        %4020 = vmatprep.subr.bf16.mxu0 0
        %4021 = vmatpush1.bf16.msra.mxu0 %v3997
        %4022 = vmatprep.subr.bf16.mxu0 0
        %4023 = vmatpush1.bf16.msra.mxu0 0
        %4024 = vmatprep.subr.bf16.mxu0 0
        %4025 = vmatpush1.bf16.msra.mxu0 0
        %4026 = vmatprep.subr.bf16.mxu0 0
        %4027 = vmatpush1.bf16.msra.mxu0 0
        %4028 = vmatprep.subr.bf16.mxu0 0
        %4029 = vmatpush1.bf16.msra.mxu0 0
        %4030 = vmatprep.subr.bf16.mxu0 0
        %4031 = vmatpush1.bf16.msra.mxu0 0
        %4032 = vmatprep.subr.bf16.mxu0 0
        %4033 = vmatpush1.bf16.msra.mxu0 0
        %4034 = vmatprep.subr.bf16.mxu0 0
        %4035 = vmatpush1.bf16.msra.mxu0 0
        %4036 = vmatprep.subr.bf16.mxu0 0
        %4037 = vmatpush1.bf16.msra.mxu0 0
        %4038 = vmatprep.mubr.bf16.mxu0 0
        %4039 = vmatmul.mubr.bf16.gmra.mrb[0].mxu0 %v3428
        %v4040 = vpop.f32.mrb[0].mxu0
        %v4041 = vadd.f32 %v3953, %v4040
        %v4042 = vpop.f32.mrb[0].mxu0
        %v4043 = vpop.f32.mrb[0].mxu0
        %v4044 = vpop.f32.mrb[0].mxu0
        %4045 = vdwg.mxu0
        %v4046 = vrot.slane %v2736, 1
        %v4047 = vsel %vm980, 0.0, %v4046
        %v4048 = vld [vmem:[%s3091] sm:$0xf]
        %v4049 = vld [vmem:[%s3091 + $0x4] sm:$0xf]
        %v4050 = vld [vmem:[%s3091 + $0x8] sm:$0xf]
        %v4051 = vld [vmem:[%s3091 + $0xc] sm:$0xf]
        %v4052 = vld [vmem:[%s3091 + $0x10] sm:$0xf]
        %v4053 = vld [vmem:[%s3091 + $0x14] sm:$0xf]
        %v4054 = vld [vmem:[%s3091 + $0x18] sm:$0xf]
        %v4055 = vld [vmem:[%s3091 + $0x1c] sm:$0xf]
        %v4056 = vld [vmem:[%s3091 + $0x20] sm:$0xf]
        %v4057 = vld [vmem:[%s3091 + $0x24] sm:$0xf]
        %v4058 = vld [vmem:[%s3091 + $0x28] sm:$0xf]
        %v4059 = vld [vmem:[%s3091 + $0x2c] sm:$0xf]
        %v4060 = vld [vmem:[%s3091 + $0x30] sm:$0xf]
        %v4061 = vld [vmem:[%s3091 + $0x34] sm:$0xf]
        %v4062 = vld [vmem:[%s3091 + $0x38] sm:$0xf]
        %v4063 = vld [vmem:[%s3091 + $0x3c] sm:$0xf]
        %v4064 = vpack.c.bf16 %v4047, %v4047
        %v4081 = vunpack.c.l.b16 %v4048
        %v4082 = vunpack.c.l.b16 %v4049
        %v4083 = vunpack.c.l.b16 %v4050
        %v4084 = vunpack.c.l.b16 %v4051
        %v4085 = vunpack.c.l.b16 %v4052
        %v4086 = vunpack.c.l.b16 %v4053
        %v4087 = vunpack.c.l.b16 %v4054
        %v4088 = vunpack.c.l.b16 %v4055
        %v4089 = vunpack.c.l.b16 %v4056
        %v4090 = vunpack.c.l.b16 %v4057
        %v4091 = vunpack.c.l.b16 %v4058
        %v4092 = vunpack.c.l.b16 %v4059
        %v4093 = vunpack.c.l.b16 %v4060
        %v4094 = vunpack.c.l.b16 %v4061
        %v4095 = vunpack.c.l.b16 %v4062
        %v4096 = vunpack.c.l.b16 %v4063
        %v4097 = vpack.c.b16 %v4082, %v4081
        %v4098 = vpack.c.b16 %v4084, %v4083
        %v4099 = vpack.c.b16 %v4086, %v4085
        %v4100 = vpack.c.b16 %v4088, %v4087
        %v4101 = vpack.c.b16 %v4090, %v4089
        %v4102 = vpack.c.b16 %v4092, %v4091
        %v4103 = vpack.c.b16 %v4094, %v4093
        %v4104 = vpack.c.b16 %v4096, %v4095
        %4113 = vmatprep.subr.bf16.mxu0 0
        %4114 = vmatpush1.bf16.msra.mxu0 %v4097
        %4115 = vmatprep.subr.bf16.mxu0 0
        %4116 = vmatpush1.bf16.msra.mxu0 %v4098
        %4117 = vmatprep.subr.bf16.mxu0 0
        %4118 = vmatpush1.bf16.msra.mxu0 %v4099
        %4119 = vmatprep.subr.bf16.mxu0 0
        %4120 = vmatpush1.bf16.msra.mxu0 %v4100
        %4121 = vmatprep.subr.bf16.mxu0 0
        %4122 = vmatpush1.bf16.msra.mxu0 %v4101
        %4123 = vmatprep.subr.bf16.mxu0 0
        %4124 = vmatpush1.bf16.msra.mxu0 %v4102
        %4125 = vmatprep.subr.bf16.mxu0 0
        %4126 = vmatpush1.bf16.msra.mxu0 %v4103
        %4127 = vmatprep.subr.bf16.mxu0 0
        %4128 = vmatpush1.bf16.msra.mxu0 %v4104
        %4129 = vmatprep.subr.bf16.mxu0 0
        %4130 = vmatpush1.bf16.msra.mxu0 0
        %4131 = vmatprep.subr.bf16.mxu0 0
        %4132 = vmatpush1.bf16.msra.mxu0 0
        %4133 = vmatprep.subr.bf16.mxu0 0
        %4134 = vmatpush1.bf16.msra.mxu0 0
        %4135 = vmatprep.subr.bf16.mxu0 0
        %4136 = vmatpush1.bf16.msra.mxu0 0
        %4137 = vmatprep.subr.bf16.mxu0 0
        %4138 = vmatpush1.bf16.msra.mxu0 0
        %4139 = vmatprep.subr.bf16.mxu0 0
        %4140 = vmatpush1.bf16.msra.mxu0 0
        %4141 = vmatprep.subr.bf16.mxu0 0
        %4142 = vmatpush1.bf16.msra.mxu0 0
        %4143 = vmatprep.subr.bf16.mxu0 0
        %4144 = vmatpush1.bf16.msra.mxu0 0
        %4145 = vmatprep.mubr.bf16.mxu0 0
        %4146 = vmatmul.mubr.bf16.gmra.mrb[0].mxu0 %v4064
        %v4147 = vpop.f32.mrb[0].mxu0
        %v4148 = vadd.f32 0.0, %v4147
        %v4149 = vpop.f32.mrb[0].mxu0
        %v4150 = vpop.f32.mrb[0].mxu0
        %v4151 = vpop.f32.mrb[0].mxu0
        %4152 = vdwg.mxu0
        %v4153 = vadd.f32 %v4041, %v4148
        %v4154 = vadd.f32 %v4153, %v3201
        %s4155 = scalar_lea.vmem %s640, 24
        %4156 = vst [vmem:[%s4155] sm:$0xff] %v4154
        %p4157 = scmp.lt.s32.totalorder %s35, 1
        %s4158 = scalar_select %p4157, %s35, 1
        %s4159 = smul.addr %s4158, 4
        %s4160 = smul.addr %s4159, 8
        %s4161 = scalar_lea.vmem %s13, %s4160
        %p4162 = scmp.lt.s32.totalorder %s35, 1
        %s4163 = scalar_select %p4162, %s35, 1
        %s4164 = smul.addr %s4163, 2
        %s4165 = smul.addr %s4164, 8
        %s4166 = scalar_lea.vmem %s14, %s4165
        %s4167 = sand.u32 %s388, 1
        %s4168 = scalar_lea.sflag [#allocation3], %s4167
        %s4169 = sand.u32 %s388, 1
        %s4170 = smul.addr %s4169, 8
        %s4171 = scalar_lea.vmem [#allocation2], %s4170
        %p4172 = scmp.lt.s32.totalorder %s35, 1
        %s4173 = scalar_select %p4172, %s35, 1
        %s4174 = smul.addr %s4173, 2
        %s4175 = smul.addr %s4174, 2
        %s4176 = scalar_lea.vmem %s16, %s4175
        %s4177 = sand.u32 %s440, 1
        %s4178 = scalar_lea.sflag [#allocation5], %s4177
        %s4179 = sand.u32 %s440, 1
        %s4180 = smul.addr %s4179, 2
        %s4181 = scalar_lea.vmem [#allocation4], %s4180
        // Predicated region
        $region73: #{pyramid_features.1} parent=71 // pred_check
          %p4182 = pneg %p346
        $region74: #{pyramid_features.1} parent=71 // pred_check_branch
          %4184 = sbr.rel (%p4182) target = $region76
        $region75: #{pyramid_features.1} parent=71 // pred_region
          _
        $region76: #{pyramid_features.1} parent=71 // pred_fallthru
          _
        // Predicated region
        $region77: #{pyramid_features.1} parent=71 // pred_check
          %p4185 = pneg %p372
        $region78: #{pyramid_features.1} parent=71 // pred_check_branch
          %4187 = sbr.rel (%p4185) target = $region80
        $region79: #{pyramid_features.1} parent=71 // pred_region
          _
        $region80: #{pyramid_features.1} parent=71 // pred_fallthru
          _
        // Predicated region
        $region81: #{pyramid_features.1} parent=71 // pred_check
          %p4188 = pneg %p398
        $region82: #{pyramid_features.1} parent=71 // pred_check_branch
          %4190 = sbr.rel (%p4188) target = $region84
        $region83: #{pyramid_features.1} parent=71 // pred_region
          %s4192 = ssub.s32 128, 128
          %4193 = vsyncadd %s4168, %s4192
          %s4194 = smul.addr %s35, 128
          %s4195 = scalar_lea.hbm %s15, %s4194
          %s4197 = sshll.u32 %s4171, 4
          %s4198 = int_to_ptr.vmem [resolvable:$true] %s4197
          %4200 = dma.vmem_to_hbm [thread:$0]  %s4198, 128, %s4195, %s4168
        $region84: #{pyramid_features.1} parent=71 // pred_fallthru
          _
        // Predicated region
        $region85: #{pyramid_features.1} parent=71 // pred_check
          %p4201 = pneg %p424
        $region86: #{pyramid_features.1} parent=71 // pred_check_branch
          %4203 = sbr.rel (%p4201) target = $region88
        $region87: #{pyramid_features.1} parent=71 // pred_region
          _
        $region88: #{pyramid_features.1} parent=71 // pred_fallthru
          _
        // Predicated region
        $region89: #{pyramid_features.1} parent=71 // pred_check
          %p4204 = pneg %p450
        $region90: #{pyramid_features.1} parent=71 // pred_check_branch
          %4206 = sbr.rel (%p4204) target = $region92
        $region91: #{pyramid_features.1} parent=71 // pred_region
          %s4208 = ssub.s32 32, 32
          %4209 = vsyncadd %s4178, %s4208
          %s4210 = smul.addr %s35, 32
          %s4211 = scalar_lea.hbm %s17, %s4210
          %s4213 = sshll.u32 %s4181, 4
          %s4214 = int_to_ptr.vmem [resolvable:$true] %s4213
          %4216 = dma.vmem_to_hbm [thread:$0]  %s4214, 32, %s4211, %s4178
        $region92: #{pyramid_features.1} parent=71 // pred_fallthru
          _
      $region72: #{pyramid_features.1} parent=5 // pred_fallthru
        _
      %p4217 = scmp.le.s32.totalorder 2, %s30
      // Predicated region
      $region93: #{pyramid_features.1} parent=5 // pred_check
        %p4218 = pneg %p4217
      $region94: #{pyramid_features.1} parent=5 // pred_check_branch
        %4220 = sbr.rel (%p4218) target = $region96
      $region95: #{pyramid_features.1} parent=5 // pred_region
        %s4221 = ssub.s32 %s30, 2
        // Predicated region
        $region97: #{pyramid_features.1} parent=95 // pred_check
          %p4222 = pneg %p352
        $region98: #{pyramid_features.1} parent=95 // pred_check_branch
          %4224 = sbr.rel (%p4222) target = $region100
        $region99: #{pyramid_features.1} parent=95 // pred_region
          %p4225 = scmp.lt.s32.totalorder %s36, 1
          %s4226 = scalar_select %p4225, %s36, 1
          %s4227 = smul.addr %s4226, 4
          %s4228 = smul.addr %s4227, 8
          %s4229 = scalar_lea.vmem %s13, %s4228
        $region100: #{pyramid_features.1} parent=95 // pred_fallthru
          _
        // Predicated region
        $region101: #{pyramid_features.1} parent=95 // pred_check
          %p4230 = pneg %p378
        $region102: #{pyramid_features.1} parent=95 // pred_check_branch
          %4232 = sbr.rel (%p4230) target = $region104
        $region103: #{pyramid_features.1} parent=95 // pred_region
          %p4233 = scmp.lt.s32.totalorder %s36, 1
          %s4234 = scalar_select %p4233, %s36, 1
          %s4235 = smul.addr %s4234, 2
          %s4236 = smul.addr %s4235, 8
          %s4237 = scalar_lea.vmem %s14, %s4236
        $region104: #{pyramid_features.1} parent=95 // pred_fallthru
          _
        // Predicated region
        $region105: #{pyramid_features.1} parent=95 // pred_check
          %p4238 = pneg %p404
        $region106: #{pyramid_features.1} parent=95 // pred_check_branch
          %4240 = sbr.rel (%p4238) target = $region108
        $region107: #{pyramid_features.1} parent=95 // pred_region
          %s4241 = sand.u32 %s389, 1
          %s4242 = scalar_lea.sflag [#allocation3], %s4241
          %s4243 = sand.u32 %s389, 1
          %s4244 = smul.addr %s4243, 8
          %s4245 = scalar_lea.vmem [#allocation2], %s4244
          %4246 = dma.done %s4242, 128
        $region108: #{pyramid_features.1} parent=95 // pred_fallthru
          _
        // Predicated region
        $region109: #{pyramid_features.1} parent=95 // pred_check
          %p4247 = pneg %p430
        $region110: #{pyramid_features.1} parent=95 // pred_check_branch
          %4249 = sbr.rel (%p4247) target = $region112
        $region111: #{pyramid_features.1} parent=95 // pred_region
          %p4250 = scmp.lt.s32.totalorder %s36, 1
          %s4251 = scalar_select %p4250, %s36, 1
          %s4252 = smul.addr %s4251, 2
          %s4253 = smul.addr %s4252, 2
          %s4254 = scalar_lea.vmem %s16, %s4253
        $region112: #{pyramid_features.1} parent=95 // pred_fallthru
          _
        // Predicated region
        $region113: #{pyramid_features.1} parent=95 // pred_check
          %p4255 = pneg %p456
        $region114: #{pyramid_features.1} parent=95 // pred_check_branch
          %4257 = sbr.rel (%p4255) target = $region116
        $region115: #{pyramid_features.1} parent=95 // pred_region
          %s4258 = sand.u32 %s441, 1
          %s4259 = scalar_lea.sflag [#allocation5], %s4258
          %s4260 = sand.u32 %s441, 1
          %s4261 = smul.addr %s4260, 2
          %s4262 = scalar_lea.vmem [#allocation4], %s4261
          %4263 = dma.done %s4259, 32
        $region116: #{pyramid_features.1} parent=95 // pred_fallthru
          _
      $region96: #{pyramid_features.1} parent=5 // pred_fallthru
        _
    $region6: #{pyramid_features.1} parent=1 // loop_footer
      %s34 = sadd.s32 1, %s30
    $region7: #{pyramid_features.1} parent=1 // loop_footer_branch
      %29 = sbr.rel target = $region3
    $region8: #{pyramid_features.1} parent=1 // loop_exit
      _
    %4264 = vsyncpa [#allocation3], 1
    %s4265 = scalar_lea.sflag [#allocation3], 1
    %4266 = vsyncpa %s4265, 1
    %4267 = vsyncpa [#allocation5], 1
    %s4268 = scalar_lea.sflag [#allocation5], 1
    %4269 = vsyncpa %s4268, 1

</llo_original>
